<compile_context>
chip_gen: v7x
topology: tpu7x:2x2x1
jax: 0.10.0
libtpu: 0.0.40
codegen_flags: <defaults>
</compile_context>

<pallas_src>
import functools
import math

import jax
import jax.numpy as jnp
from jax.experimental import pallas as pl
from jax.experimental.pallas import tpu as pltpu

# ---------------------------------------------------------------------------
# FLAGS analog
# ---------------------------------------------------------------------------
WIDTH_MULT_LIST = [0.25, 0.5, 1.0]
BN_EPS = 1e-5

MAX_TM = 512      # row-tile cap for the fused matmul
MAX_TN = 256      # column tile used only when N > 256 (2nd parallel axis)
MAX_TK = 2304     # contraction tile cap (keeps W / A blocks well inside VMEM)


def _round_up(x, m):
    return ((x + m - 1) // m) * m


def _choose_m(M):
    """Return (TM, M_pad): tiny M pads only to the bf16 sublane multiple;
    large M uses the biggest divisor tile up to MAX_TM."""
    if M <= MAX_TM:
        tm = _round_up(M, 16)           # bf16 sublane packing
        return tm, tm
    for t in (512, 256, 128):
        if M % t == 0:
            return t, M
    return 256, _round_up(M, 256)


def _choose_n(N):
    if N > MAX_TN and N % MAX_TN == 0:
        return MAX_TN
    return N


def _choose_k(K):
    if K <= MAX_TK:
        return K
    # K has been padded to a multiple of 128 at weight-fold time in this case,
    # so a 128-multiple divisor always exists.
    t = (MAX_TK // 128) * 128
    while t >= 128:
        if K % t == 0:
            return t
        t -= 128
    return K


# ---------------------------------------------------------------------------
# Pallas fused matmul kernel:
#   out = act( A @ W + shift [+ residual] )      (BN scale pre-folded into W)
# A / W / residual are bf16; the MXU accumulates in f32 and the epilogue
# (shift, residual add, ReLU) runs in f32 before the final cast.
# ---------------------------------------------------------------------------
def _fused_matmul_kernel(relu, use_res, use_acc, a_ref, w_ref, b_ref, *rest):
    rest = list(rest)
    acc_ref = rest.pop() if use_acc else None
    o_ref = rest.pop()
    r_ref = rest.pop() if use_res else None

    part = jnp.dot(a_ref[...], w_ref[...], preferred_element_type=jnp.float32)

    def epilogue(acc):
        out = acc + b_ref[...]
        if use_res:
            out = out + r_ref[...].astype(jnp.float32)
        if relu:
            out = jnp.maximum(out, 0.0)
        o_ref[...] = out.astype(o_ref.dtype)

    if not use_acc:
        epilogue(part)
    else:
        k = pl.program_id(2)

        @pl.when(k == 0)
        def _():
            acc_ref[...] = jnp.zeros_like(acc_ref)

        acc_ref[...] += part

        @pl.when(k == pl.num_programs(2) - 1)
        def _():
            epilogue(acc_ref[...])


def fused_matmul_pallas(a, w, shift, residual=None, relu=True,
                        out_dtype=jnp.bfloat16):
    """a: [M, K] bf16, w: [K, N] bf16, shift: [1, N] f32, residual: [M, N]."""
    M, K = a.shape
    Kw, N = w.shape
    assert K == Kw, (K, Kw)

    TM, M_pad = _choose_m(M)
    TN = _choose_n(N)
    TK = _choose_k(K)
    nm, nn, nk = M_pad // TM, N // TN, K // TK
    use_res = residual is not None
    use_acc = nk > 1

    if M_pad > M:
        a = jnp.pad(a, ((0, M_pad - M), (0, 0)))
        if use_res:
            residual = jnp.pad(residual, ((0, M_pad - M), (0, 0)))

    in_specs = [
        pl.BlockSpec((TM, TK), lambda i, j, k: (i, k)),
        pl.BlockSpec((TK, TN), lambda i, j, k: (k, j)),
        pl.BlockSpec((1, TN), lambda i, j, k: (0, j)),
    ]
    args = [a, w, shift]
    if use_res:
        in_specs.append(pl.BlockSpec((TM, TN), lambda i, j, k: (i, j)))
        args.append(residual)

    out = pl.pallas_call(
        functools.partial(_fused_matmul_kernel, relu, use_res, use_acc),
        out_shape=jax.ShapeDtypeStruct((M_pad, N), out_dtype),
        grid=(nm, nn, nk),
        in_specs=in_specs,
        out_specs=pl.BlockSpec((TM, TN), lambda i, j, k: (i, j)),
        scratch_shapes=[pltpu.VMEM((TM, TN), jnp.float32)] if use_acc else [],
        compiler_params=pltpu.CompilerParams(
            dimension_semantics=("parallel", "parallel", "arbitrary"),
            vmem_limit_bytes=32 * 1024 * 1024,
        ),
    )(*args)
    return out[:M] if M_pad > M else out


# ---------------------------------------------------------------------------
# Plain-JAX glue: im2col, maxpool, BN folding
# ---------------------------------------------------------------------------
def im2col(x, kh, kw, stride, padding, k_total):
    """NHWC -> [N*Ho*Wo, k_total] patches.  Tap-major (kh, kw, C) column order;
    zero columns are appended only when the weight's K was padded (K tiling)."""
    N, H, W, C = x.shape
    if padding:
        x = jnp.pad(x, ((0, 0), (padding, padding), (padding, padding), (0, 0)))
    Ho = (H + 2 * padding - kh) // stride + 1
    Wo = (W + 2 * padding - kw) // stride + 1
    cols = [x[:, i:i + stride * Ho:stride, j:j + stride * Wo:stride, :]
            for i in range(kh) for j in range(kw)]
    K = kh * kw * C
    if k_total > K:
        cols.append(jnp.zeros((N, Ho, Wo, k_total - K), x.dtype))
    patches = cols[0] if len(cols) == 1 else jnp.concatenate(cols, axis=-1)
    return patches.reshape(N * Ho * Wo, k_total), Ho, Wo


def maxpool_3x3_s2_p1(x):
    """PyTorch nn.MaxPool2d(kernel_size=3, stride=2, padding=1), NHWC."""
    return jax.lax.reduce_window(
        x, jnp.asarray(-jnp.inf, x.dtype), jax.lax.max,
        window_dimensions=(1, 3, 3, 1), window_strides=(1, 2, 2, 1),
        padding=((0, 0), (1, 1), (1, 1), (0, 0)))


def bn_scale_shift(bn):
    s = bn["gamma"] / jnp.sqrt(bn["var"] + BN_EPS)
    return s, bn["beta"] - bn["mean"] * s


def fold_conv(w_full, bn, cout, cin):
    """Slice to the active width, fold the BN scale into the weight columns and
    lay out as a [K, O] bf16 matmul operand.  Done once per width.  K is only
    zero-padded (to a 128 multiple) when the contraction has to be tiled."""
    w = w_full[:cout, :cin]                       # OIHW (PyTorch layout)
    O, Ci, kh, kw = w.shape
    s, b = bn_scale_shift(bn)
    wmat = jnp.transpose(w, (2, 3, 1, 0)).reshape(kh * kw * Ci, O) * s[None, :]
    K = kh * kw * Ci
    K_pad = K if K <= MAX_TK else _round_up(K, 128)
    if K_pad > K:
        wmat = jnp.pad(wmat, ((0, K_pad - K), (0, 0)))
    return dict(w=wmat.astype(jnp.bfloat16),
                shift=b.reshape(1, O).astype(jnp.float32),
                kh=kh, kw=kw, cout=int(O))


def conv_call(x, conv, stride, padding, relu=True, residual=None,
              out_dtype=jnp.bfloat16):
    """Conv2d + (folded) BN + optional residual + optional ReLU via Pallas."""
    # TODO(synk): im2col patches are still materialized in HBM (bf16); fully
    # fusing the tap gather into the kernel's DMA/grid (incl. stride-2 taps)
    # would need pl.Element / manual-DMA index maps and is left out here.
    patches, Ho, Wo = im2col(x, conv["kh"], conv["kw"], stride, padding,
                             conv["w"].shape[0])
    res_flat = None
    if residual is not None:
        res_flat = residual.reshape(-1, residual.shape[-1])
    out = fused_matmul_pallas(patches, conv["w"], conv["shift"],
                              residual=res_flat, relu=relu, out_dtype=out_dtype)
    return out.reshape(x.shape[0], Ho, Wo, conv["cout"])


# ---------------------------------------------------------------------------
# Parameter construction (deterministic, in-script)
# ---------------------------------------------------------------------------
def _make_conv(key, out_max, in_max, k):
    fan_in = in_max * k * k
    return jax.random.normal(key, (out_max, in_max, k, k), jnp.float32) / math.sqrt(fan_in)


def _make_bn_list(key, feat_list):
    bns = []
    for i, f in enumerate(feat_list):
        k1, k2, k3, k4 = jax.random.split(jax.random.fold_in(key, i), 4)
        bns.append(dict(
            gamma=1.0 + 0.1 * jax.random.normal(k1, (f,), jnp.float32),
            beta=0.1 * jax.random.normal(k2, (f,), jnp.float32),
            mean=0.1 * jax.random.normal(k3, (f,), jnp.float32),
            var=jnp.abs(jax.random.normal(k4, (f,), jnp.float32)) + 0.5,
        ))
    return bns


def build_params(key, width_mult_list, layers, num_classes):
    base = 64
    expansion = 1  # BasicBlock
    keys = iter(jax.random.split(key, 256))
    inplanes = [int(base * w) for w in width_mult_list]

    params = {"inplanes_list": list(inplanes)}
    params["conv1"] = _make_conv(next(keys), max(inplanes), 3, 7)
    params["bn1"] = _make_bn_list(next(keys), inplanes)

    def make_layer(planes, blocks, stride):
        nonlocal inplanes
        blks = []
        for bi in range(blocks):
            st = stride if bi == 0 else 1
            out_list = [int(p * expansion) for p in planes]
            need_ds = (bi == 0) and (st != 1 or inplanes[0] != out_list[0])
            blk = {
                "in_list": list(inplanes),
                "out_list": out_list,
                "stride": st,
                "conv1_w": _make_conv(next(keys), max(out_list), max(inplanes), 3),
                "bn1": _make_bn_list(next(keys), out_list),
                "conv2_w": _make_conv(next(keys), max(out_list), max(out_list), 3),
                "bn2": _make_bn_list(next(keys), out_list),
                "down_w": _make_conv(next(keys), max(out_list), max(inplanes), 1) if need_ds else None,
                "down_bn": _make_bn_list(next(keys), out_list) if need_ds else None,
            }
            blks.append(blk)
            inplanes = out_list
        return blks

    params["layer1"] = make_layer([base * w for w in width_mult_list], layers[0], 1)
    params["layer2"] = make_layer([base * 2 * w for w in width_mult_list], layers[1], 2)
    params["layer3"] = make_layer([base * 4 * w for w in width_mult_list], layers[2], 2)
    params["layer4"] = make_layer([base * 8 * w for w in width_mult_list], layers[3], 2)

    fc_in_list = [int(base * 8 * expansion * w) for w in width_mult_list]
    params["fc_in_list"] = fc_in_list
    params["fc_w"] = jax.random.normal(next(keys), (num_classes, max(fc_in_list)),
                                       jnp.float32) / math.sqrt(max(fc_in_list))
    params["fc_b"] = 0.01 * jax.random.normal(next(keys), (num_classes,), jnp.float32)
    params["num_classes"] = num_classes
    return params


def prepare_width(params, width_idx):
    """switch_to_width() analog: slice to the active width, fold BN and lay out
    every weight for the MXU once, outside the per-forward hot path."""
    P = {}
    c_out = params["inplanes_list"][width_idx]
    P["stem"] = fold_conv(params["conv1"], params["bn1"][width_idx], c_out, 3)

    for name in ("layer1", "layer2", "layer3", "layer4"):
        blocks = []
        for blk in params[name]:
            cin = blk["in_list"][width_idx]
            cout = blk["out_list"][width_idx]
            p = dict(
                stride=blk["stride"],
                conv1=fold_conv(blk["conv1_w"], blk["bn1"][width_idx], cout, cin),
                conv2=fold_conv(blk["conv2_w"], blk["bn2"][width_idx], cout, cout),
                down=None,
            )
            if blk["down_w"] is not None:
                p["down"] = fold_conv(blk["down_w"], blk["down_bn"][width_idx],
                                      cout, cin)
            blocks.append(p)
        P[name] = blocks

    in_f = params["fc_in_list"][width_idx]
    nc = params["num_classes"]
    nc_pad = _round_up(nc, 128)          # lane-dense FC output, sliced after
    wfc = params["fc_w"][:nc, :in_f].T   # [in_f, nc]
    wfc = jnp.pad(wfc, ((0, 0), (0, nc_pad - nc)))
    bfc = jnp.pad(params["fc_b"][:nc], (0, nc_pad - nc)).reshape(1, nc_pad)
    P["fc"] = dict(w=wfc.astype(jnp.bfloat16), shift=bfc.astype(jnp.float32),
                   in_f=in_f, num_classes=nc)
    return P


# ---------------------------------------------------------------------------
# Forward pass
# ---------------------------------------------------------------------------
def basic_block_forward(blk, x):
    stride = blk["stride"]
    if blk["down"] is not None:
        identity = conv_call(x, blk["down"], stride=stride, padding=0, relu=False)
    else:
        identity = x
    out = conv_call(x, blk["conv1"], stride=stride, padding=1, relu=True)
    # second conv: residual add + final ReLU fused into the Pallas epilogue
    out = conv_call(out, blk["conv2"], stride=1, padding=1, relu=True,
                    residual=identity)
    return out


def slimmable_resnet_forward(prepared, x_nchw):
    # Accepts NCHW (PyTorch convention); computes in NHWC / bf16 internally.
    x = jnp.transpose(x_nchw, (0, 2, 3, 1)).astype(jnp.bfloat16)

    x = conv_call(x, prepared["stem"], stride=2, padding=3, relu=True)
    x = maxpool_3x3_s2_p1(x)

    for name in ("layer1", "layer2", "layer3", "layer4"):
        for blk in prepared[name]:
            x = basic_block_forward(blk, x)

    # AdaptiveAvgPool2d((1,1)) + flatten (mean in f32)
    feat = jnp.mean(x.astype(jnp.float32), axis=(1, 2))
    fc = prepared["fc"]
    logits = fused_matmul_pallas(feat.astype(jnp.bfloat16), fc["w"], fc["shift"],
                                 relu=False, out_dtype=jnp.float32)
    return logits[:, :fc["num_classes"]]


# ---------------------------------------------------------------------------
if __name__ == "__main__":
    key = jax.random.PRNGKey(0)
    k_param, k_x = jax.random.split(key)

    num_classes = 10
    layers = [1, 1, 1, 1]  # small slimmable BasicBlock ResNet
    params = build_params(k_param, WIDTH_MULT_LIST, layers, num_classes)

    # switch_to_width(0.25) analog -> width index 0 (channels 16/32/64/128)
    width_idx = 0
    prepared = prepare_width(params, width_idx)

    # Single jitted program: folded weights are captured as closure constants so
    # per-layer shapes/taps stay static Python; all glue ops fuse with the
    # pallas_calls into one executable (one dispatch per forward).
    forward = jax.jit(lambda xx: slimmable_resnet_forward(prepared, xx))

    x = jax.random.normal(k_x, (2, 3, 32, 32), jnp.float32)  # NCHW like PyTorch
    logits = jax.block_until_ready(forward(x))

    assert logits.shape == (2, num_classes), logits.shape
    assert bool(jnp.all(jnp.isfinite(logits)))
    # TODO(synk): BatchNorm is implemented in eval/inference mode (folded running
    # stats); PyTorch's default train-mode batch statistics are not reproduced.
    print("KERNEL_OK")
</pallas_src>

<mosaic_0001>
module attributes {stable_mosaic.version = 11 : i64} {
  func.func @_fused_matmul_kernel(%arg0: i32, %arg1: i32, %arg2: i32, %arg3: memref<512x147xbf16, #tpu.memory_space<vmem>>, %arg4: memref<147x16xbf16, #tpu.memory_space<vmem>>, %arg5: memref<1x16xf32, #tpu.memory_space<vmem>>, %arg6: memref<512x16xbf16, #tpu.memory_space<vmem>>) attributes {dimension_semantics = [#tpu.dimension_semantics<parallel>, #tpu.dimension_semantics<parallel>, #tpu.dimension_semantics<arbitrary>], iteration_bounds = array<i64: 1, 1, 1>, scalar_prefetch = 0 : i64, scratch_operands = 0 : i64, tpu.core_type = #tpu.core_type<tc>, window_params = [{transform_indices = @transform_0, window_bounds = array<i64: 512, 147>}, {transform_indices = @transform_1, window_bounds = array<i64: 147, 16>}, {transform_indices = @transform_2, window_bounds = array<i64: 1, 16>}, {transform_indices = @transform_3, window_bounds = array<i64: 512, 16>}]} {
    %c0 = arith.constant 0 : index
    %c0_0 = arith.constant 0 : index
    %0 = vector.load %arg3[%c0, %c0_0] : memref<512x147xbf16, #tpu.memory_space<vmem>>, vector<512x147xbf16>
    %c0_1 = arith.constant 0 : index
    %c0_2 = arith.constant 0 : index
    %1 = vector.load %arg4[%c0_1, %c0_2] : memref<147x16xbf16, #tpu.memory_space<vmem>>, vector<147x16xbf16>
    %cst = arith.constant dense<0.000000e+00> : vector<512x16xf32>
    %2 = tpu.matmul %0, %1, %cst {dimension_numbers = #tpu.dot_dimension_numbers<[1], [0], [0], [1], [0, 0, 1, 1], [], []>} : vector<512x147xbf16>, vector<147x16xbf16>, vector<512x16xf32> -> vector<512x16xf32>
    %c0_3 = arith.constant 0 : index
    %c0_4 = arith.constant 0 : index
    %3 = vector.load %arg5[%c0_3, %c0_4] : memref<1x16xf32, #tpu.memory_space<vmem>>, vector<1x16xf32>
    %4 = vector.broadcast %3 : vector<1x16xf32> to vector<512x16xf32>
    %5 = arith.addf %2, %4 : vector<512x16xf32>
    %cst_5 = arith.constant 0.000000e+00 : f32
    %6 = vector.broadcast %cst_5 : f32 to vector<512x16xf32>
    %7 = arith.maximumf %5, %6 : vector<512x16xf32>
    %8 = arith.truncf %7 : vector<512x16xf32> to vector<512x16xbf16>
    %c0_6 = arith.constant 0 : index
    %c0_7 = arith.constant 0 : index
    %9 = vector.load %arg6[%c0_6, %c0_7] : memref<512x16xbf16, #tpu.memory_space<vmem>>, vector<512x16xbf16>
    tpu.vector_store %arg6[%c0_6, %c0_7], %8 {strides = array<i32>} : memref<512x16xbf16, #tpu.memory_space<vmem>>, vector<512x16xbf16>,
    return
  }
  func.func @transform_0(%arg0: i32, %arg1: i32, %arg2: i32) -> (i32, i32) {
    %c0_i32 = arith.constant 0 : i32
    return %arg0, %arg2 : i32, i32
  }
  func.func @transform_1(%arg0: i32, %arg1: i32, %arg2: i32) -> (i32, i32) {
    %c0_i32 = arith.constant 0 : i32
    return %arg2, %arg1 : i32, i32
  }
  func.func @transform_2(%arg0: i32, %arg1: i32, %arg2: i32) -> (i32, i32) {
    %c0_i32 = arith.constant 0 : i32
    %c0_i32_0 = arith.constant 0 : i32
    return %c0_i32, %arg1 : i32, i32
  }
  func.func @transform_3(%arg0: i32, %arg1: i32, %arg2: i32) -> (i32, i32) {
    %c0_i32 = arith.constant 0 : i32
    return %arg0, %arg1 : i32, i32
  }
}

module attributes {stable_mosaic.version = 11 : i64} {
  func.func @_fused_matmul_kernel(%arg0: i32, %arg1: i32, %arg2: i32, %arg3: memref<128x144xbf16, #tpu.memory_space<vmem>>, %arg4: memref<144x16xbf16, #tpu.memory_space<vmem>>, %arg5: memref<1x16xf32, #tpu.memory_space<vmem>>, %arg6: memref<128x16xbf16, #tpu.memory_space<vmem>>) attributes {dimension_semantics = [#tpu.dimension_semantics<parallel>, #tpu.dimension_semantics<parallel>, #tpu.dimension_semantics<arbitrary>], iteration_bounds = array<i64: 1, 1, 1>, scalar_prefetch = 0 : i64, scratch_operands = 0 : i64, tpu.core_type = #tpu.core_type<tc>, window_params = [{transform_indices = @transform_0, window_bounds = array<i64: 128, 144>}, {transform_indices = @transform_1, window_bounds = array<i64: 144, 16>}, {transform_indices = @transform_2, window_bounds = array<i64: 1, 16>}, {transform_indices = @transform_3, window_bounds = array<i64: 128, 16>}]} {
    %c0 = arith.constant 0 : index
    %c0_0 = arith.constant 0 : index
    %0 = vector.load %arg3[%c0, %c0_0] : memref<128x144xbf16, #tpu.memory_space<vmem>>, vector<128x144xbf16>
    %c0_1 = arith.constant 0 : index
    %c0_2 = arith.constant 0 : index
    %1 = vector.load %arg4[%c0_1, %c0_2] : memref<144x16xbf16, #tpu.memory_space<vmem>>, vector<144x16xbf16>
    %cst = arith.constant dense<0.000000e+00> : vector<128x16xf32>
    %2 = tpu.matmul %0, %1, %cst {dimension_numbers = #tpu.dot_dimension_numbers<[1], [0], [0], [1], [0, 0, 1, 1], [], []>} : vector<128x144xbf16>, vector<144x16xbf16>, vector<128x16xf32> -> vector<128x16xf32>
    %c0_3 = arith.constant 0 : index
    %c0_4 = arith.constant 0 : index
    %3 = vector.load %arg5[%c0_3, %c0_4] : memref<1x16xf32, #tpu.memory_space<vmem>>, vector<1x16xf32>
    %4 = vector.broadcast %3 : vector<1x16xf32> to vector<128x16xf32>
    %5 = arith.addf %2, %4 : vector<128x16xf32>
    %cst_5 = arith.constant 0.000000e+00 : f32
    %6 = vector.broadcast %cst_5 : f32 to vector<128x16xf32>
    %7 = arith.maximumf %5, %6 : vector<128x16xf32>
    %8 = arith.truncf %7 : vector<128x16xf32> to vector<128x16xbf16>
    %c0_6 = arith.constant 0 : index
    %c0_7 = arith.constant 0 : index
    %9 = vector.load %arg6[%c0_6, %c0_7] : memref<128x16xbf16, #tpu.memory_space<vmem>>, vector<128x16xbf16>
    tpu.vector_store %arg6[%c0_6, %c0_7], %8 {strides = array<i32>} : memref<128x16xbf16, #tpu.memory_space<vmem>>, vector<128x16xbf16>,
    return
  }
  func.func @transform_0(%arg0: i32, %arg1: i32, %arg2: i32) -> (i32, i32) {
    %c0_i32 = arith.constant 0 : i32
    return %arg0, %arg2 : i32, i32
  }
  func.func @transform_1(%arg0: i32, %arg1: i32, %arg2: i32) -> (i32, i32) {
    %c0_i32 = arith.constant 0 : i32
    return %arg2, %arg1 : i32, i32
  }
  func.func @transform_2(%arg0: i32, %arg1: i32, %arg2: i32) -> (i32, i32) {
    %c0_i32 = arith.constant 0 : i32
    %c0_i32_0 = arith.constant 0 : i32
    return %c0_i32, %arg1 : i32, i32
  }
  func.func @transform_3(%arg0: i32, %arg1: i32, %arg2: i32) -> (i32, i32) {
    %c0_i32 = arith.constant 0 : i32
    return %arg0, %arg1 : i32, i32
  }
}

module attributes {stable_mosaic.version = 11 : i64} {
  func.func @_fused_matmul_kernel(%arg0: i32, %arg1: i32, %arg2: i32, %arg3: memref<128x144xbf16, #tpu.memory_space<vmem>>, %arg4: memref<144x16xbf16, #tpu.memory_space<vmem>>, %arg5: memref<1x16xf32, #tpu.memory_space<vmem>>, %arg6: memref<128x16xbf16, #tpu.memory_space<vmem>>, %arg7: memref<128x16xbf16, #tpu.memory_space<vmem>>) attributes {dimension_semantics = [#tpu.dimension_semantics<parallel>, #tpu.dimension_semantics<parallel>, #tpu.dimension_semantics<arbitrary>], iteration_bounds = array<i64: 1, 1, 1>, scalar_prefetch = 0 : i64, scratch_operands = 0 : i64, tpu.core_type = #tpu.core_type<tc>, window_params = [{transform_indices = @transform_0, window_bounds = array<i64: 128, 144>}, {transform_indices = @transform_1, window_bounds = array<i64: 144, 16>}, {transform_indices = @transform_2, window_bounds = array<i64: 1, 16>}, {transform_indices = @transform_3, window_bounds = array<i64: 128, 16>}, {transform_indices = @transform_4, window_bounds = array<i64: 128, 16>}]} {
    %c0 = arith.constant 0 : index
    %c0_0 = arith.constant 0 : index
    %0 = vector.load %arg3[%c0, %c0_0] : memref<128x144xbf16, #tpu.memory_space<vmem>>, vector<128x144xbf16>
    %c0_1 = arith.constant 0 : index
    %c0_2 = arith.constant 0 : index
    %1 = vector.load %arg4[%c0_1, %c0_2] : memref<144x16xbf16, #tpu.memory_space<vmem>>, vector<144x16xbf16>
    %cst = arith.constant dense<0.000000e+00> : vector<128x16xf32>
    %2 = tpu.matmul %0, %1, %cst {dimension_numbers = #tpu.dot_dimension_numbers<[1], [0], [0], [1], [0, 0, 1, 1], [], []>} : vector<128x144xbf16>, vector<144x16xbf16>, vector<128x16xf32> -> vector<128x16xf32>
    %c0_3 = arith.constant 0 : index
    %c0_4 = arith.constant 0 : index
    %3 = vector.load %arg5[%c0_3, %c0_4] : memref<1x16xf32, #tpu.memory_space<vmem>>, vector<1x16xf32>
    %4 = vector.broadcast %3 : vector<1x16xf32> to vector<128x16xf32>
    %5 = arith.addf %2, %4 : vector<128x16xf32>
    %c0_5 = arith.constant 0 : index
    %c0_6 = arith.constant 0 : index
    %6 = vector.load %arg6[%c0_5, %c0_6] : memref<128x16xbf16, #tpu.memory_space<vmem>>, vector<128x16xbf16>
    %7 = arith.extf %6 : vector<128x16xbf16> to vector<128x16xf32>
    %8 = arith.addf %5, %7 : vector<128x16xf32>
    %cst_7 = arith.constant 0.000000e+00 : f32
    %9 = vector.broadcast %cst_7 : f32 to vector<128x16xf32>
    %10 = arith.maximumf %8, %9 : vector<128x16xf32>
    %11 = arith.truncf %10 : vector<128x16xf32> to vector<128x16xbf16>
    %c0_8 = arith.constant 0 : index
    %c0_9 = arith.constant 0 : index
    %12 = vector.load %arg7[%c0_8, %c0_9] : memref<128x16xbf16, #tpu.memory_space<vmem>>, vector<128x16xbf16>
    tpu.vector_store %arg7[%c0_8, %c0_9], %11 {strides = array<i32>} : memref<128x16xbf16, #tpu.memory_space<vmem>>, vector<128x16xbf16>,
    return
  }
  func.func @transform_0(%arg0: i32, %arg1: i32, %arg2: i32) -> (i32, i32) {
    %c0_i32 = arith.constant 0 : i32
    return %arg0, %arg2 : i32, i32
  }
  func.func @transform_1(%arg0: i32, %arg1: i32, %arg2: i32) -> (i32, i32) {
    %c0_i32 = arith.constant 0 : i32
    return %arg2, %arg1 : i32, i32
  }
  func.func @transform_2(%arg0: i32, %arg1: i32, %arg2: i32) -> (i32, i32) {
    %c0_i32 = arith.constant 0 : i32
    %c0_i32_0 = arith.constant 0 : i32
    return %c0_i32, %arg1 : i32, i32
  }
  func.func @transform_3(%arg0: i32, %arg1: i32, %arg2: i32) -> (i32, i32) {
    %c0_i32 = arith.constant 0 : i32
    return %arg0, %arg1 : i32, i32
  }
  func.func @transform_4(%arg0: i32, %arg1: i32, %arg2: i32) -> (i32, i32) {
    %c0_i32 = arith.constant 0 : i32
    return %arg0, %arg1 : i32, i32
  }
}

module attributes {stable_mosaic.version = 11 : i64} {
  func.func @_fused_matmul_kernel(%arg0: i32, %arg1: i32, %arg2: i32, %arg3: memref<32x144xbf16, #tpu.memory_space<vmem>>, %arg4: memref<144x32xbf16, #tpu.memory_space<vmem>>, %arg5: memref<1x32xf32, #tpu.memory_space<vmem>>, %arg6: memref<32x32xbf16, #tpu.memory_space<vmem>>) attributes {dimension_semantics = [#tpu.dimension_semantics<parallel>, #tpu.dimension_semantics<parallel>, #tpu.dimension_semantics<arbitrary>], iteration_bounds = array<i64: 1, 1, 1>, scalar_prefetch = 0 : i64, scratch_operands = 0 : i64, tpu.core_type = #tpu.core_type<tc>, window_params = [{transform_indices = @transform_0, window_bounds = array<i64: 32, 144>}, {transform_indices = @transform_1, window_bounds = array<i64: 144, 32>}, {transform_indices = @transform_2, window_bounds = array<i64: 1, 32>}, {transform_indices = @transform_3, window_bounds = array<i64: 32, 32>}]} {
    %c0 = arith.constant 0 : index
    %c0_0 = arith.constant 0 : index
    %0 = vector.load %arg3[%c0, %c0_0] : memref<32x144xbf16, #tpu.memory_space<vmem>>, vector<32x144xbf16>
    %c0_1 = arith.constant 0 : index
    %c0_2 = arith.constant 0 : index
    %1 = vector.load %arg4[%c0_1, %c0_2] : memref<144x32xbf16, #tpu.memory_space<vmem>>, vector<144x32xbf16>
    %cst = arith.constant dense<0.000000e+00> : vector<32x32xf32>
    %2 = tpu.matmul %0, %1, %cst {dimension_numbers = #tpu.dot_dimension_numbers<[1], [0], [0], [1], [0, 0, 1, 1], [], []>} : vector<32x144xbf16>, vector<144x32xbf16>, vector<32x32xf32> -> vector<32x32xf32>
    %c0_3 = arith.constant 0 : index
    %c0_4 = arith.constant 0 : index
    %3 = vector.load %arg5[%c0_3, %c0_4] : memref<1x32xf32, #tpu.memory_space<vmem>>, vector<1x32xf32>
    %4 = vector.broadcast %3 : vector<1x32xf32> to vector<32x32xf32>
    %5 = arith.addf %2, %4 : vector<32x32xf32>
    %cst_5 = arith.constant 0.000000e+00 : f32
    %6 = vector.broadcast %cst_5 : f32 to vector<32x32xf32>
    %7 = arith.maximumf %5, %6 : vector<32x32xf32>
    %8 = arith.truncf %7 : vector<32x32xf32> to vector<32x32xbf16>
    %c0_6 = arith.constant 0 : index
    %c0_7 = arith.constant 0 : index
    %9 = vector.load %arg6[%c0_6, %c0_7] : memref<32x32xbf16, #tpu.memory_space<vmem>>, vector<32x32xbf16>
    tpu.vector_store %arg6[%c0_6, %c0_7], %8 {strides = array<i32>} : memref<32x32xbf16, #tpu.memory_space<vmem>>, vector<32x32xbf16>,
    return
  }
  func.func @transform_0(%arg0: i32, %arg1: i32, %arg2: i32) -> (i32, i32) {
    %c0_i32 = arith.constant 0 : i32
    return %arg0, %arg2 : i32, i32
  }
  func.func @transform_1(%arg0: i32, %arg1: i32, %arg2: i32) -> (i32, i32) {
    %c0_i32 = arith.constant 0 : i32
    return %arg2, %arg1 : i32, i32
  }
  func.func @transform_2(%arg0: i32, %arg1: i32, %arg2: i32) -> (i32, i32) {
    %c0_i32 = arith.constant 0 : i32
    %c0_i32_0 = arith.constant 0 : i32
    return %c0_i32, %arg1 : i32, i32
  }
  func.func @transform_3(%arg0: i32, %arg1: i32, %arg2: i32) -> (i32, i32) {
    %c0_i32 = arith.constant 0 : i32
    return %arg0, %arg1 : i32, i32
  }
}

module attributes {stable_mosaic.version = 11 : i64} {
  func.func @_fused_matmul_kernel(%arg0: i32, %arg1: i32, %arg2: i32, %arg3: memref<32x16xbf16, #tpu.memory_space<vmem>>, %arg4: memref<16x32xbf16, #tpu.memory_space<vmem>>, %arg5: memref<1x32xf32, #tpu.memory_space<vmem>>, %arg6: memref<32x32xbf16, #tpu.memory_space<vmem>>) attributes {dimension_semantics = [#tpu.dimension_semantics<parallel>, #tpu.dimension_semantics<parallel>, #tpu.dimension_semantics<arbitrary>], iteration_bounds = array<i64: 1, 1, 1>, scalar_prefetch = 0 : i64, scratch_operands = 0 : i64, tpu.core_type = #tpu.core_type<tc>, window_params = [{transform_indices = @transform_0, window_bounds = array<i64: 32, 16>}, {transform_indices = @transform_1, window_bounds = array<i64: 16, 32>}, {transform_indices = @transform_2, window_bounds = array<i64: 1, 32>}, {transform_indices = @transform_3, window_bounds = array<i64: 32, 32>}]} {
    %c0 = arith.constant 0 : index
    %c0_0 = arith.constant 0 : index
    %0 = vector.load %arg3[%c0, %c0_0] : memref<32x16xbf16, #tpu.memory_space<vmem>>, vector<32x16xbf16>
    %c0_1 = arith.constant 0 : index
    %c0_2 = arith.constant 0 : index
    %1 = vector.load %arg4[%c0_1, %c0_2] : memref<16x32xbf16, #tpu.memory_space<vmem>>, vector<16x32xbf16>
    %cst = arith.constant dense<0.000000e+00> : vector<32x32xf32>
    %2 = tpu.matmul %0, %1, %cst {dimension_numbers = #tpu.dot_dimension_numbers<[1], [0], [0], [1], [0, 0, 1, 1], [], []>} : vector<32x16xbf16>, vector<16x32xbf16>, vector<32x32xf32> -> vector<32x32xf32>
    %c0_3 = arith.constant 0 : index
    %c0_4 = arith.constant 0 : index
    %3 = vector.load %arg5[%c0_3, %c0_4] : memref<1x32xf32, #tpu.memory_space<vmem>>, vector<1x32xf32>
    %4 = vector.broadcast %3 : vector<1x32xf32> to vector<32x32xf32>
    %5 = arith.addf %2, %4 : vector<32x32xf32>
    %6 = arith.truncf %5 : vector<32x32xf32> to vector<32x32xbf16>
    %c0_5 = arith.constant 0 : index
    %c0_6 = arith.constant 0 : index
    %7 = vector.load %arg6[%c0_5, %c0_6] : memref<32x32xbf16, #tpu.memory_space<vmem>>, vector<32x32xbf16>
    tpu.vector_store %arg6[%c0_5, %c0_6], %6 {strides = array<i32>} : memref<32x32xbf16, #tpu.memory_space<vmem>>, vector<32x32xbf16>,
    return
  }
  func.func @transform_0(%arg0: i32, %arg1: i32, %arg2: i32) -> (i32, i32) {
    %c0_i32 = arith.constant 0 : i32
    return %arg0, %arg2 : i32, i32
  }
  func.func @transform_1(%arg0: i32, %arg1: i32, %arg2: i32) -> (i32, i32) {
    %c0_i32 = arith.constant 0 : i32
    return %arg2, %arg1 : i32, i32
  }
  func.func @transform_2(%arg0: i32, %arg1: i32, %arg2: i32) -> (i32, i32) {
    %c0_i32 = arith.constant 0 : i32
    %c0_i32_0 = arith.constant 0 : i32
    return %c0_i32, %arg1 : i32, i32
  }
  func.func @transform_3(%arg0: i32, %arg1: i32, %arg2: i32) -> (i32, i32) {
    %c0_i32 = arith.constant 0 : i32
    return %arg0, %arg1 : i32, i32
  }
}

module attributes {stable_mosaic.version = 11 : i64} {
  func.func @_fused_matmul_kernel(%arg0: i32, %arg1: i32, %arg2: i32, %arg3: memref<32x288xbf16, #tpu.memory_space<vmem>>, %arg4: memref<288x32xbf16, #tpu.memory_space<vmem>>, %arg5: memref<1x32xf32, #tpu.memory_space<vmem>>, %arg6: memref<32x32xbf16, #tpu.memory_space<vmem>>, %arg7: memref<32x32xbf16, #tpu.memory_space<vmem>>) attributes {dimension_semantics = [#tpu.dimension_semantics<parallel>, #tpu.dimension_semantics<parallel>, #tpu.dimension_semantics<arbitrary>], iteration_bounds = array<i64: 1, 1, 1>, scalar_prefetch = 0 : i64, scratch_operands = 0 : i64, tpu.core_type = #tpu.core_type<tc>, window_params = [{transform_indices = @transform_0, window_bounds = array<i64: 32, 288>}, {transform_indices = @transform_1, window_bounds = array<i64: 288, 32>}, {transform_indices = @transform_2, window_bounds = array<i64: 1, 32>}, {transform_indices = @transform_3, window_bounds = array<i64: 32, 32>}, {transform_indices = @transform_4, window_bounds = array<i64: 32, 32>}]} {
    %c0 = arith.constant 0 : index
    %c0_0 = arith.constant 0 : index
    %0 = vector.load %arg3[%c0, %c0_0] : memref<32x288xbf16, #tpu.memory_space<vmem>>, vector<32x288xbf16>
    %c0_1 = arith.constant 0 : index
    %c0_2 = arith.constant 0 : index
    %1 = vector.load %arg4[%c0_1, %c0_2] : memref<288x32xbf16, #tpu.memory_space<vmem>>, vector<288x32xbf16>
    %cst = arith.constant dense<0.000000e+00> : vector<32x32xf32>
    %2 = tpu.matmul %0, %1, %cst {dimension_numbers = #tpu.dot_dimension_numbers<[1], [0], [0], [1], [0, 0, 1, 1], [], []>} : vector<32x288xbf16>, vector<288x32xbf16>, vector<32x32xf32> -> vector<32x32xf32>
    %c0_3 = arith.constant 0 : index
    %c0_4 = arith.constant 0 : index
    %3 = vector.load %arg5[%c0_3, %c0_4] : memref<1x32xf32, #tpu.memory_space<vmem>>, vector<1x32xf32>
    %4 = vector.broadcast %3 : vector<1x32xf32> to vector<32x32xf32>
    %5 = arith.addf %2, %4 : vector<32x32xf32>
    %c0_5 = arith.constant 0 : index
    %c0_6 = arith.constant 0 : index
    %6 = vector.load %arg6[%c0_5, %c0_6] : memref<32x32xbf16, #tpu.memory_space<vmem>>, vector<32x32xbf16>
    %7 = arith.extf %6 : vector<32x32xbf16> to vector<32x32xf32>
    %8 = arith.addf %5, %7 : vector<32x32xf32>
    %cst_7 = arith.constant 0.000000e+00 : f32
    %9 = vector.broadcast %cst_7 : f32 to vector<32x32xf32>
    %10 = arith.maximumf %8, %9 : vector<32x32xf32>
    %11 = arith.truncf %10 : vector<32x32xf32> to vector<32x32xbf16>
    %c0_8 = arith.constant 0 : index
    %c0_9 = arith.constant 0 : index
    %12 = vector.load %arg7[%c0_8, %c0_9] : memref<32x32xbf16, #tpu.memory_space<vmem>>, vector<32x32xbf16>
    tpu.vector_store %arg7[%c0_8, %c0_9], %11 {strides = array<i32>} : memref<32x32xbf16, #tpu.memory_space<vmem>>, vector<32x32xbf16>,
    return
  }
  func.func @transform_0(%arg0: i32, %arg1: i32, %arg2: i32) -> (i32, i32) {
    %c0_i32 = arith.constant 0 : i32
    return %arg0, %arg2 : i32, i32
  }
  func.func @transform_1(%arg0: i32, %arg1: i32, %arg2: i32) -> (i32, i32) {
    %c0_i32 = arith.constant 0 : i32
    return %arg2, %arg1 : i32, i32
  }
  func.func @transform_2(%arg0: i32, %arg1: i32, %arg2: i32) -> (i32, i32) {
    %c0_i32 = arith.constant 0 : i32
    %c0_i32_0 = arith.constant 0 : i32
    return %c0_i32, %arg1 : i32, i32
  }
  func.func @transform_3(%arg0: i32, %arg1: i32, %arg2: i32) -> (i32, i32) {
    %c0_i32 = arith.constant 0 : i32
    return %arg0, %arg1 : i32, i32
  }
  func.func @transform_4(%arg0: i32, %arg1: i32, %arg2: i32) -> (i32, i32) {
    %c0_i32 = arith.constant 0 : i32
    return %arg0, %arg1 : i32, i32
  }
}

module attributes {stable_mosaic.version = 11 : i64} {
  func.func @_fused_matmul_kernel(%arg0: i32, %arg1: i32, %arg2: i32, %arg3: memref<16x288xbf16, #tpu.memory_space<vmem>>, %arg4: memref<288x64xbf16, #tpu.memory_space<vmem>>, %arg5: memref<1x64xf32, #tpu.memory_space<vmem>>, %arg6: memref<16x64xbf16, #tpu.memory_space<vmem>>) attributes {dimension_semantics = [#tpu.dimension_semantics<parallel>, #tpu.dimension_semantics<parallel>, #tpu.dimension_semantics<arbitrary>], iteration_bounds = array<i64: 1, 1, 1>, scalar_prefetch = 0 : i64, scratch_operands = 0 : i64, tpu.core_type = #tpu.core_type<tc>, window_params = [{transform_indices = @transform_0, window_bounds = array<i64: 16, 288>}, {transform_indices = @transform_1, window_bounds = array<i64: 288, 64>}, {transform_indices = @transform_2, window_bounds = array<i64: 1, 64>}, {transform_indices = @transform_3, window_bounds = array<i64: 16, 64>}]} {
    %c0 = arith.constant 0 : index
    %c0_0 = arith.constant 0 : index
    %0 = vector.load %arg3[%c0, %c0_0] : memref<16x288xbf16, #tpu.memory_space<vmem>>, vector<16x288xbf16>
    %c0_1 = arith.constant 0 : index
    %c0_2 = arith.constant 0 : index
    %1 = vector.load %arg4[%c0_1, %c0_2] : memref<288x64xbf16, #tpu.memory_space<vmem>>, vector<288x64xbf16>
    %cst = arith.constant dense<0.000000e+00> : vector<16x64xf32>
    %2 = tpu.matmul %0, %1, %cst {dimension_numbers = #tpu.dot_dimension_numbers<[1], [0], [0], [1], [0, 0, 1, 1], [], []>} : vector<16x288xbf16>, vector<288x64xbf16>, vector<16x64xf32> -> vector<16x64xf32>
    %c0_3 = arith.constant 0 : index
    %c0_4 = arith.constant 0 : index
    %3 = vector.load %arg5[%c0_3, %c0_4] : memref<1x64xf32, #tpu.memory_space<vmem>>, vector<1x64xf32>
    %4 = vector.broadcast %3 : vector<1x64xf32> to vector<16x64xf32>
    %5 = arith.addf %2, %4 : vector<16x64xf32>
    %cst_5 = arith.constant 0.000000e+00 : f32
    %6 = vector.broadcast %cst_5 : f32 to vector<16x64xf32>
    %7 = arith.maximumf %5, %6 : vector<16x64xf32>
    %8 = arith.truncf %7 : vector<16x64xf32> to vector<16x64xbf16>
    %c0_6 = arith.constant 0 : index
    %c0_7 = arith.constant 0 : index
    %9 = vector.load %arg6[%c0_6, %c0_7] : memref<16x64xbf16, #tpu.memory_space<vmem>>, vector<16x64xbf16>
    tpu.vector_store %arg6[%c0_6, %c0_7], %8 {strides = array<i32>} : memref<16x64xbf16, #tpu.memory_space<vmem>>, vector<16x64xbf16>,
    return
  }
  func.func @transform_0(%arg0: i32, %arg1: i32, %arg2: i32) -> (i32, i32) {
    %c0_i32 = arith.constant 0 : i32
    return %arg0, %arg2 : i32, i32
  }
  func.func @transform_1(%arg0: i32, %arg1: i32, %arg2: i32) -> (i32, i32) {
    %c0_i32 = arith.constant 0 : i32
    return %arg2, %arg1 : i32, i32
  }
  func.func @transform_2(%arg0: i32, %arg1: i32, %arg2: i32) -> (i32, i32) {
    %c0_i32 = arith.constant 0 : i32
    %c0_i32_0 = arith.constant 0 : i32
    return %c0_i32, %arg1 : i32, i32
  }
  func.func @transform_3(%arg0: i32, %arg1: i32, %arg2: i32) -> (i32, i32) {
    %c0_i32 = arith.constant 0 : i32
    return %arg0, %arg1 : i32, i32
  }
}

module attributes {stable_mosaic.version = 11 : i64} {
  func.func @_fused_matmul_kernel(%arg0: i32, %arg1: i32, %arg2: i32, %arg3: memref<16x576xbf16, #tpu.memory_space<vmem>>, %arg4: memref<576x64xbf16, #tpu.memory_space<vmem>>, %arg5: memref<1x64xf32, #tpu.memory_space<vmem>>, %arg6: memref<16x64xbf16, #tpu.memory_space<vmem>>, %arg7: memref<16x64xbf16, #tpu.memory_space<vmem>>) attributes {dimension_semantics = [#tpu.dimension_semantics<parallel>, #tpu.dimension_semantics<parallel>, #tpu.dimension_semantics<arbitrary>], iteration_bounds = array<i64: 1, 1, 1>, scalar_prefetch = 0 : i64, scratch_operands = 0 : i64, tpu.core_type = #tpu.core_type<tc>, window_params = [{transform_indices = @transform_0, window_bounds = array<i64: 16, 576>}, {transform_indices = @transform_1, window_bounds = array<i64: 576, 64>}, {transform_indices = @transform_2, window_bounds = array<i64: 1, 64>}, {transform_indices = @transform_3, window_bounds = array<i64: 16, 64>}, {transform_indices = @transform_4, window_bounds = array<i64: 16, 64>}]} {
    %c0 = arith.constant 0 : index
    %c0_0 = arith.constant 0 : index
    %0 = vector.load %arg3[%c0, %c0_0] : memref<16x576xbf16, #tpu.memory_space<vmem>>, vector<16x576xbf16>
    %c0_1 = arith.constant 0 : index
    %c0_2 = arith.constant 0 : index
    %1 = vector.load %arg4[%c0_1, %c0_2] : memref<576x64xbf16, #tpu.memory_space<vmem>>, vector<576x64xbf16>
    %cst = arith.constant dense<0.000000e+00> : vector<16x64xf32>
    %2 = tpu.matmul %0, %1, %cst {dimension_numbers = #tpu.dot_dimension_numbers<[1], [0], [0], [1], [0, 0, 1, 1], [], []>} : vector<16x576xbf16>, vector<576x64xbf16>, vector<16x64xf32> -> vector<16x64xf32>
    %c0_3 = arith.constant 0 : index
    %c0_4 = arith.constant 0 : index
    %3 = vector.load %arg5[%c0_3, %c0_4] : memref<1x64xf32, #tpu.memory_space<vmem>>, vector<1x64xf32>
    %4 = vector.broadcast %3 : vector<1x64xf32> to vector<16x64xf32>
    %5 = arith.addf %2, %4 : vector<16x64xf32>
    %c0_5 = arith.constant 0 : index
    %c0_6 = arith.constant 0 : index
    %6 = vector.load %arg6[%c0_5, %c0_6] : memref<16x64xbf16, #tpu.memory_space<vmem>>, vector<16x64xbf16>
    %7 = arith.extf %6 : vector<16x64xbf16> to vector<16x64xf32>
    %8 = arith.addf %5, %7 : vector<16x64xf32>
    %cst_7 = arith.constant 0.000000e+00 : f32
    %9 = vector.broadcast %cst_7 : f32 to vector<16x64xf32>
    %10 = arith.maximumf %8, %9 : vector<16x64xf32>
    %11 = arith.truncf %10 : vector<16x64xf32> to vector<16x64xbf16>
    %c0_8 = arith.constant 0 : index
    %c0_9 = arith.constant 0 : index
    %12 = vector.load %arg7[%c0_8, %c0_9] : memref<16x64xbf16, #tpu.memory_space<vmem>>, vector<16x64xbf16>
    tpu.vector_store %arg7[%c0_8, %c0_9], %11 {strides = array<i32>} : memref<16x64xbf16, #tpu.memory_space<vmem>>, vector<16x64xbf16>,
    return
  }
  func.func @transform_0(%arg0: i32, %arg1: i32, %arg2: i32) -> (i32, i32) {
    %c0_i32 = arith.constant 0 : i32
    return %arg0, %arg2 : i32, i32
  }
  func.func @transform_1(%arg0: i32, %arg1: i32, %arg2: i32) -> (i32, i32) {
    %c0_i32 = arith.constant 0 : i32
    return %arg2, %arg1 : i32, i32
  }
  func.func @transform_2(%arg0: i32, %arg1: i32, %arg2: i32) -> (i32, i32) {
    %c0_i32 = arith.constant 0 : i32
    %c0_i32_0 = arith.constant 0 : i32
    return %c0_i32, %arg1 : i32, i32
  }
  func.func @transform_3(%arg0: i32, %arg1: i32, %arg2: i32) -> (i32, i32) {
    %c0_i32 = arith.constant 0 : i32
    return %arg0, %arg1 : i32, i32
  }
  func.func @transform_4(%arg0: i32, %arg1: i32, %arg2: i32) -> (i32, i32) {
    %c0_i32 = arith.constant 0 : i32
    return %arg0, %arg1 : i32, i32
  }
}

module attributes {stable_mosaic.version = 11 : i64} {
  func.func @_fused_matmul_kernel(%arg0: i32, %arg1: i32, %arg2: i32, %arg3: memref<16x32xbf16, #tpu.memory_space<vmem>>, %arg4: memref<32x64xbf16, #tpu.memory_space<vmem>>, %arg5: memref<1x64xf32, #tpu.memory_space<vmem>>, %arg6: memref<16x64xbf16, #tpu.memory_space<vmem>>) attributes {dimension_semantics = [#tpu.dimension_semantics<parallel>, #tpu.dimension_semantics<parallel>, #tpu.dimension_semantics<arbitrary>], iteration_bounds = array<i64: 1, 1, 1>, scalar_prefetch = 0 : i64, scratch_operands = 0 : i64, tpu.core_type = #tpu.core_type<tc>, window_params = [{transform_indices = @transform_0, window_bounds = array<i64: 16, 32>}, {transform_indices = @transform_1, window_bounds = array<i64: 32, 64>}, {transform_indices = @transform_2, window_bounds = array<i64: 1, 64>}, {transform_indices = @transform_3, window_bounds = array<i64: 16, 64>}]} {
    %c0 = arith.constant 0 : index
    %c0_0 = arith.constant 0 : index
    %0 = vector.load %arg3[%c0, %c0_0] : memref<16x32xbf16, #tpu.memory_space<vmem>>, vector<16x32xbf16>
    %c0_1 = arith.constant 0 : index
    %c0_2 = arith.constant 0 : index
    %1 = vector.load %arg4[%c0_1, %c0_2] : memref<32x64xbf16, #tpu.memory_space<vmem>>, vector<32x64xbf16>
    %cst = arith.constant dense<0.000000e+00> : vector<16x64xf32>
    %2 = tpu.matmul %0, %1, %cst {dimension_numbers = #tpu.dot_dimension_numbers<[1], [0], [0], [1], [0, 0, 1, 1], [], []>} : vector<16x32xbf16>, vector<32x64xbf16>, vector<16x64xf32> -> vector<16x64xf32>
    %c0_3 = arith.constant 0 : index
    %c0_4 = arith.constant 0 : index
    %3 = vector.load %arg5[%c0_3, %c0_4] : memref<1x64xf32, #tpu.memory_space<vmem>>, vector<1x64xf32>
    %4 = vector.broadcast %3 : vector<1x64xf32> to vector<16x64xf32>
    %5 = arith.addf %2, %4 : vector<16x64xf32>
    %6 = arith.truncf %5 : vector<16x64xf32> to vector<16x64xbf16>
    %c0_5 = arith.constant 0 : index
    %c0_6 = arith.constant 0 : index
    %7 = vector.load %arg6[%c0_5, %c0_6] : memref<16x64xbf16, #tpu.memory_space<vmem>>, vector<16x64xbf16>
    tpu.vector_store %arg6[%c0_5, %c0_6], %6 {strides = array<i32>} : memref<16x64xbf16, #tpu.memory_space<vmem>>, vector<16x64xbf16>,
    return
  }
  func.func @transform_0(%arg0: i32, %arg1: i32, %arg2: i32) -> (i32, i32) {
    %c0_i32 = arith.constant 0 : i32
    return %arg0, %arg2 : i32, i32
  }
  func.func @transform_1(%arg0: i32, %arg1: i32, %arg2: i32) -> (i32, i32) {
    %c0_i32 = arith.constant 0 : i32
    return %arg2, %arg1 : i32, i32
  }
  func.func @transform_2(%arg0: i32, %arg1: i32, %arg2: i32) -> (i32, i32) {
    %c0_i32 = arith.constant 0 : i32
    %c0_i32_0 = arith.constant 0 : i32
    return %c0_i32, %arg1 : i32, i32
  }
  func.func @transform_3(%arg0: i32, %arg1: i32, %arg2: i32) -> (i32, i32) {
    %c0_i32 = arith.constant 0 : i32
    return %arg0, %arg1 : i32, i32
  }
}

module attributes {stable_mosaic.version = 11 : i64} {
  func.func @_fused_matmul_kernel(%arg0: i32, %arg1: i32, %arg2: i32, %arg3: memref<16x576xbf16, #tpu.memory_space<vmem>>, %arg4: memref<576x128xbf16, #tpu.memory_space<vmem>>, %arg5: memref<1x128xf32, #tpu.memory_space<vmem>>, %arg6: memref<16x128xbf16, #tpu.memory_space<vmem>>) attributes {dimension_semantics = [#tpu.dimension_semantics<parallel>, #tpu.dimension_semantics<parallel>, #tpu.dimension_semantics<arbitrary>], iteration_bounds = array<i64: 1, 1, 1>, scalar_prefetch = 0 : i64, scratch_operands = 0 : i64, tpu.core_type = #tpu.core_type<tc>, window_params = [{transform_indices = @transform_0, window_bounds = array<i64: 16, 576>}, {transform_indices = @transform_1, window_bounds = array<i64: 576, 128>}, {transform_indices = @transform_2, window_bounds = array<i64: 1, 128>}, {transform_indices = @transform_3, window_bounds = array<i64: 16, 128>}]} {
    %c0 = arith.constant 0 : index
    %c0_0 = arith.constant 0 : index
    %0 = vector.load %arg3[%c0, %c0_0] : memref<16x576xbf16, #tpu.memory_space<vmem>>, vector<16x576xbf16>
    %c0_1 = arith.constant 0 : index
    %c0_2 = arith.constant 0 : index
    %1 = vector.load %arg4[%c0_1, %c0_2] : memref<576x128xbf16, #tpu.memory_space<vmem>>, vector<576x128xbf16>
    %cst = arith.constant dense<0.000000e+00> : vector<16x128xf32>
    %2 = tpu.matmul %0, %1, %cst {dimension_numbers = #tpu.dot_dimension_numbers<[1], [0], [0], [1], [0, 0, 1, 1], [], []>} : vector<16x576xbf16>, vector<576x128xbf16>, vector<16x128xf32> -> vector<16x128xf32>
    %c0_3 = arith.constant 0 : index
    %c0_4 = arith.constant 0 : index
    %3 = vector.load %arg5[%c0_3, %c0_4] : memref<1x128xf32, #tpu.memory_space<vmem>>, vector<1x128xf32>
    %4 = vector.broadcast %3 : vector<1x128xf32> to vector<16x128xf32>
    %5 = arith.addf %2, %4 : vector<16x128xf32>
    %cst_5 = arith.constant 0.000000e+00 : f32
    %6 = vector.broadcast %cst_5 : f32 to vector<16x128xf32>
    %7 = arith.maximumf %5, %6 : vector<16x128xf32>
    %8 = arith.truncf %7 : vector<16x128xf32> to vector<16x128xbf16>
    %c0_6 = arith.constant 0 : index
    %c0_7 = arith.constant 0 : index
    %9 = vector.load %arg6[%c0_6, %c0_7] : memref<16x128xbf16, #tpu.memory_space<vmem>>, vector<16x128xbf16>
    tpu.vector_store %arg6[%c0_6, %c0_7], %8 {strides = array<i32>} : memref<16x128xbf16, #tpu.memory_space<vmem>>, vector<16x128xbf16>,
    return
  }
  func.func @transform_0(%arg0: i32, %arg1: i32, %arg2: i32) -> (i32, i32) {
    %c0_i32 = arith.constant 0 : i32
    return %arg0, %arg2 : i32, i32
  }
  func.func @transform_1(%arg0: i32, %arg1: i32, %arg2: i32) -> (i32, i32) {
    %c0_i32 = arith.constant 0 : i32
    return %arg2, %arg1 : i32, i32
  }
  func.func @transform_2(%arg0: i32, %arg1: i32, %arg2: i32) -> (i32, i32) {
    %c0_i32 = arith.constant 0 : i32
    %c0_i32_0 = arith.constant 0 : i32
    return %c0_i32, %arg1 : i32, i32
  }
  func.func @transform_3(%arg0: i32, %arg1: i32, %arg2: i32) -> (i32, i32) {
    %c0_i32 = arith.constant 0 : i32
    return %arg0, %arg1 : i32, i32
  }
}

module attributes {stable_mosaic.version = 11 : i64} {
  func.func @_fused_matmul_kernel(%arg0: i32, %arg1: i32, %arg2: i32, %arg3: memref<16x128xbf16, #tpu.memory_space<vmem>>, %arg4: memref<128x128xbf16, #tpu.memory_space<vmem>>, %arg5: memref<1x128xf32, #tpu.memory_space<vmem>>, %arg6: memref<16x128xf32, #tpu.memory_space<vmem>>) attributes {dimension_semantics = [#tpu.dimension_semantics<parallel>, #tpu.dimension_semantics<parallel>, #tpu.dimension_semantics<arbitrary>], iteration_bounds = array<i64: 1, 1, 1>, scalar_prefetch = 0 : i64, scratch_operands = 0 : i64, tpu.core_type = #tpu.core_type<tc>, window_params = [{transform_indices = @transform_0, window_bounds = array<i64: 16, 128>}, {transform_indices = @transform_1, window_bounds = array<i64: 128, 128>}, {transform_indices = @transform_2, window_bounds = array<i64: 1, 128>}, {transform_indices = @transform_3, window_bounds = array<i64: 16, 128>}]} {
    %c0 = arith.constant 0 : index
    %c0_0 = arith.constant 0 : index
    %0 = vector.load %arg3[%c0, %c0_0] : memref<16x128xbf16, #tpu.memory_space<vmem>>, vector<16x128xbf16>
    %c0_1 = arith.constant 0 : index
    %c0_2 = arith.constant 0 : index
    %1 = vector.load %arg4[%c0_1, %c0_2] : memref<128x128xbf16, #tpu.memory_space<vmem>>, vector<128x128xbf16>
    %cst = arith.constant dense<0.000000e+00> : vector<16x128xf32>
    %2 = tpu.matmul %0, %1, %cst {dimension_numbers = #tpu.dot_dimension_numbers<[1], [0], [0], [1], [0, 0, 1, 1], [], []>} : vector<16x128xbf16>, vector<128x128xbf16>, vector<16x128xf32> -> vector<16x128xf32>
    %c0_3 = arith.constant 0 : index
    %c0_4 = arith.constant 0 : index
    %3 = vector.load %arg5[%c0_3, %c0_4] : memref<1x128xf32, #tpu.memory_space<vmem>>, vector<1x128xf32>
    %4 = vector.broadcast %3 : vector<1x128xf32> to vector<16x128xf32>
    %5 = arith.addf %2, %4 : vector<16x128xf32>
    %c0_5 = arith.constant 0 : index
    %c0_6 = arith.constant 0 : index
    %6 = vector.load %arg6[%c0_5, %c0_6] : memref<16x128xf32, #tpu.memory_space<vmem>>, vector<16x128xf32>
    tpu.vector_store %arg6[%c0_5, %c0_6], %5 {strides = array<i32>} : memref<16x128xf32, #tpu.memory_space<vmem>>, vector<16x128xf32>,
    return
  }
  func.func @transform_0(%arg0: i32, %arg1: i32, %arg2: i32) -> (i32, i32) {
    %c0_i32 = arith.constant 0 : i32
    return %arg0, %arg2 : i32, i32
  }
  func.func @transform_1(%arg0: i32, %arg1: i32, %arg2: i32) -> (i32, i32) {
    %c0_i32 = arith.constant 0 : i32
    return %arg2, %arg1 : i32, i32
  }
  func.func @transform_2(%arg0: i32, %arg1: i32, %arg2: i32) -> (i32, i32) {
    %c0_i32 = arith.constant 0 : i32
    %c0_i32_0 = arith.constant 0 : i32
    return %c0_i32, %arg1 : i32, i32
  }
  func.func @transform_3(%arg0: i32, %arg1: i32, %arg2: i32) -> (i32, i32) {
    %c0_i32 = arith.constant 0 : i32
    return %arg0, %arg1 : i32, i32
  }
}

module attributes {stable_mosaic.version = 11 : i64} {
  func.func @_fused_matmul_kernel(%arg0: i32, %arg1: i32, %arg2: i32, %arg3: memref<16x1152xbf16, #tpu.memory_space<vmem>>, %arg4: memref<1152x128xbf16, #tpu.memory_space<vmem>>, %arg5: memref<1x128xf32, #tpu.memory_space<vmem>>, %arg6: memref<16x128xbf16, #tpu.memory_space<vmem>>, %arg7: memref<16x128xbf16, #tpu.memory_space<vmem>>) attributes {dimension_semantics = [#tpu.dimension_semantics<parallel>, #tpu.dimension_semantics<parallel>, #tpu.dimension_semantics<arbitrary>], iteration_bounds = array<i64: 1, 1, 1>, scalar_prefetch = 0 : i64, scratch_operands = 0 : i64, tpu.core_type = #tpu.core_type<tc>, window_params = [{transform_indices = @transform_0, window_bounds = array<i64: 16, 1152>}, {transform_indices = @transform_1, window_bounds = array<i64: 1152, 128>}, {transform_indices = @transform_2, window_bounds = array<i64: 1, 128>}, {transform_indices = @transform_3, window_bounds = array<i64: 16, 128>}, {transform_indices = @transform_4, window_bounds = array<i64: 16, 128>}]} {
    %c0 = arith.constant 0 : index
    %c0_0 = arith.constant 0 : index
    %0 = vector.load %arg3[%c0, %c0_0] : memref<16x1152xbf16, #tpu.memory_space<vmem>>, vector<16x1152xbf16>
    %c0_1 = arith.constant 0 : index
    %c0_2 = arith.constant 0 : index
    %1 = vector.load %arg4[%c0_1, %c0_2] : memref<1152x128xbf16, #tpu.memory_space<vmem>>, vector<1152x128xbf16>
    %cst = arith.constant dense<0.000000e+00> : vector<16x128xf32>
    %2 = tpu.matmul %0, %1, %cst {dimension_numbers = #tpu.dot_dimension_numbers<[1], [0], [0], [1], [0, 0, 1, 1], [], []>} : vector<16x1152xbf16>, vector<1152x128xbf16>, vector<16x128xf32> -> vector<16x128xf32>
    %c0_3 = arith.constant 0 : index
    %c0_4 = arith.constant 0 : index
    %3 = vector.load %arg5[%c0_3, %c0_4] : memref<1x128xf32, #tpu.memory_space<vmem>>, vector<1x128xf32>
    %4 = vector.broadcast %3 : vector<1x128xf32> to vector<16x128xf32>
    %5 = arith.addf %2, %4 : vector<16x128xf32>
    %c0_5 = arith.constant 0 : index
    %c0_6 = arith.constant 0 : index
    %6 = vector.load %arg6[%c0_5, %c0_6] : memref<16x128xbf16, #tpu.memory_space<vmem>>, vector<16x128xbf16>
    %7 = arith.extf %6 : vector<16x128xbf16> to vector<16x128xf32>
    %8 = arith.addf %5, %7 : vector<16x128xf32>
    %cst_7 = arith.constant 0.000000e+00 : f32
    %9 = vector.broadcast %cst_7 : f32 to vector<16x128xf32>
    %10 = arith.maximumf %8, %9 : vector<16x128xf32>
    %11 = arith.truncf %10 : vector<16x128xf32> to vector<16x128xbf16>
    %c0_8 = arith.constant 0 : index
    %c0_9 = arith.constant 0 : index
    %12 = vector.load %arg7[%c0_8, %c0_9] : memref<16x128xbf16, #tpu.memory_space<vmem>>, vector<16x128xbf16>
    tpu.vector_store %arg7[%c0_8, %c0_9], %11 {strides = array<i32>} : memref<16x128xbf16, #tpu.memory_space<vmem>>, vector<16x128xbf16>,
    return
  }
  func.func @transform_0(%arg0: i32, %arg1: i32, %arg2: i32) -> (i32, i32) {
    %c0_i32 = arith.constant 0 : i32
    return %arg0, %arg2 : i32, i32
  }
  func.func @transform_1(%arg0: i32, %arg1: i32, %arg2: i32) -> (i32, i32) {
    %c0_i32 = arith.constant 0 : i32
    return %arg2, %arg1 : i32, i32
  }
  func.func @transform_2(%arg0: i32, %arg1: i32, %arg2: i32) -> (i32, i32) {
    %c0_i32 = arith.constant 0 : i32
    %c0_i32_0 = arith.constant 0 : i32
    return %c0_i32, %arg1 : i32, i32
  }
  func.func @transform_3(%arg0: i32, %arg1: i32, %arg2: i32) -> (i32, i32) {
    %c0_i32 = arith.constant 0 : i32
    return %arg0, %arg1 : i32, i32
  }
  func.func @transform_4(%arg0: i32, %arg1: i32, %arg2: i32) -> (i32, i32) {
    %c0_i32 = arith.constant 0 : i32
    return %arg0, %arg1 : i32, i32
  }
}

module attributes {stable_mosaic.version = 11 : i64} {
  func.func @_fused_matmul_kernel(%arg0: i32, %arg1: i32, %arg2: i32, %arg3: memref<16x64xbf16, #tpu.memory_space<vmem>>, %arg4: memref<64x128xbf16, #tpu.memory_space<vmem>>, %arg5: memref<1x128xf32, #tpu.memory_space<vmem>>, %arg6: memref<16x128xbf16, #tpu.memory_space<vmem>>) attributes {dimension_semantics = [#tpu.dimension_semantics<parallel>, #tpu.dimension_semantics<parallel>, #tpu.dimension_semantics<arbitrary>], iteration_bounds = array<i64: 1, 1, 1>, scalar_prefetch = 0 : i64, scratch_operands = 0 : i64, tpu.core_type = #tpu.core_type<tc>, window_params = [{transform_indices = @transform_0, window_bounds = array<i64: 16, 64>}, {transform_indices = @transform_1, window_bounds = array<i64: 64, 128>}, {transform_indices = @transform_2, window_bounds = array<i64: 1, 128>}, {transform_indices = @transform_3, window_bounds = array<i64: 16, 128>}]} {
    %c0 = arith.constant 0 : index
    %c0_0 = arith.constant 0 : index
    %0 = vector.load %arg3[%c0, %c0_0] : memref<16x64xbf16, #tpu.memory_space<vmem>>, vector<16x64xbf16>
    %c0_1 = arith.constant 0 : index
    %c0_2 = arith.constant 0 : index
    %1 = vector.load %arg4[%c0_1, %c0_2] : memref<64x128xbf16, #tpu.memory_space<vmem>>, vector<64x128xbf16>
    %cst = arith.constant dense<0.000000e+00> : vector<16x128xf32>
    %2 = tpu.matmul %0, %1, %cst {dimension_numbers = #tpu.dot_dimension_numbers<[1], [0], [0], [1], [0, 0, 1, 1], [], []>} : vector<16x64xbf16>, vector<64x128xbf16>, vector<16x128xf32> -> vector<16x128xf32>
    %c0_3 = arith.constant 0 : index
    %c0_4 = arith.constant 0 : index
    %3 = vector.load %arg5[%c0_3, %c0_4] : memref<1x128xf32, #tpu.memory_space<vmem>>, vector<1x128xf32>
    %4 = vector.broadcast %3 : vector<1x128xf32> to vector<16x128xf32>
    %5 = arith.addf %2, %4 : vector<16x128xf32>
    %6 = arith.truncf %5 : vector<16x128xf32> to vector<16x128xbf16>
    %c0_5 = arith.constant 0 : index
    %c0_6 = arith.constant 0 : index
    %7 = vector.load %arg6[%c0_5, %c0_6] : memref<16x128xbf16, #tpu.memory_space<vmem>>, vector<16x128xbf16>
    tpu.vector_store %arg6[%c0_5, %c0_6], %6 {strides = array<i32>} : memref<16x128xbf16, #tpu.memory_space<vmem>>, vector<16x128xbf16>,
    return
  }
  func.func @transform_0(%arg0: i32, %arg1: i32, %arg2: i32) -> (i32, i32) {
    %c0_i32 = arith.constant 0 : i32
    return %arg0, %arg2 : i32, i32
  }
  func.func @transform_1(%arg0: i32, %arg1: i32, %arg2: i32) -> (i32, i32) {
    %c0_i32 = arith.constant 0 : i32
    return %arg2, %arg1 : i32, i32
  }
  func.func @transform_2(%arg0: i32, %arg1: i32, %arg2: i32) -> (i32, i32) {
    %c0_i32 = arith.constant 0 : i32
    %c0_i32_0 = arith.constant 0 : i32
    return %c0_i32, %arg1 : i32, i32
  }
  func.func @transform_3(%arg0: i32, %arg1: i32, %arg2: i32) -> (i32, i32) {
    %c0_i32 = arith.constant 0 : i32
    return %arg0, %arg1 : i32, i32
  }
}

</mosaic_0001>

<llo_original>
// kernel: _lambda_.14
$region0: #{_lambda_.14}
  #allocation0 [shape = 'u32[]', space=smem, size = 0x4, offset = 0x4, fixed_abs, tag = 'smem constant byte address 0x4 - core index']
  #allocation1 [shape = 'u32[144,128]{1,0:T(1,128)}', space=vmem, size = 0x12000, scoped, tag = 'internal scratch']
  %s0 = inlined_call_operand.vmem [shape: bf16[128,144], index: 0, kind: input, shape index: {}]
  %s1 = inlined_call_operand.vmem [shape: bf16[144,16], index: 1, kind: input, shape index: {}]
  %s2 = inlined_call_operand.vmem [shape: f32[1,16], index: 2, kind: input, shape index: {}]
  %s3 = inlined_call_operand.vmem [shape: bf16[128,16], index: 3, kind: output, shape index: {}]
  %s4 = sld [smem:[#allocation0]]
  $region22: #{_lambda_.14} parent=0
    _
  %s6 = ssub.s32 1, %s4
  %s7 = scalar_select 0, %s6, %s4
  // Predicated region
  $region2: #{_lambda_.14} parent=0 // pred_check
    _
  $region3: #{_lambda_.14} parent=0 // pred_check_branch
    %9 = sbr.rel (0) target = $region5
  $region4: #{_lambda_.14} parent=0 // pred_region
    _
  $region5: #{_lambda_.14} parent=0 // pred_fallthru
    _
  // Predicated region
  $region6: #{_lambda_.14} parent=0 // pred_check
    _
  $region7: #{_lambda_.14} parent=0 // pred_check_branch
    %11 = sbr.rel (0) target = $region9
  $region8: #{_lambda_.14} parent=0 // pred_region
    _
  $region9: #{_lambda_.14} parent=0 // pred_fallthru
    _
  // Predicated region
  $region10: #{_lambda_.14} parent=0 // pred_check
    _
  $region11: #{_lambda_.14} parent=0 // pred_check_branch
    %13 = sbr.rel (0) target = $region13
  $region12: #{_lambda_.14} parent=0 // pred_region
    _
  $region13: #{_lambda_.14} parent=0 // pred_fallthru
    _
  %v15 = vld [vmem:[%s0] sm:$0xff]
  %v16 = vld [vmem:[%s0 + $0x8] sm:$0xff]
  %v17 = vld [vmem:[%s0 + $0x10] sm:$0xff]
  %v18 = vld [vmem:[%s0 + $0x18] sm:$0xff]
  %v19 = vld [vmem:[%s0 + $0x20] sm:$0xff]
  %v20 = vld [vmem:[%s0 + $0x28] sm:$0xff]
  %v21 = vld [vmem:[%s0 + $0x30] sm:$0xff]
  %v22 = vld [vmem:[%s0 + $0x38] sm:$0xff]
  %v23 = vld [vmem:[%s0 + $0x40] sm:$0xff]
  %v24 = vld [vmem:[%s0 + $0x48] sm:$0xff]
  %v25 = vld [vmem:[%s0 + $0x50] sm:$0xff]
  %v26 = vld [vmem:[%s0 + $0x58] sm:$0xff]
  %v27 = vld [vmem:[%s0 + $0x60] sm:$0xff]
  %v28 = vld [vmem:[%s0 + $0x68] sm:$0xff]
  %v29 = vld [vmem:[%s0 + $0x70] sm:$0xff]
  %v30 = vld [vmem:[%s0 + $0x78] sm:$0xff]
  %v31 = vld [vmem:[%s1] sm:$0xf]
  %v32 = vld [vmem:[%s1 + $0x4] sm:$0xf]
  %v33 = vld [vmem:[%s1 + $0x8] sm:$0xf]
  %v34 = vld [vmem:[%s1 + $0xc] sm:$0xf]
  %v35 = vld [vmem:[%s1 + $0x10] sm:$0xf]
  %v36 = vld [vmem:[%s1 + $0x14] sm:$0xf]
  %v37 = vld [vmem:[%s1 + $0x18] sm:$0xf]
  %v38 = vld [vmem:[%s1 + $0x1c] sm:$0xf]
  %v39 = vld [vmem:[%s1 + $0x20] sm:$0xf]
  %v40 = vld [vmem:[%s1 + $0x24] sm:$0xf]
  %v41 = vld [vmem:[%s1 + $0x28] sm:$0xf]
  %v42 = vld [vmem:[%s1 + $0x2c] sm:$0xf]
  %v43 = vld [vmem:[%s1 + $0x30] sm:$0xf]
  %v44 = vld [vmem:[%s1 + $0x34] sm:$0xf]
  %v45 = vld [vmem:[%s1 + $0x38] sm:$0xf]
  %v46 = vld [vmem:[%s1 + $0x3c] sm:$0xf]
  %v47 = vld [vmem:[%s1 + $0x40] sm:$0xf]
  %v48 = vld [vmem:[%s1 + $0x44] sm:$0xf]
  %v49 = vld [vmem:[%s2] sm:$0x1]
  %v51 = vlaneseq
  %v52 = vshrl.u32 %v51, 7
  %v53 = vsub.s32 0, %v52
  %v54 = vrot.slane %v49, %v53
  %v72 = vunpack.c.l.b16 %v15
  %v73 = vunpack.c.h.b16 %v15
  %v74 = vunpack.c.l.b16 %v16
  %v75 = vunpack.c.h.b16 %v16
  %v76 = vunpack.c.l.b16 %v17
  %v77 = vunpack.c.h.b16 %v17
  %v78 = vunpack.c.l.b16 %v18
  %v79 = vunpack.c.h.b16 %v18
  %v80 = vunpack.c.l.b16 %v19
  %v81 = vunpack.c.h.b16 %v19
  %v82 = vunpack.c.l.b16 %v20
  %v83 = vunpack.c.h.b16 %v20
  %v84 = vunpack.c.l.b16 %v21
  %v85 = vunpack.c.h.b16 %v21
  %v86 = vunpack.c.l.b16 %v22
  %v87 = vunpack.c.h.b16 %v22
  %v88 = vunpack.c.l.b16 %v23
  %v89 = vunpack.c.h.b16 %v23
  %v90 = vunpack.c.l.b16 %v24
  %v91 = vunpack.c.h.b16 %v24
  %v92 = vunpack.c.l.b16 %v25
  %v93 = vunpack.c.h.b16 %v25
  %v94 = vunpack.c.l.b16 %v26
  %v95 = vunpack.c.h.b16 %v26
  %v96 = vunpack.c.l.b16 %v27
  %v97 = vunpack.c.h.b16 %v27
  %v98 = vunpack.c.l.b16 %v28
  %v99 = vunpack.c.h.b16 %v28
  %v100 = vunpack.c.l.b16 %v29
  %v101 = vunpack.c.h.b16 %v29
  %v102 = vunpack.c.l.b16 %v30
  %v103 = vunpack.c.h.b16 %v30
  %v104 = vpack.c.b16 %v74, %v72
  %v105 = vpack.c.b16 %v75, %v73
  %v106 = vpack.c.b16 %v78, %v76
  %v107 = vpack.c.b16 %v79, %v77
  %v108 = vpack.c.b16 %v82, %v80
  %v109 = vpack.c.b16 %v83, %v81
  %v110 = vpack.c.b16 %v86, %v84
  %v111 = vpack.c.b16 %v87, %v85
  %v112 = vpack.c.b16 %v90, %v88
  %v113 = vpack.c.b16 %v91, %v89
  %v114 = vpack.c.b16 %v94, %v92
  %v115 = vpack.c.b16 %v95, %v93
  %v116 = vpack.c.b16 %v98, %v96
  %v117 = vpack.c.b16 %v99, %v97
  %v118 = vpack.c.b16 %v102, %v100
  %v119 = vpack.c.b16 %v103, %v101
  %v146 = vunpack.c.l.b16 %v31
  %v147 = vunpack.c.l.b16 %v32
  %v148 = vunpack.c.l.b16 %v33
  %v149 = vunpack.c.l.b16 %v34
  %v150 = vunpack.c.l.b16 %v35
  %v151 = vunpack.c.l.b16 %v36
  %v152 = vunpack.c.l.b16 %v37
  %v153 = vunpack.c.l.b16 %v38
  %v154 = vunpack.c.l.b16 %v39
  %v155 = vunpack.c.l.b16 %v40
  %v156 = vunpack.c.l.b16 %v41
  %v157 = vunpack.c.l.b16 %v42
  %v158 = vunpack.c.l.b16 %v43
  %v159 = vunpack.c.l.b16 %v44
  %v160 = vunpack.c.l.b16 %v45
  %v161 = vunpack.c.l.b16 %v46
  %v162 = vunpack.c.l.b16 %v47
  %v163 = vunpack.c.l.b16 %v48
  %v164 = vpack.c.b16 %v147, %v146
  %v165 = vpack.c.b16 %v149, %v148
  %v166 = vpack.c.b16 %v151, %v150
  %v167 = vpack.c.b16 %v153, %v152
  %v168 = vpack.c.b16 %v155, %v154
  %v169 = vpack.c.b16 %v157, %v156
  %v170 = vpack.c.b16 %v159, %v158
  %v171 = vpack.c.b16 %v161, %v160
  %v172 = vpack.c.b16 %v163, %v162
  %vm182 = vcmask 130048
  %v184 = vsel %vm182, %v105, 0
  %v187 = vsel %vm182, %v107, 0
  %v190 = vsel %vm182, %v109, 0
  %v193 = vsel %vm182, %v111, 0
  %v196 = vsel %vm182, %v113, 0
  %v199 = vsel %vm182, %v115, 0
  %v202 = vsel %vm182, %v117, 0
  %v205 = vsel %vm182, %v119, 0
  %207 = vmatprep.subr.bf16.mxu0 0
  %208 = vmatpush1.bf16.msra.mxu0 %v164
  %209 = vmatprep.subr.bf16.mxu0 0
  %210 = vmatpush1.bf16.msra.mxu0 %v165
  %211 = vmatprep.subr.bf16.mxu0 0
  %212 = vmatpush1.bf16.msra.mxu0 %v166
  %213 = vmatprep.subr.bf16.mxu0 0
  %214 = vmatpush1.bf16.msra.mxu0 %v167
  %215 = vmatprep.subr.bf16.mxu0 0
  %216 = vmatpush1.bf16.msra.mxu0 %v168
  %217 = vmatprep.subr.bf16.mxu0 0
  %218 = vmatpush1.bf16.msra.mxu0 %v169
  %219 = vmatprep.subr.bf16.mxu0 0
  %220 = vmatpush1.bf16.msra.mxu0 %v170
  %221 = vmatprep.subr.bf16.mxu0 0
  %222 = vmatpush1.bf16.msra.mxu0 %v171
  %223 = vmatprep.subr.bf16.mxu0 0
  %224 = vmatpush1.bf16.msra.mxu0 %v172
  %225 = vmatprep.subr.bf16.mxu0 0
  %226 = vmatpush1.bf16.msra.mxu0 0
  %227 = vmatprep.subr.bf16.mxu0 0
  %228 = vmatpush1.bf16.msra.mxu0 0
  %229 = vmatprep.subr.bf16.mxu0 0
  %230 = vmatpush1.bf16.msra.mxu0 0
  %231 = vmatprep.subr.bf16.mxu0 0
  %232 = vmatpush1.bf16.msra.mxu0 0
  %233 = vmatprep.subr.bf16.mxu0 0
  %234 = vmatpush1.bf16.msra.mxu0 0
  %235 = vmatprep.subr.bf16.mxu0 0
  %236 = vmatpush1.bf16.msra.mxu0 0
  %237 = vmatprep.subr.bf16.mxu0 0
  %238 = vmatpush1.bf16.msra.mxu0 0
  %239 = vmatprep.mubr.bf16.mxu0 %v184
  %240 = vmatmul.mubr.bf16.gmra.mrb[0].mxu0 %v104
  %v241 = vpop.f32.mrb[0].mxu0
  %v242 = vadd.f32 %v54, %v241
  %v243 = vpop.f32.mrb[0].mxu0
  %v244 = vpop.f32.mrb[0].mxu0
  %v245 = vadd.f32 %v54, %v244
  %v246 = vpop.f32.mrb[0].mxu0
  %247 = vmatprep.mubr.bf16.mxu0 %v187
  %248 = vmatmul.mubr.bf16.gmra.mrb[0].mxu0 %v106
  %v249 = vpop.f32.mrb[0].mxu0
  %v250 = vadd.f32 %v54, %v249
  %v251 = vpop.f32.mrb[0].mxu0
  %v252 = vpop.f32.mrb[0].mxu0
  %v253 = vadd.f32 %v54, %v252
  %v254 = vpop.f32.mrb[0].mxu0
  %255 = vmatprep.mubr.bf16.mxu0 %v190
  %256 = vmatmul.mubr.bf16.gmra.mrb[0].mxu0 %v108
  %v257 = vpop.f32.mrb[0].mxu0
  %v258 = vadd.f32 %v54, %v257
  %v259 = vpop.f32.mrb[0].mxu0
  %v260 = vpop.f32.mrb[0].mxu0
  %v261 = vadd.f32 %v54, %v260
  %v262 = vpop.f32.mrb[0].mxu0
  %263 = vmatprep.mubr.bf16.mxu0 %v193
  %264 = vmatmul.mubr.bf16.gmra.mrb[0].mxu0 %v110
  %v265 = vpop.f32.mrb[0].mxu0
  %v266 = vadd.f32 %v54, %v265
  %v267 = vpop.f32.mrb[0].mxu0
  %v268 = vpop.f32.mrb[0].mxu0
  %v269 = vadd.f32 %v54, %v268
  %v270 = vpop.f32.mrb[0].mxu0
  %271 = vmatprep.mubr.bf16.mxu0 %v196
  %272 = vmatmul.mubr.bf16.gmra.mrb[0].mxu0 %v112
  %v273 = vpop.f32.mrb[0].mxu0
  %v274 = vadd.f32 %v54, %v273
  %v275 = vpop.f32.mrb[0].mxu0
  %v276 = vpop.f32.mrb[0].mxu0
  %v277 = vadd.f32 %v54, %v276
  %v278 = vpop.f32.mrb[0].mxu0
  %279 = vmatprep.mubr.bf16.mxu0 %v199
  %280 = vmatmul.mubr.bf16.gmra.mrb[0].mxu0 %v114
  %v281 = vpop.f32.mrb[0].mxu0
  %v282 = vadd.f32 %v54, %v281
  %v283 = vpop.f32.mrb[0].mxu0
  %v284 = vpop.f32.mrb[0].mxu0
  %v285 = vadd.f32 %v54, %v284
  %v286 = vpop.f32.mrb[0].mxu0
  %287 = vmatprep.mubr.bf16.mxu0 %v202
  %288 = vmatmul.mubr.bf16.gmra.mrb[0].mxu0 %v116
  %v289 = vpop.f32.mrb[0].mxu0
  %v290 = vadd.f32 %v54, %v289
  %v291 = vpop.f32.mrb[0].mxu0
  %v292 = vpop.f32.mrb[0].mxu0
  %v293 = vadd.f32 %v54, %v292
  %v294 = vpop.f32.mrb[0].mxu0
  %295 = vmatprep.mubr.bf16.mxu0 %v205
  %296 = vmatmul.mubr.bf16.gmra.mrb[0].mxu0 %v118
  %v297 = vpop.f32.mrb[0].mxu0
  %v298 = vadd.f32 %v54, %v297
  %v299 = vpop.f32.mrb[0].mxu0
  %v300 = vpop.f32.mrb[0].mxu0
  %v301 = vadd.f32 %v54, %v300
  %v302 = vpop.f32.mrb[0].mxu0
  %303 = vdwg.mxu0
  %v304 = vmax.f32 %v242, 0.0
  %v305 = vmax.f32 %v245, 0.0
  %v306 = vmax.f32 %v250, 0.0
  %v307 = vmax.f32 %v253, 0.0
  %v308 = vmax.f32 %v258, 0.0
  %v309 = vmax.f32 %v261, 0.0
  %v310 = vmax.f32 %v266, 0.0
  %v311 = vmax.f32 %v269, 0.0
  %v312 = vmax.f32 %v274, 0.0
  %v313 = vmax.f32 %v277, 0.0
  %v314 = vmax.f32 %v282, 0.0
  %v315 = vmax.f32 %v285, 0.0
  %v316 = vmax.f32 %v290, 0.0
  %v317 = vmax.f32 %v293, 0.0
  %v318 = vmax.f32 %v298, 0.0
  %v319 = vmax.f32 %v301, 0.0
  %v320 = vpack.c.bf16 %v305, %v304
  %v321 = vpack.c.bf16 %v307, %v306
  %v322 = vpack.c.bf16 %v309, %v308
  %v323 = vpack.c.bf16 %v311, %v310
  %v324 = vpack.c.bf16 %v313, %v312
  %v325 = vpack.c.bf16 %v315, %v314
  %v326 = vpack.c.bf16 %v317, %v316
  %v327 = vpack.c.bf16 %v319, %v318
  %v336 = vunpack.c.l.b16 %v320
  %v337 = vunpack.c.h.b16 %v320
  %v338 = vunpack.c.l.b16 %v321
  %v339 = vunpack.c.h.b16 %v321
  %v340 = vunpack.c.l.b16 %v322
  %v341 = vunpack.c.h.b16 %v322
  %v342 = vunpack.c.l.b16 %v323
  %v343 = vunpack.c.h.b16 %v323
  %v344 = vunpack.c.l.b16 %v324
  %v345 = vunpack.c.h.b16 %v324
  %v346 = vunpack.c.l.b16 %v325
  %v347 = vunpack.c.h.b16 %v325
  %v348 = vunpack.c.l.b16 %v326
  %v349 = vunpack.c.h.b16 %v326
  %v350 = vunpack.c.l.b16 %v327
  %v351 = vunpack.c.h.b16 %v327
  %v352 = vpack.c.b16 %v336, %v336
  %v353 = vpack.c.b16 %v337, %v337
  %v354 = vpack.c.b16 %v338, %v338
  %v355 = vpack.c.b16 %v339, %v339
  %v356 = vpack.c.b16 %v340, %v340
  %v357 = vpack.c.b16 %v341, %v341
  %v358 = vpack.c.b16 %v342, %v342
  %v359 = vpack.c.b16 %v343, %v343
  %v360 = vpack.c.b16 %v344, %v344
  %v361 = vpack.c.b16 %v345, %v345
  %v362 = vpack.c.b16 %v346, %v346
  %v363 = vpack.c.b16 %v347, %v347
  %v364 = vpack.c.b16 %v348, %v348
  %v365 = vpack.c.b16 %v349, %v349
  %v366 = vpack.c.b16 %v350, %v350
  %v367 = vpack.c.b16 %v351, %v351
  %vm384 = vcmask 125952
  %385 = vst.msk [vmem:[%s3] sm:$0xf] %vm384, %v352
  %386 = vst.msk [vmem:[%s3 + $0x4] sm:$0xf] %vm384, %v353
  %387 = vst.msk [vmem:[%s3 + $0x8] sm:$0xf] %vm384, %v354
  %388 = vst.msk [vmem:[%s3 + $0xc] sm:$0xf] %vm384, %v355
  %389 = vst.msk [vmem:[%s3 + $0x10] sm:$0xf] %vm384, %v356
  %390 = vst.msk [vmem:[%s3 + $0x14] sm:$0xf] %vm384, %v357
  %391 = vst.msk [vmem:[%s3 + $0x18] sm:$0xf] %vm384, %v358
  %392 = vst.msk [vmem:[%s3 + $0x1c] sm:$0xf] %vm384, %v359
  %393 = vst.msk [vmem:[%s3 + $0x20] sm:$0xf] %vm384, %v360
  %394 = vst.msk [vmem:[%s3 + $0x24] sm:$0xf] %vm384, %v361
  %395 = vst.msk [vmem:[%s3 + $0x28] sm:$0xf] %vm384, %v362
  %396 = vst.msk [vmem:[%s3 + $0x2c] sm:$0xf] %vm384, %v363
  %397 = vst.msk [vmem:[%s3 + $0x30] sm:$0xf] %vm384, %v364
  %398 = vst.msk [vmem:[%s3 + $0x34] sm:$0xf] %vm384, %v365
  %399 = vst.msk [vmem:[%s3 + $0x38] sm:$0xf] %vm384, %v366
  %400 = vst.msk [vmem:[%s3 + $0x3c] sm:$0xf] %vm384, %v367
  // Predicated region
  $region14: #{_lambda_.14} parent=0 // pred_check
    _
  $region15: #{_lambda_.14} parent=0 // pred_check_branch
    %402 = sbr.rel (0) target = $region17
  $region16: #{_lambda_.14} parent=0 // pred_region
    _
  $region17: #{_lambda_.14} parent=0 // pred_fallthru
    _
  // Predicated region
  $region18: #{_lambda_.14} parent=0 // pred_check
    _
  $region19: #{_lambda_.14} parent=0 // pred_check_branch
    %404 = sbr.rel (0) target = $region21
  $region20: #{_lambda_.14} parent=0 // pred_region
    _
  $region21: #{_lambda_.14} parent=0 // pred_fallthru
    _

// kernel: _lambda_.13
$region0: #{_lambda_.13}
  #allocation0 [shape = 'u32[]', space=smem, size = 0x4, offset = 0x4, fixed_abs, tag = 'smem constant byte address 0x4 - core index']
  #allocation1 [shape = 'u32[144,128]{1,0:T(1,128)}', space=vmem, size = 0x12000, scoped, tag = 'internal scratch']
  %s0 = inlined_call_operand.vmem [shape: bf16[512,147], index: 0, kind: input, shape index: {}]
  %s1 = inlined_call_operand.vmem [shape: bf16[147,16], index: 1, kind: input, shape index: {}]
  %s2 = inlined_call_operand.vmem [shape: f32[1,16], index: 2, kind: input, shape index: {}]
  %s3 = inlined_call_operand.vmem [shape: bf16[512,16], index: 3, kind: output, shape index: {}]
  %s4 = sld [smem:[#allocation0]]
  $region22: #{_lambda_.13} parent=0
    _
  %s6 = ssub.s32 1, %s4
  %s7 = scalar_select 0, %s6, %s4
  // Predicated region
  $region2: #{_lambda_.13} parent=0 // pred_check
    _
  $region3: #{_lambda_.13} parent=0 // pred_check_branch
    %9 = sbr.rel (0) target = $region5
  $region4: #{_lambda_.13} parent=0 // pred_region
    _
  $region5: #{_lambda_.13} parent=0 // pred_fallthru
    _
  // Predicated region
  $region6: #{_lambda_.13} parent=0 // pred_check
    _
  $region7: #{_lambda_.13} parent=0 // pred_check_branch
    %11 = sbr.rel (0) target = $region9
  $region8: #{_lambda_.13} parent=0 // pred_region
    _
  $region9: #{_lambda_.13} parent=0 // pred_fallthru
    _
  // Predicated region
  $region10: #{_lambda_.13} parent=0 // pred_check
    _
  $region11: #{_lambda_.13} parent=0 // pred_check_branch
    %13 = sbr.rel (0) target = $region13
  $region12: #{_lambda_.13} parent=0 // pred_region
    _
  $region13: #{_lambda_.13} parent=0 // pred_fallthru
    _
  %v15 = vld [vmem:[%s0] sm:$0xff]
  %v16 = vld [vmem:[%s0 + $0x8] sm:$0xff]
  %v17 = vld [vmem:[%s0 + $0x10] sm:$0xff]
  %v18 = vld [vmem:[%s0 + $0x18] sm:$0xff]
  %v19 = vld [vmem:[%s0 + $0x20] sm:$0xff]
  %v20 = vld [vmem:[%s0 + $0x28] sm:$0xff]
  %v21 = vld [vmem:[%s0 + $0x30] sm:$0xff]
  %v22 = vld [vmem:[%s0 + $0x38] sm:$0xff]
  %v23 = vld [vmem:[%s0 + $0x40] sm:$0xff]
  %v24 = vld [vmem:[%s0 + $0x48] sm:$0xff]
  %v25 = vld [vmem:[%s0 + $0x50] sm:$0xff]
  %v26 = vld [vmem:[%s0 + $0x58] sm:$0xff]
  %v27 = vld [vmem:[%s0 + $0x60] sm:$0xff]
  %v28 = vld [vmem:[%s0 + $0x68] sm:$0xff]
  %v29 = vld [vmem:[%s0 + $0x70] sm:$0xff]
  %v30 = vld [vmem:[%s0 + $0x78] sm:$0xff]
  %v31 = vld [vmem:[%s0 + $0x80] sm:$0xff]
  %v32 = vld [vmem:[%s0 + $0x88] sm:$0xff]
  %v33 = vld [vmem:[%s0 + $0x90] sm:$0xff]
  %v34 = vld [vmem:[%s0 + $0x98] sm:$0xff]
  %v35 = vld [vmem:[%s0 + $0xa0] sm:$0xff]
  %v36 = vld [vmem:[%s0 + $0xa8] sm:$0xff]
  %v37 = vld [vmem:[%s0 + $0xb0] sm:$0xff]
  %v38 = vld [vmem:[%s0 + $0xb8] sm:$0xff]
  %v39 = vld [vmem:[%s0 + $0xc0] sm:$0xff]
  %v40 = vld [vmem:[%s0 + $0xc8] sm:$0xff]
  %v41 = vld [vmem:[%s0 + $0xd0] sm:$0xff]
  %v42 = vld [vmem:[%s0 + $0xd8] sm:$0xff]
  %v43 = vld [vmem:[%s0 + $0xe0] sm:$0xff]
  %v44 = vld [vmem:[%s0 + $0xe8] sm:$0xff]
  %v45 = vld [vmem:[%s0 + $0xf0] sm:$0xff]
  %v46 = vld [vmem:[%s0 + $0xf8] sm:$0xff]
  %v47 = vld [vmem:[%s0 + $0x100] sm:$0xff]
  %v48 = vld [vmem:[%s0 + $0x108] sm:$0xff]
  %v49 = vld [vmem:[%s0 + $0x110] sm:$0xff]
  %v50 = vld [vmem:[%s0 + $0x118] sm:$0xff]
  %v51 = vld [vmem:[%s0 + $0x120] sm:$0xff]
  %v52 = vld [vmem:[%s0 + $0x128] sm:$0xff]
  %v53 = vld [vmem:[%s0 + $0x130] sm:$0xff]
  %v54 = vld [vmem:[%s0 + $0x138] sm:$0xff]
  %v55 = vld [vmem:[%s0 + $0x140] sm:$0xff]
  %v56 = vld [vmem:[%s0 + $0x148] sm:$0xff]
  %v57 = vld [vmem:[%s0 + $0x150] sm:$0xff]
  %v58 = vld [vmem:[%s0 + $0x158] sm:$0xff]
  %v59 = vld [vmem:[%s0 + $0x160] sm:$0xff]
  %v60 = vld [vmem:[%s0 + $0x168] sm:$0xff]
  %v61 = vld [vmem:[%s0 + $0x170] sm:$0xff]
  %v62 = vld [vmem:[%s0 + $0x178] sm:$0xff]
  %v63 = vld [vmem:[%s0 + $0x180] sm:$0xff]
  %v64 = vld [vmem:[%s0 + $0x188] sm:$0xff]
  %v65 = vld [vmem:[%s0 + $0x190] sm:$0xff]
  %v66 = vld [vmem:[%s0 + $0x198] sm:$0xff]
  %v67 = vld [vmem:[%s0 + $0x1a0] sm:$0xff]
  %v68 = vld [vmem:[%s0 + $0x1a8] sm:$0xff]
  %v69 = vld [vmem:[%s0 + $0x1b0] sm:$0xff]
  %v70 = vld [vmem:[%s0 + $0x1b8] sm:$0xff]
  %v71 = vld [vmem:[%s0 + $0x1c0] sm:$0xff]
  %v72 = vld [vmem:[%s0 + $0x1c8] sm:$0xff]
  %v73 = vld [vmem:[%s0 + $0x1d0] sm:$0xff]
  %v74 = vld [vmem:[%s0 + $0x1d8] sm:$0xff]
  %v75 = vld [vmem:[%s0 + $0x1e0] sm:$0xff]
  %v76 = vld [vmem:[%s0 + $0x1e8] sm:$0xff]
  %v77 = vld [vmem:[%s0 + $0x1f0] sm:$0xff]
  %v78 = vld [vmem:[%s0 + $0x1f8] sm:$0xff]
  %v79 = vld [vmem:[%s1] sm:$0xf]
  %v80 = vld [vmem:[%s1 + $0x4] sm:$0xf]
  %v81 = vld [vmem:[%s1 + $0x8] sm:$0xf]
  %v82 = vld [vmem:[%s1 + $0xc] sm:$0xf]
  %v83 = vld [vmem:[%s1 + $0x10] sm:$0xf]
  %v84 = vld [vmem:[%s1 + $0x14] sm:$0xf]
  %v85 = vld [vmem:[%s1 + $0x18] sm:$0xf]
  %v86 = vld [vmem:[%s1 + $0x1c] sm:$0xf]
  %v87 = vld [vmem:[%s1 + $0x20] sm:$0xf]
  %v88 = vld [vmem:[%s1 + $0x24] sm:$0xf]
  %v89 = vld [vmem:[%s1 + $0x28] sm:$0xf]
  %v90 = vld [vmem:[%s1 + $0x2c] sm:$0xf]
  %v91 = vld [vmem:[%s1 + $0x30] sm:$0xf]
  %v92 = vld [vmem:[%s1 + $0x34] sm:$0xf]
  %v93 = vld [vmem:[%s1 + $0x38] sm:$0xf]
  %v94 = vld [vmem:[%s1 + $0x3c] sm:$0xf]
  %v95 = vld [vmem:[%s1 + $0x40] sm:$0xf]
  %v96 = vld [vmem:[%s1 + $0x44] sm:$0xf]
  %v97 = vld [vmem:[%s1 + $0x48] sm:$0x3]
  %v98 = vld [vmem:[%s2] sm:$0x1]
  %v100 = vlaneseq
  %v101 = vshrl.u32 %v100, 7
  %v102 = vsub.s32 0, %v101
  %v103 = vrot.slane %v98, %v102
  %v169 = vunpack.c.l.b16 %v15
  %v170 = vunpack.c.h.b16 %v15
  %v171 = vunpack.c.l.b16 %v16
  %v172 = vunpack.c.h.b16 %v16
  %v173 = vunpack.c.l.b16 %v17
  %v174 = vunpack.c.h.b16 %v17
  %v175 = vunpack.c.l.b16 %v18
  %v176 = vunpack.c.h.b16 %v18
  %v177 = vunpack.c.l.b16 %v19
  %v178 = vunpack.c.h.b16 %v19
  %v179 = vunpack.c.l.b16 %v20
  %v180 = vunpack.c.h.b16 %v20
  %v181 = vunpack.c.l.b16 %v21
  %v182 = vunpack.c.h.b16 %v21
  %v183 = vunpack.c.l.b16 %v22
  %v184 = vunpack.c.h.b16 %v22
  %v185 = vunpack.c.l.b16 %v23
  %v186 = vunpack.c.h.b16 %v23
  %v187 = vunpack.c.l.b16 %v24
  %v188 = vunpack.c.h.b16 %v24
  %v189 = vunpack.c.l.b16 %v25
  %v190 = vunpack.c.h.b16 %v25
  %v191 = vunpack.c.l.b16 %v26
  %v192 = vunpack.c.h.b16 %v26
  %v193 = vunpack.c.l.b16 %v27
  %v194 = vunpack.c.h.b16 %v27
  %v195 = vunpack.c.l.b16 %v28
  %v196 = vunpack.c.h.b16 %v28
  %v197 = vunpack.c.l.b16 %v29
  %v198 = vunpack.c.h.b16 %v29
  %v199 = vunpack.c.l.b16 %v30
  %v200 = vunpack.c.h.b16 %v30
  %v201 = vunpack.c.l.b16 %v31
  %v202 = vunpack.c.h.b16 %v31
  %v203 = vunpack.c.l.b16 %v32
  %v204 = vunpack.c.h.b16 %v32
  %v205 = vunpack.c.l.b16 %v33
  %v206 = vunpack.c.h.b16 %v33
  %v207 = vunpack.c.l.b16 %v34
  %v208 = vunpack.c.h.b16 %v34
  %v209 = vunpack.c.l.b16 %v35
  %v210 = vunpack.c.h.b16 %v35
  %v211 = vunpack.c.l.b16 %v36
  %v212 = vunpack.c.h.b16 %v36
  %v213 = vunpack.c.l.b16 %v37
  %v214 = vunpack.c.h.b16 %v37
  %v215 = vunpack.c.l.b16 %v38
  %v216 = vunpack.c.h.b16 %v38
  %v217 = vunpack.c.l.b16 %v39
  %v218 = vunpack.c.h.b16 %v39
  %v219 = vunpack.c.l.b16 %v40
  %v220 = vunpack.c.h.b16 %v40
  %v221 = vunpack.c.l.b16 %v41
  %v222 = vunpack.c.h.b16 %v41
  %v223 = vunpack.c.l.b16 %v42
  %v224 = vunpack.c.h.b16 %v42
  %v225 = vunpack.c.l.b16 %v43
  %v226 = vunpack.c.h.b16 %v43
  %v227 = vunpack.c.l.b16 %v44
  %v228 = vunpack.c.h.b16 %v44
  %v229 = vunpack.c.l.b16 %v45
  %v230 = vunpack.c.h.b16 %v45
  %v231 = vunpack.c.l.b16 %v46
  %v232 = vunpack.c.h.b16 %v46
  %v233 = vunpack.c.l.b16 %v47
  %v234 = vunpack.c.h.b16 %v47
  %v235 = vunpack.c.l.b16 %v48
  %v236 = vunpack.c.h.b16 %v48
  %v237 = vunpack.c.l.b16 %v49
  %v238 = vunpack.c.h.b16 %v49
  %v239 = vunpack.c.l.b16 %v50
  %v240 = vunpack.c.h.b16 %v50
  %v241 = vunpack.c.l.b16 %v51
  %v242 = vunpack.c.h.b16 %v51
  %v243 = vunpack.c.l.b16 %v52
  %v244 = vunpack.c.h.b16 %v52
  %v245 = vunpack.c.l.b16 %v53
  %v246 = vunpack.c.h.b16 %v53
  %v247 = vunpack.c.l.b16 %v54
  %v248 = vunpack.c.h.b16 %v54
  %v249 = vunpack.c.l.b16 %v55
  %v250 = vunpack.c.h.b16 %v55
  %v251 = vunpack.c.l.b16 %v56
  %v252 = vunpack.c.h.b16 %v56
  %v253 = vunpack.c.l.b16 %v57
  %v254 = vunpack.c.h.b16 %v57
  %v255 = vunpack.c.l.b16 %v58
  %v256 = vunpack.c.h.b16 %v58
  %v257 = vunpack.c.l.b16 %v59
  %v258 = vunpack.c.h.b16 %v59
  %v259 = vunpack.c.l.b16 %v60
  %v260 = vunpack.c.h.b16 %v60
  %v261 = vunpack.c.l.b16 %v61
  %v262 = vunpack.c.h.b16 %v61
  %v263 = vunpack.c.l.b16 %v62
  %v264 = vunpack.c.h.b16 %v62
  %v265 = vunpack.c.l.b16 %v63
  %v266 = vunpack.c.h.b16 %v63
  %v267 = vunpack.c.l.b16 %v64
  %v268 = vunpack.c.h.b16 %v64
  %v269 = vunpack.c.l.b16 %v65
  %v270 = vunpack.c.h.b16 %v65
  %v271 = vunpack.c.l.b16 %v66
  %v272 = vunpack.c.h.b16 %v66
  %v273 = vunpack.c.l.b16 %v67
  %v274 = vunpack.c.h.b16 %v67
  %v275 = vunpack.c.l.b16 %v68
  %v276 = vunpack.c.h.b16 %v68
  %v277 = vunpack.c.l.b16 %v69
  %v278 = vunpack.c.h.b16 %v69
  %v279 = vunpack.c.l.b16 %v70
  %v280 = vunpack.c.h.b16 %v70
  %v281 = vunpack.c.l.b16 %v71
  %v282 = vunpack.c.h.b16 %v71
  %v283 = vunpack.c.l.b16 %v72
  %v284 = vunpack.c.h.b16 %v72
  %v285 = vunpack.c.l.b16 %v73
  %v286 = vunpack.c.h.b16 %v73
  %v287 = vunpack.c.l.b16 %v74
  %v288 = vunpack.c.h.b16 %v74
  %v289 = vunpack.c.l.b16 %v75
  %v290 = vunpack.c.h.b16 %v75
  %v291 = vunpack.c.l.b16 %v76
  %v292 = vunpack.c.h.b16 %v76
  %v293 = vunpack.c.l.b16 %v77
  %v294 = vunpack.c.h.b16 %v77
  %v295 = vunpack.c.l.b16 %v78
  %v296 = vunpack.c.h.b16 %v78
  %v297 = vpack.c.b16 %v171, %v169
  %v298 = vpack.c.b16 %v172, %v170
  %v299 = vpack.c.b16 %v175, %v173
  %v300 = vpack.c.b16 %v176, %v174
  %v301 = vpack.c.b16 %v179, %v177
  %v302 = vpack.c.b16 %v180, %v178
  %v303 = vpack.c.b16 %v183, %v181
  %v304 = vpack.c.b16 %v184, %v182
  %v305 = vpack.c.b16 %v187, %v185
  %v306 = vpack.c.b16 %v188, %v186
  %v307 = vpack.c.b16 %v191, %v189
  %v308 = vpack.c.b16 %v192, %v190
  %v309 = vpack.c.b16 %v195, %v193
  %v310 = vpack.c.b16 %v196, %v194
  %v311 = vpack.c.b16 %v199, %v197
  %v312 = vpack.c.b16 %v200, %v198
  %v313 = vpack.c.b16 %v203, %v201
  %v314 = vpack.c.b16 %v204, %v202
  %v315 = vpack.c.b16 %v207, %v205
  %v316 = vpack.c.b16 %v208, %v206
  %v317 = vpack.c.b16 %v211, %v209
  %v318 = vpack.c.b16 %v212, %v210
  %v319 = vpack.c.b16 %v215, %v213
  %v320 = vpack.c.b16 %v216, %v214
  %v321 = vpack.c.b16 %v219, %v217
  %v322 = vpack.c.b16 %v220, %v218
  %v323 = vpack.c.b16 %v223, %v221
  %v324 = vpack.c.b16 %v224, %v222
  %v325 = vpack.c.b16 %v227, %v225
  %v326 = vpack.c.b16 %v228, %v226
  %v327 = vpack.c.b16 %v231, %v229
  %v328 = vpack.c.b16 %v232, %v230
  %v329 = vpack.c.b16 %v235, %v233
  %v330 = vpack.c.b16 %v236, %v234
  %v331 = vpack.c.b16 %v239, %v237
  %v332 = vpack.c.b16 %v240, %v238
  %v333 = vpack.c.b16 %v243, %v241
  %v334 = vpack.c.b16 %v244, %v242
  %v335 = vpack.c.b16 %v247, %v245
  %v336 = vpack.c.b16 %v248, %v246
  %v337 = vpack.c.b16 %v251, %v249
  %v338 = vpack.c.b16 %v252, %v250
  %v339 = vpack.c.b16 %v255, %v253
  %v340 = vpack.c.b16 %v256, %v254
  %v341 = vpack.c.b16 %v259, %v257
  %v342 = vpack.c.b16 %v260, %v258
  %v343 = vpack.c.b16 %v263, %v261
  %v344 = vpack.c.b16 %v264, %v262
  %v345 = vpack.c.b16 %v267, %v265
  %v346 = vpack.c.b16 %v268, %v266
  %v347 = vpack.c.b16 %v271, %v269
  %v348 = vpack.c.b16 %v272, %v270
  %v349 = vpack.c.b16 %v275, %v273
  %v350 = vpack.c.b16 %v276, %v274
  %v351 = vpack.c.b16 %v279, %v277
  %v352 = vpack.c.b16 %v280, %v278
  %v353 = vpack.c.b16 %v283, %v281
  %v354 = vpack.c.b16 %v284, %v282
  %v355 = vpack.c.b16 %v287, %v285
  %v356 = vpack.c.b16 %v288, %v286
  %v357 = vpack.c.b16 %v291, %v289
  %v358 = vpack.c.b16 %v292, %v290
  %v359 = vpack.c.b16 %v295, %v293
  %v360 = vpack.c.b16 %v296, %v294
  %v412 = vunpack.c.l.b16 %v79
  %v413 = vunpack.c.l.b16 %v80
  %v414 = vunpack.c.l.b16 %v81
  %v415 = vunpack.c.l.b16 %v82
  %v416 = vunpack.c.l.b16 %v83
  %v417 = vunpack.c.l.b16 %v84
  %v418 = vunpack.c.l.b16 %v85
  %v419 = vunpack.c.l.b16 %v86
  %v420 = vunpack.c.l.b16 %v87
  %v421 = vunpack.c.l.b16 %v88
  %v422 = vunpack.c.l.b16 %v89
  %v423 = vunpack.c.l.b16 %v90
  %v424 = vunpack.c.l.b16 %v91
  %v425 = vunpack.c.l.b16 %v92
  %v426 = vunpack.c.l.b16 %v93
  %v427 = vunpack.c.l.b16 %v94
  %v428 = vunpack.c.l.b16 %v95
  %v429 = vunpack.c.l.b16 %v96
  %v430 = vunpack.c.l.b16 %v97
  %v431 = vpack.c.b16 %v413, %v412
  %v432 = vpack.c.b16 %v415, %v414
  %v433 = vpack.c.b16 %v417, %v416
  %v434 = vpack.c.b16 %v419, %v418
  %v435 = vpack.c.b16 %v421, %v420
  %v436 = vpack.c.b16 %v423, %v422
  %v437 = vpack.c.b16 %v425, %v424
  %v438 = vpack.c.b16 %v427, %v426
  %v439 = vpack.c.b16 %v429, %v428
  %v440 = vpack.c.b16 %v430, %v430
  %vm450 = vcmask 154624
  %v452 = vsel %vm450, %v298, 0
  %v455 = vsel %vm450, %v300, 0
  %v458 = vsel %vm450, %v302, 0
  %v461 = vsel %vm450, %v304, 0
  %v464 = vsel %vm450, %v306, 0
  %v467 = vsel %vm450, %v308, 0
  %v470 = vsel %vm450, %v310, 0
  %v473 = vsel %vm450, %v312, 0
  %v476 = vsel %vm450, %v314, 0
  %v479 = vsel %vm450, %v316, 0
  %v482 = vsel %vm450, %v318, 0
  %v485 = vsel %vm450, %v320, 0
  %v488 = vsel %vm450, %v322, 0
  %v491 = vsel %vm450, %v324, 0
  %v494 = vsel %vm450, %v326, 0
  %v497 = vsel %vm450, %v328, 0
  %v500 = vsel %vm450, %v330, 0
  %v503 = vsel %vm450, %v332, 0
  %v506 = vsel %vm450, %v334, 0
  %v509 = vsel %vm450, %v336, 0
  %v512 = vsel %vm450, %v338, 0
  %v515 = vsel %vm450, %v340, 0
  %v518 = vsel %vm450, %v342, 0
  %v521 = vsel %vm450, %v344, 0
  %v524 = vsel %vm450, %v346, 0
  %v527 = vsel %vm450, %v348, 0
  %v530 = vsel %vm450, %v350, 0
  %v533 = vsel %vm450, %v352, 0
  %v536 = vsel %vm450, %v354, 0
  %v539 = vsel %vm450, %v356, 0
  %v542 = vsel %vm450, %v358, 0
  %v545 = vsel %vm450, %v360, 0
  %vm547 = vcmask 1040384
  %vm548 = vcmask 1041408
  %v549 = vsel %vm547, 4294967295, 65535
  %v550 = vsel %vm548, %v549, 0
  %v552 = vand.u32 %v440, %v550
  %554 = vmatprep.subr.bf16.mxu0 0
  %555 = vmatpush1.bf16.msra.mxu0 %v431
  %556 = vmatprep.subr.bf16.mxu0 0
  %557 = vmatpush1.bf16.msra.mxu0 %v432
  %558 = vmatprep.subr.bf16.mxu0 0
  %559 = vmatpush1.bf16.msra.mxu0 %v433
  %560 = vmatprep.subr.bf16.mxu0 0
  %561 = vmatpush1.bf16.msra.mxu0 %v434
  %562 = vmatprep.subr.bf16.mxu0 0
  %563 = vmatpush1.bf16.msra.mxu0 %v435
  %564 = vmatprep.subr.bf16.mxu0 0
  %565 = vmatpush1.bf16.msra.mxu0 %v436
  %566 = vmatprep.subr.bf16.mxu0 0
  %567 = vmatpush1.bf16.msra.mxu0 %v437
  %568 = vmatprep.subr.bf16.mxu0 0
  %569 = vmatpush1.bf16.msra.mxu0 %v438
  %570 = vmatprep.subr.bf16.mxu0 0
  %571 = vmatpush1.bf16.msra.mxu0 %v439
  %572 = vmatprep.subr.bf16.mxu0 0
  %573 = vmatpush1.bf16.msra.mxu0 %v552
  %574 = vmatprep.subr.bf16.mxu0 0
  %575 = vmatpush1.bf16.msra.mxu0 0
  %576 = vmatprep.subr.bf16.mxu0 0
  %577 = vmatpush1.bf16.msra.mxu0 0
  %578 = vmatprep.subr.bf16.mxu0 0
  %579 = vmatpush1.bf16.msra.mxu0 0
  %580 = vmatprep.subr.bf16.mxu0 0
  %581 = vmatpush1.bf16.msra.mxu0 0
  %582 = vmatprep.subr.bf16.mxu0 0
  %583 = vmatpush1.bf16.msra.mxu0 0
  %584 = vmatprep.subr.bf16.mxu0 0
  %585 = vmatpush1.bf16.msra.mxu0 0
  %586 = vmatprep.mubr.bf16.mxu0 %v452
  %587 = vmatmul.mubr.bf16.gmra.mrb[0].mxu0 %v297
  %v588 = vpop.f32.mrb[0].mxu0
  %v589 = vadd.f32 %v103, %v588
  %v590 = vpop.f32.mrb[0].mxu0
  %v591 = vpop.f32.mrb[0].mxu0
  %v592 = vadd.f32 %v103, %v591
  %v593 = vpop.f32.mrb[0].mxu0
  %594 = vmatprep.mubr.bf16.mxu0 %v455
  %595 = vmatmul.mubr.bf16.gmra.mrb[0].mxu0 %v299
  %v596 = vpop.f32.mrb[0].mxu0
  %v597 = vadd.f32 %v103, %v596
  %v598 = vpop.f32.mrb[0].mxu0
  %v599 = vpop.f32.mrb[0].mxu0
  %v600 = vadd.f32 %v103, %v599
  %v601 = vpop.f32.mrb[0].mxu0
  %602 = vmatprep.mubr.bf16.mxu0 %v458
  %603 = vmatmul.mubr.bf16.gmra.mrb[0].mxu0 %v301
  %v604 = vpop.f32.mrb[0].mxu0
  %v605 = vadd.f32 %v103, %v604
  %v606 = vpop.f32.mrb[0].mxu0
  %v607 = vpop.f32.mrb[0].mxu0
  %v608 = vadd.f32 %v103, %v607
  %v609 = vpop.f32.mrb[0].mxu0
  %610 = vmatprep.mubr.bf16.mxu0 %v461
  %611 = vmatmul.mubr.bf16.gmra.mrb[0].mxu0 %v303
  %v612 = vpop.f32.mrb[0].mxu0
  %v613 = vadd.f32 %v103, %v612
  %v614 = vpop.f32.mrb[0].mxu0
  %v615 = vpop.f32.mrb[0].mxu0
  %v616 = vadd.f32 %v103, %v615
  %v617 = vpop.f32.mrb[0].mxu0
  %618 = vmatprep.mubr.bf16.mxu0 %v464
  %619 = vmatmul.mubr.bf16.gmra.mrb[0].mxu0 %v305
  %v620 = vpop.f32.mrb[0].mxu0
  %v621 = vadd.f32 %v103, %v620
  %v622 = vpop.f32.mrb[0].mxu0
  %v623 = vpop.f32.mrb[0].mxu0
  %v624 = vadd.f32 %v103, %v623
  %v625 = vpop.f32.mrb[0].mxu0
  %626 = vmatprep.mubr.bf16.mxu0 %v467
  %627 = vmatmul.mubr.bf16.gmra.mrb[0].mxu0 %v307
  %v628 = vpop.f32.mrb[0].mxu0
  %v629 = vadd.f32 %v103, %v628
  %v630 = vpop.f32.mrb[0].mxu0
  %v631 = vpop.f32.mrb[0].mxu0
  %v632 = vadd.f32 %v103, %v631
  %v633 = vpop.f32.mrb[0].mxu0
  %634 = vmatprep.mubr.bf16.mxu0 %v470
  %635 = vmatmul.mubr.bf16.gmra.mrb[0].mxu0 %v309
  %v636 = vpop.f32.mrb[0].mxu0
  %v637 = vadd.f32 %v103, %v636
  %v638 = vpop.f32.mrb[0].mxu0
  %v639 = vpop.f32.mrb[0].mxu0
  %v640 = vadd.f32 %v103, %v639
  %v641 = vpop.f32.mrb[0].mxu0
  %642 = vmatprep.mubr.bf16.mxu0 %v473
  %643 = vmatmul.mubr.bf16.gmra.mrb[0].mxu0 %v311
  %v644 = vpop.f32.mrb[0].mxu0
  %v645 = vadd.f32 %v103, %v644
  %v646 = vpop.f32.mrb[0].mxu0
  %v647 = vpop.f32.mrb[0].mxu0
  %v648 = vadd.f32 %v103, %v647
  %v649 = vpop.f32.mrb[0].mxu0
  %650 = vmatprep.mubr.bf16.mxu0 %v476
  %651 = vmatmul.mubr.bf16.gmra.mrb[0].mxu0 %v313
  %v652 = vpop.f32.mrb[0].mxu0
  %v653 = vadd.f32 %v103, %v652
  %v654 = vpop.f32.mrb[0].mxu0
  %v655 = vpop.f32.mrb[0].mxu0
  %v656 = vadd.f32 %v103, %v655
  %v657 = vpop.f32.mrb[0].mxu0
  %658 = vmatprep.mubr.bf16.mxu0 %v479
  %659 = vmatmul.mubr.bf16.gmra.mrb[0].mxu0 %v315
  %v660 = vpop.f32.mrb[0].mxu0
  %v661 = vadd.f32 %v103, %v660
  %v662 = vpop.f32.mrb[0].mxu0
  %v663 = vpop.f32.mrb[0].mxu0
  %v664 = vadd.f32 %v103, %v663
  %v665 = vpop.f32.mrb[0].mxu0
  %666 = vmatprep.mubr.bf16.mxu0 %v482
  %667 = vmatmul.mubr.bf16.gmra.mrb[0].mxu0 %v317
  %v668 = vpop.f32.mrb[0].mxu0
  %v669 = vadd.f32 %v103, %v668
  %v670 = vpop.f32.mrb[0].mxu0
  %v671 = vpop.f32.mrb[0].mxu0
  %v672 = vadd.f32 %v103, %v671
  %v673 = vpop.f32.mrb[0].mxu0
  %674 = vmatprep.mubr.bf16.mxu0 %v485
  %675 = vmatmul.mubr.bf16.gmra.mrb[0].mxu0 %v319
  %v676 = vpop.f32.mrb[0].mxu0
  %v677 = vadd.f32 %v103, %v676
  %v678 = vpop.f32.mrb[0].mxu0
  %v679 = vpop.f32.mrb[0].mxu0
  %v680 = vadd.f32 %v103, %v679
  %v681 = vpop.f32.mrb[0].mxu0
  %682 = vmatprep.mubr.bf16.mxu0 %v488
  %683 = vmatmul.mubr.bf16.gmra.mrb[0].mxu0 %v321
  %v684 = vpop.f32.mrb[0].mxu0
  %v685 = vadd.f32 %v103, %v684
  %v686 = vpop.f32.mrb[0].mxu0
  %v687 = vpop.f32.mrb[0].mxu0
  %v688 = vadd.f32 %v103, %v687
  %v689 = vpop.f32.mrb[0].mxu0
  %690 = vmatprep.mubr.bf16.mxu0 %v491
  %691 = vmatmul.mubr.bf16.gmra.mrb[0].mxu0 %v323
  %v692 = vpop.f32.mrb[0].mxu0
  %v693 = vadd.f32 %v103, %v692
  %v694 = vpop.f32.mrb[0].mxu0
  %v695 = vpop.f32.mrb[0].mxu0
  %v696 = vadd.f32 %v103, %v695
  %v697 = vpop.f32.mrb[0].mxu0
  %698 = vmatprep.mubr.bf16.mxu0 %v494
  %699 = vmatmul.mubr.bf16.gmra.mrb[0].mxu0 %v325
  %v700 = vpop.f32.mrb[0].mxu0
  %v701 = vadd.f32 %v103, %v700
  %v702 = vpop.f32.mrb[0].mxu0
  %v703 = vpop.f32.mrb[0].mxu0
  %v704 = vadd.f32 %v103, %v703
  %v705 = vpop.f32.mrb[0].mxu0
  %706 = vmatprep.mubr.bf16.mxu0 %v497
  %707 = vmatmul.mubr.bf16.gmra.mrb[0].mxu0 %v327
  %v708 = vpop.f32.mrb[0].mxu0
  %v709 = vadd.f32 %v103, %v708
  %v710 = vpop.f32.mrb[0].mxu0
  %v711 = vpop.f32.mrb[0].mxu0
  %v712 = vadd.f32 %v103, %v711
  %v713 = vpop.f32.mrb[0].mxu0
  %714 = vmatprep.mubr.bf16.mxu0 %v500
  %715 = vmatmul.mubr.bf16.gmra.mrb[0].mxu0 %v329
  %v716 = vpop.f32.mrb[0].mxu0
  %v717 = vadd.f32 %v103, %v716
  %v718 = vpop.f32.mrb[0].mxu0
  %v719 = vpop.f32.mrb[0].mxu0
  %v720 = vadd.f32 %v103, %v719
  %v721 = vpop.f32.mrb[0].mxu0
  %722 = vmatprep.mubr.bf16.mxu0 %v503
  %723 = vmatmul.mubr.bf16.gmra.mrb[0].mxu0 %v331
  %v724 = vpop.f32.mrb[0].mxu0
  %v725 = vadd.f32 %v103, %v724
  %v726 = vpop.f32.mrb[0].mxu0
  %v727 = vpop.f32.mrb[0].mxu0
  %v728 = vadd.f32 %v103, %v727
  %v729 = vpop.f32.mrb[0].mxu0
  %730 = vmatprep.mubr.bf16.mxu0 %v506
  %731 = vmatmul.mubr.bf16.gmra.mrb[0].mxu0 %v333
  %v732 = vpop.f32.mrb[0].mxu0
  %v733 = vadd.f32 %v103, %v732
  %v734 = vpop.f32.mrb[0].mxu0
  %v735 = vpop.f32.mrb[0].mxu0
  %v736 = vadd.f32 %v103, %v735
  %v737 = vpop.f32.mrb[0].mxu0
  %738 = vmatprep.mubr.bf16.mxu0 %v509
  %739 = vmatmul.mubr.bf16.gmra.mrb[0].mxu0 %v335
  %v740 = vpop.f32.mrb[0].mxu0
  %v741 = vadd.f32 %v103, %v740
  %v742 = vpop.f32.mrb[0].mxu0
  %v743 = vpop.f32.mrb[0].mxu0
  %v744 = vadd.f32 %v103, %v743
  %v745 = vpop.f32.mrb[0].mxu0
  %746 = vmatprep.mubr.bf16.mxu0 %v512
  %747 = vmatmul.mubr.bf16.gmra.mrb[0].mxu0 %v337
  %v748 = vpop.f32.mrb[0].mxu0
  %v749 = vadd.f32 %v103, %v748
  %v750 = vpop.f32.mrb[0].mxu0
  %v751 = vpop.f32.mrb[0].mxu0
  %v752 = vadd.f32 %v103, %v751
  %v753 = vpop.f32.mrb[0].mxu0
  %754 = vmatprep.mubr.bf16.mxu0 %v515
  %755 = vmatmul.mubr.bf16.gmra.mrb[0].mxu0 %v339
  %v756 = vpop.f32.mrb[0].mxu0
  %v757 = vadd.f32 %v103, %v756
  %v758 = vpop.f32.mrb[0].mxu0
  %v759 = vpop.f32.mrb[0].mxu0
  %v760 = vadd.f32 %v103, %v759
  %v761 = vpop.f32.mrb[0].mxu0
  %762 = vmatprep.mubr.bf16.mxu0 %v518
  %763 = vmatmul.mubr.bf16.gmra.mrb[0].mxu0 %v341
  %v764 = vpop.f32.mrb[0].mxu0
  %v765 = vadd.f32 %v103, %v764
  %v766 = vpop.f32.mrb[0].mxu0
  %v767 = vpop.f32.mrb[0].mxu0
  %v768 = vadd.f32 %v103, %v767
  %v769 = vpop.f32.mrb[0].mxu0
  %770 = vmatprep.mubr.bf16.mxu0 %v521
  %771 = vmatmul.mubr.bf16.gmra.mrb[0].mxu0 %v343
  %v772 = vpop.f32.mrb[0].mxu0
  %v773 = vadd.f32 %v103, %v772
  %v774 = vpop.f32.mrb[0].mxu0
  %v775 = vpop.f32.mrb[0].mxu0
  %v776 = vadd.f32 %v103, %v775
  %v777 = vpop.f32.mrb[0].mxu0
  %778 = vmatprep.mubr.bf16.mxu0 %v524
  %779 = vmatmul.mubr.bf16.gmra.mrb[0].mxu0 %v345
  %v780 = vpop.f32.mrb[0].mxu0
  %v781 = vadd.f32 %v103, %v780
  %v782 = vpop.f32.mrb[0].mxu0
  %v783 = vpop.f32.mrb[0].mxu0
  %v784 = vadd.f32 %v103, %v783
  %v785 = vpop.f32.mrb[0].mxu0
  %786 = vmatprep.mubr.bf16.mxu0 %v527
  %787 = vmatmul.mubr.bf16.gmra.mrb[0].mxu0 %v347
  %v788 = vpop.f32.mrb[0].mxu0
  %v789 = vadd.f32 %v103, %v788
  %v790 = vpop.f32.mrb[0].mxu0
  %v791 = vpop.f32.mrb[0].mxu0
  %v792 = vadd.f32 %v103, %v791
  %v793 = vpop.f32.mrb[0].mxu0
  %794 = vmatprep.mubr.bf16.mxu0 %v530
  %795 = vmatmul.mubr.bf16.gmra.mrb[0].mxu0 %v349
  %v796 = vpop.f32.mrb[0].mxu0
  %v797 = vadd.f32 %v103, %v796
  %v798 = vpop.f32.mrb[0].mxu0
  %v799 = vpop.f32.mrb[0].mxu0
  %v800 = vadd.f32 %v103, %v799
  %v801 = vpop.f32.mrb[0].mxu0
  %802 = vmatprep.mubr.bf16.mxu0 %v533
  %803 = vmatmul.mubr.bf16.gmra.mrb[0].mxu0 %v351
  %v804 = vpop.f32.mrb[0].mxu0
  %v805 = vadd.f32 %v103, %v804
  %v806 = vpop.f32.mrb[0].mxu0
  %v807 = vpop.f32.mrb[0].mxu0
  %v808 = vadd.f32 %v103, %v807
  %v809 = vpop.f32.mrb[0].mxu0
  %810 = vmatprep.mubr.bf16.mxu0 %v536
  %811 = vmatmul.mubr.bf16.gmra.mrb[0].mxu0 %v353
  %v812 = vpop.f32.mrb[0].mxu0
  %v813 = vadd.f32 %v103, %v812
  %v814 = vpop.f32.mrb[0].mxu0
  %v815 = vpop.f32.mrb[0].mxu0
  %v816 = vadd.f32 %v103, %v815
  %v817 = vpop.f32.mrb[0].mxu0
  %818 = vmatprep.mubr.bf16.mxu0 %v539
  %819 = vmatmul.mubr.bf16.gmra.mrb[0].mxu0 %v355
  %v820 = vpop.f32.mrb[0].mxu0
  %v821 = vadd.f32 %v103, %v820
  %v822 = vpop.f32.mrb[0].mxu0
  %v823 = vpop.f32.mrb[0].mxu0
  %v824 = vadd.f32 %v103, %v823
  %v825 = vpop.f32.mrb[0].mxu0
  %826 = vmatprep.mubr.bf16.mxu0 %v542
  %827 = vmatmul.mubr.bf16.gmra.mrb[0].mxu0 %v357
  %v828 = vpop.f32.mrb[0].mxu0
  %v829 = vadd.f32 %v103, %v828
  %v830 = vpop.f32.mrb[0].mxu0
  %v831 = vpop.f32.mrb[0].mxu0
  %v832 = vadd.f32 %v103, %v831
  %v833 = vpop.f32.mrb[0].mxu0
  %834 = vmatprep.mubr.bf16.mxu0 %v545
  %835 = vmatmul.mubr.bf16.gmra.mrb[0].mxu0 %v359
  %v836 = vpop.f32.mrb[0].mxu0
  %v837 = vadd.f32 %v103, %v836
  %v838 = vpop.f32.mrb[0].mxu0
  %v839 = vpop.f32.mrb[0].mxu0
  %v840 = vadd.f32 %v103, %v839
  %v841 = vpop.f32.mrb[0].mxu0
  %842 = vdwg.mxu0
  %v843 = vmax.f32 %v589, 0.0
  %v844 = vmax.f32 %v592, 0.0
  %v845 = vmax.f32 %v597, 0.0
  %v846 = vmax.f32 %v600, 0.0
  %v847 = vmax.f32 %v605, 0.0
  %v848 = vmax.f32 %v608, 0.0
  %v849 = vmax.f32 %v613, 0.0
  %v850 = vmax.f32 %v616, 0.0
  %v851 = vmax.f32 %v621, 0.0
  %v852 = vmax.f32 %v624, 0.0
  %v853 = vmax.f32 %v629, 0.0
  %v854 = vmax.f32 %v632, 0.0
  %v855 = vmax.f32 %v637, 0.0
  %v856 = vmax.f32 %v640, 0.0
  %v857 = vmax.f32 %v645, 0.0
  %v858 = vmax.f32 %v648, 0.0
  %v859 = vmax.f32 %v653, 0.0
  %v860 = vmax.f32 %v656, 0.0
  %v861 = vmax.f32 %v661, 0.0
  %v862 = vmax.f32 %v664, 0.0
  %v863 = vmax.f32 %v669, 0.0
  %v864 = vmax.f32 %v672, 0.0
  %v865 = vmax.f32 %v677, 0.0
  %v866 = vmax.f32 %v680, 0.0
  %v867 = vmax.f32 %v685, 0.0
  %v868 = vmax.f32 %v688, 0.0
  %v869 = vmax.f32 %v693, 0.0
  %v870 = vmax.f32 %v696, 0.0
  %v871 = vmax.f32 %v701, 0.0
  %v872 = vmax.f32 %v704, 0.0
  %v873 = vmax.f32 %v709, 0.0
  %v874 = vmax.f32 %v712, 0.0
  %v875 = vmax.f32 %v717, 0.0
  %v876 = vmax.f32 %v720, 0.0
  %v877 = vmax.f32 %v725, 0.0
  %v878 = vmax.f32 %v728, 0.0
  %v879 = vmax.f32 %v733, 0.0
  %v880 = vmax.f32 %v736, 0.0
  %v881 = vmax.f32 %v741, 0.0
  %v882 = vmax.f32 %v744, 0.0
  %v883 = vmax.f32 %v749, 0.0
  %v884 = vmax.f32 %v752, 0.0
  %v885 = vmax.f32 %v757, 0.0
  %v886 = vmax.f32 %v760, 0.0
  %v887 = vmax.f32 %v765, 0.0
  %v888 = vmax.f32 %v768, 0.0
  %v889 = vmax.f32 %v773, 0.0
  %v890 = vmax.f32 %v776, 0.0
  %v891 = vmax.f32 %v781, 0.0
  %v892 = vmax.f32 %v784, 0.0
  %v893 = vmax.f32 %v789, 0.0
  %v894 = vmax.f32 %v792, 0.0
  %v895 = vmax.f32 %v797, 0.0
  %v896 = vmax.f32 %v800, 0.0
  %v897 = vmax.f32 %v805, 0.0
  %v898 = vmax.f32 %v808, 0.0
  %v899 = vmax.f32 %v813, 0.0
  %v900 = vmax.f32 %v816, 0.0
  %v901 = vmax.f32 %v821, 0.0
  %v902 = vmax.f32 %v824, 0.0
  %v903 = vmax.f32 %v829, 0.0
  %v904 = vmax.f32 %v832, 0.0
  %v905 = vmax.f32 %v837, 0.0
  %v906 = vmax.f32 %v840, 0.0
  %v907 = vpack.c.bf16 %v844, %v843
  %v908 = vpack.c.bf16 %v846, %v845
  %v909 = vpack.c.bf16 %v848, %v847
  %v910 = vpack.c.bf16 %v850, %v849
  %v911 = vpack.c.bf16 %v852, %v851
  %v912 = vpack.c.bf16 %v854, %v853
  %v913 = vpack.c.bf16 %v856, %v855
  %v914 = vpack.c.bf16 %v858, %v857
  %v915 = vpack.c.bf16 %v860, %v859
  %v916 = vpack.c.bf16 %v862, %v861
  %v917 = vpack.c.bf16 %v864, %v863
  %v918 = vpack.c.bf16 %v866, %v865
  %v919 = vpack.c.bf16 %v868, %v867
  %v920 = vpack.c.bf16 %v870, %v869
  %v921 = vpack.c.bf16 %v872, %v871
  %v922 = vpack.c.bf16 %v874, %v873
  %v923 = vpack.c.bf16 %v876, %v875
  %v924 = vpack.c.bf16 %v878, %v877
  %v925 = vpack.c.bf16 %v880, %v879
  %v926 = vpack.c.bf16 %v882, %v881
  %v927 = vpack.c.bf16 %v884, %v883
  %v928 = vpack.c.bf16 %v886, %v885
  %v929 = vpack.c.bf16 %v888, %v887
  %v930 = vpack.c.bf16 %v890, %v889
  %v931 = vpack.c.bf16 %v892, %v891
  %v932 = vpack.c.bf16 %v894, %v893
  %v933 = vpack.c.bf16 %v896, %v895
  %v934 = vpack.c.bf16 %v898, %v897
  %v935 = vpack.c.bf16 %v900, %v899
  %v936 = vpack.c.bf16 %v902, %v901
  %v937 = vpack.c.bf16 %v904, %v903
  %v938 = vpack.c.bf16 %v906, %v905
  %v971 = vunpack.c.l.b16 %v907
  %v972 = vunpack.c.h.b16 %v907
  %v973 = vunpack.c.l.b16 %v908
  %v974 = vunpack.c.h.b16 %v908
  %v975 = vunpack.c.l.b16 %v909
  %v976 = vunpack.c.h.b16 %v909
  %v977 = vunpack.c.l.b16 %v910
  %v978 = vunpack.c.h.b16 %v910
  %v979 = vunpack.c.l.b16 %v911
  %v980 = vunpack.c.h.b16 %v911
  %v981 = vunpack.c.l.b16 %v912
  %v982 = vunpack.c.h.b16 %v912
  %v983 = vunpack.c.l.b16 %v913
  %v984 = vunpack.c.h.b16 %v913
  %v985 = vunpack.c.l.b16 %v914
  %v986 = vunpack.c.h.b16 %v914
  %v987 = vunpack.c.l.b16 %v915
  %v988 = vunpack.c.h.b16 %v915
  %v989 = vunpack.c.l.b16 %v916
  %v990 = vunpack.c.h.b16 %v916
  %v991 = vunpack.c.l.b16 %v917
  %v992 = vunpack.c.h.b16 %v917
  %v993 = vunpack.c.l.b16 %v918
  %v994 = vunpack.c.h.b16 %v918
  %v995 = vunpack.c.l.b16 %v919
  %v996 = vunpack.c.h.b16 %v919
  %v997 = vunpack.c.l.b16 %v920
  %v998 = vunpack.c.h.b16 %v920
  %v999 = vunpack.c.l.b16 %v921
  %v1000 = vunpack.c.h.b16 %v921
  %v1001 = vunpack.c.l.b16 %v922
  %v1002 = vunpack.c.h.b16 %v922
  %v1003 = vunpack.c.l.b16 %v923
  %v1004 = vunpack.c.h.b16 %v923
  %v1005 = vunpack.c.l.b16 %v924
  %v1006 = vunpack.c.h.b16 %v924
  %v1007 = vunpack.c.l.b16 %v925
  %v1008 = vunpack.c.h.b16 %v925
  %v1009 = vunpack.c.l.b16 %v926
  %v1010 = vunpack.c.h.b16 %v926
  %v1011 = vunpack.c.l.b16 %v927
  %v1012 = vunpack.c.h.b16 %v927
  %v1013 = vunpack.c.l.b16 %v928
  %v1014 = vunpack.c.h.b16 %v928
  %v1015 = vunpack.c.l.b16 %v929
  %v1016 = vunpack.c.h.b16 %v929
  %v1017 = vunpack.c.l.b16 %v930
  %v1018 = vunpack.c.h.b16 %v930
  %v1019 = vunpack.c.l.b16 %v931
  %v1020 = vunpack.c.h.b16 %v931
  %v1021 = vunpack.c.l.b16 %v932
  %v1022 = vunpack.c.h.b16 %v932
  %v1023 = vunpack.c.l.b16 %v933
  %v1024 = vunpack.c.h.b16 %v933
  %v1025 = vunpack.c.l.b16 %v934
  %v1026 = vunpack.c.h.b16 %v934
  %v1027 = vunpack.c.l.b16 %v935
  %v1028 = vunpack.c.h.b16 %v935
  %v1029 = vunpack.c.l.b16 %v936
  %v1030 = vunpack.c.h.b16 %v936
  %v1031 = vunpack.c.l.b16 %v937
  %v1032 = vunpack.c.h.b16 %v937
  %v1033 = vunpack.c.l.b16 %v938
  %v1034 = vunpack.c.h.b16 %v938
  %v1035 = vpack.c.b16 %v971, %v971
  %v1036 = vpack.c.b16 %v972, %v972
  %v1037 = vpack.c.b16 %v973, %v973
  %v1038 = vpack.c.b16 %v974, %v974
  %v1039 = vpack.c.b16 %v975, %v975
  %v1040 = vpack.c.b16 %v976, %v976
  %v1041 = vpack.c.b16 %v977, %v977
  %v1042 = vpack.c.b16 %v978, %v978
  %v1043 = vpack.c.b16 %v979, %v979
  %v1044 = vpack.c.b16 %v980, %v980
  %v1045 = vpack.c.b16 %v981, %v981
  %v1046 = vpack.c.b16 %v982, %v982
  %v1047 = vpack.c.b16 %v983, %v983
  %v1048 = vpack.c.b16 %v984, %v984
  %v1049 = vpack.c.b16 %v985, %v985
  %v1050 = vpack.c.b16 %v986, %v986
  %v1051 = vpack.c.b16 %v987, %v987
  %v1052 = vpack.c.b16 %v988, %v988
  %v1053 = vpack.c.b16 %v989, %v989
  %v1054 = vpack.c.b16 %v990, %v990
  %v1055 = vpack.c.b16 %v991, %v991
  %v1056 = vpack.c.b16 %v992, %v992
  %v1057 = vpack.c.b16 %v993, %v993
  %v1058 = vpack.c.b16 %v994, %v994
  %v1059 = vpack.c.b16 %v995, %v995
  %v1060 = vpack.c.b16 %v996, %v996
  %v1061 = vpack.c.b16 %v997, %v997
  %v1062 = vpack.c.b16 %v998, %v998
  %v1063 = vpack.c.b16 %v999, %v999
  %v1064 = vpack.c.b16 %v1000, %v1000
  %v1065 = vpack.c.b16 %v1001, %v1001
  %v1066 = vpack.c.b16 %v1002, %v1002
  %v1067 = vpack.c.b16 %v1003, %v1003
  %v1068 = vpack.c.b16 %v1004, %v1004
  %v1069 = vpack.c.b16 %v1005, %v1005
  %v1070 = vpack.c.b16 %v1006, %v1006
  %v1071 = vpack.c.b16 %v1007, %v1007
  %v1072 = vpack.c.b16 %v1008, %v1008
  %v1073 = vpack.c.b16 %v1009, %v1009
  %v1074 = vpack.c.b16 %v1010, %v1010
  %v1075 = vpack.c.b16 %v1011, %v1011
  %v1076 = vpack.c.b16 %v1012, %v1012
  %v1077 = vpack.c.b16 %v1013, %v1013
  %v1078 = vpack.c.b16 %v1014, %v1014
  %v1079 = vpack.c.b16 %v1015, %v1015
  %v1080 = vpack.c.b16 %v1016, %v1016
  %v1081 = vpack.c.b16 %v1017, %v1017
  %v1082 = vpack.c.b16 %v1018, %v1018
  %v1083 = vpack.c.b16 %v1019, %v1019
  %v1084 = vpack.c.b16 %v1020, %v1020
  %v1085 = vpack.c.b16 %v1021, %v1021
  %v1086 = vpack.c.b16 %v1022, %v1022
  %v1087 = vpack.c.b16 %v1023, %v1023
  %v1088 = vpack.c.b16 %v1024, %v1024
  %v1089 = vpack.c.b16 %v1025, %v1025
  %v1090 = vpack.c.b16 %v1026, %v1026
  %v1091 = vpack.c.b16 %v1027, %v1027
  %v1092 = vpack.c.b16 %v1028, %v1028
  %v1093 = vpack.c.b16 %v1029, %v1029
  %v1094 = vpack.c.b16 %v1030, %v1030
  %v1095 = vpack.c.b16 %v1031, %v1031
  %v1096 = vpack.c.b16 %v1032, %v1032
  %v1097 = vpack.c.b16 %v1033, %v1033
  %v1098 = vpack.c.b16 %v1034, %v1034
  %vm1163 = vcmask 125952
  %1164 = vst.msk [vmem:[%s3] sm:$0xf] %vm1163, %v1035
  %1165 = vst.msk [vmem:[%s3 + $0x4] sm:$0xf] %vm1163, %v1036
  %1166 = vst.msk [vmem:[%s3 + $0x8] sm:$0xf] %vm1163, %v1037
  %1167 = vst.msk [vmem:[%s3 + $0xc] sm:$0xf] %vm1163, %v1038
  %1168 = vst.msk [vmem:[%s3 + $0x10] sm:$0xf] %vm1163, %v1039
  %1169 = vst.msk [vmem:[%s3 + $0x14] sm:$0xf] %vm1163, %v1040
  %1170 = vst.msk [vmem:[%s3 + $0x18] sm:$0xf] %vm1163, %v1041
  %1171 = vst.msk [vmem:[%s3 + $0x1c] sm:$0xf] %vm1163, %v1042
  %1172 = vst.msk [vmem:[%s3 + $0x20] sm:$0xf] %vm1163, %v1043
  %1173 = vst.msk [vmem:[%s3 + $0x24] sm:$0xf] %vm1163, %v1044
  %1174 = vst.msk [vmem:[%s3 + $0x28] sm:$0xf] %vm1163, %v1045
  %1175 = vst.msk [vmem:[%s3 + $0x2c] sm:$0xf] %vm1163, %v1046
  %1176 = vst.msk [vmem:[%s3 + $0x30] sm:$0xf] %vm1163, %v1047
  %1177 = vst.msk [vmem:[%s3 + $0x34] sm:$0xf] %vm1163, %v1048
  %1178 = vst.msk [vmem:[%s3 + $0x38] sm:$0xf] %vm1163, %v1049
  %1179 = vst.msk [vmem:[%s3 + $0x3c] sm:$0xf] %vm1163, %v1050
  %1180 = vst.msk [vmem:[%s3 + $0x40] sm:$0xf] %vm1163, %v1051
  %1181 = vst.msk [vmem:[%s3 + $0x44] sm:$0xf] %vm1163, %v1052
  %1182 = vst.msk [vmem:[%s3 + $0x48] sm:$0xf] %vm1163, %v1053
  %1183 = vst.msk [vmem:[%s3 + $0x4c] sm:$0xf] %vm1163, %v1054
  %1184 = vst.msk [vmem:[%s3 + $0x50] sm:$0xf] %vm1163, %v1055
  %1185 = vst.msk [vmem:[%s3 + $0x54] sm:$0xf] %vm1163, %v1056
  %1186 = vst.msk [vmem:[%s3 + $0x58] sm:$0xf] %vm1163, %v1057
  %1187 = vst.msk [vmem:[%s3 + $0x5c] sm:$0xf] %vm1163, %v1058
  %1188 = vst.msk [vmem:[%s3 + $0x60] sm:$0xf] %vm1163, %v1059
  %1189 = vst.msk [vmem:[%s3 + $0x64] sm:$0xf] %vm1163, %v1060
  %1190 = vst.msk [vmem:[%s3 + $0x68] sm:$0xf] %vm1163, %v1061
  %1191 = vst.msk [vmem:[%s3 + $0x6c] sm:$0xf] %vm1163, %v1062
  %1192 = vst.msk [vmem:[%s3 + $0x70] sm:$0xf] %vm1163, %v1063
  %1193 = vst.msk [vmem:[%s3 + $0x74] sm:$0xf] %vm1163, %v1064
  %1194 = vst.msk [vmem:[%s3 + $0x78] sm:$0xf] %vm1163, %v1065
  %1195 = vst.msk [vmem:[%s3 + $0x7c] sm:$0xf] %vm1163, %v1066
  %1196 = vst.msk [vmem:[%s3 + $0x80] sm:$0xf] %vm1163, %v1067
  %1197 = vst.msk [vmem:[%s3 + $0x84] sm:$0xf] %vm1163, %v1068
  %1198 = vst.msk [vmem:[%s3 + $0x88] sm:$0xf] %vm1163, %v1069
  %1199 = vst.msk [vmem:[%s3 + $0x8c] sm:$0xf] %vm1163, %v1070
  %1200 = vst.msk [vmem:[%s3 + $0x90] sm:$0xf] %vm1163, %v1071
  %1201 = vst.msk [vmem:[%s3 + $0x94] sm:$0xf] %vm1163, %v1072
  %1202 = vst.msk [vmem:[%s3 + $0x98] sm:$0xf] %vm1163, %v1073
  %1203 = vst.msk [vmem:[%s3 + $0x9c] sm:$0xf] %vm1163, %v1074
  %1204 = vst.msk [vmem:[%s3 + $0xa0] sm:$0xf] %vm1163, %v1075
  %1205 = vst.msk [vmem:[%s3 + $0xa4] sm:$0xf] %vm1163, %v1076
  %1206 = vst.msk [vmem:[%s3 + $0xa8] sm:$0xf] %vm1163, %v1077
  %1207 = vst.msk [vmem:[%s3 + $0xac] sm:$0xf] %vm1163, %v1078
  %1208 = vst.msk [vmem:[%s3 + $0xb0] sm:$0xf] %vm1163, %v1079
  %1209 = vst.msk [vmem:[%s3 + $0xb4] sm:$0xf] %vm1163, %v1080
  %1210 = vst.msk [vmem:[%s3 + $0xb8] sm:$0xf] %vm1163, %v1081
  %1211 = vst.msk [vmem:[%s3 + $0xbc] sm:$0xf] %vm1163, %v1082
  %1212 = vst.msk [vmem:[%s3 + $0xc0] sm:$0xf] %vm1163, %v1083
  %1213 = vst.msk [vmem:[%s3 + $0xc4] sm:$0xf] %vm1163, %v1084
  %1214 = vst.msk [vmem:[%s3 + $0xc8] sm:$0xf] %vm1163, %v1085
  %1215 = vst.msk [vmem:[%s3 + $0xcc] sm:$0xf] %vm1163, %v1086
  %1216 = vst.msk [vmem:[%s3 + $0xd0] sm:$0xf] %vm1163, %v1087
  %1217 = vst.msk [vmem:[%s3 + $0xd4] sm:$0xf] %vm1163, %v1088
  %1218 = vst.msk [vmem:[%s3 + $0xd8] sm:$0xf] %vm1163, %v1089
  %1219 = vst.msk [vmem:[%s3 + $0xdc] sm:$0xf] %vm1163, %v1090
  %1220 = vst.msk [vmem:[%s3 + $0xe0] sm:$0xf] %vm1163, %v1091
  %1221 = vst.msk [vmem:[%s3 + $0xe4] sm:$0xf] %vm1163, %v1092
  %1222 = vst.msk [vmem:[%s3 + $0xe8] sm:$0xf] %vm1163, %v1093
  %1223 = vst.msk [vmem:[%s3 + $0xec] sm:$0xf] %vm1163, %v1094
  %1224 = vst.msk [vmem:[%s3 + $0xf0] sm:$0xf] %vm1163, %v1095
  %1225 = vst.msk [vmem:[%s3 + $0xf4] sm:$0xf] %vm1163, %v1096
  %1226 = vst.msk [vmem:[%s3 + $0xf8] sm:$0xf] %vm1163, %v1097
  %1227 = vst.msk [vmem:[%s3 + $0xfc] sm:$0xf] %vm1163, %v1098
  // Predicated region
  $region14: #{_lambda_.13} parent=0 // pred_check
    _
  $region15: #{_lambda_.13} parent=0 // pred_check_branch
    %1229 = sbr.rel (0) target = $region17
  $region16: #{_lambda_.13} parent=0 // pred_region
    _
  $region17: #{_lambda_.13} parent=0 // pred_fallthru
    _
  // Predicated region
  $region18: #{_lambda_.13} parent=0 // pred_check
    _
  $region19: #{_lambda_.13} parent=0 // pred_check_branch
    %1231 = sbr.rel (0) target = $region21
  $region20: #{_lambda_.13} parent=0 // pred_region
    _
  $region21: #{_lambda_.13} parent=0 // pred_fallthru
    _

// kernel: _lambda_.15
$region0: #{_lambda_.15}
  #allocation0 [shape = 'u32[]', space=smem, size = 0x4, offset = 0x4, fixed_abs, tag = 'smem constant byte address 0x4 - core index']
  #allocation1 [shape = 'u32[144,128]{1,0:T(1,128)}', space=vmem, size = 0x12000, scoped, tag = 'internal scratch']
  %s0 = inlined_call_operand.vmem [shape: bf16[128,144], index: 0, kind: input, shape index: {}]
  %s1 = inlined_call_operand.vmem [shape: bf16[144,16], index: 1, kind: input, shape index: {}]
  %s2 = inlined_call_operand.vmem [shape: f32[1,16], index: 2, kind: input, shape index: {}]
  %s3 = inlined_call_operand.vmem [shape: bf16[128,16], index: 3, kind: input, shape index: {}]
  %s4 = inlined_call_operand.vmem [shape: bf16[128,16], index: 4, kind: output, shape index: {}]
  %s5 = sld [smem:[#allocation0]]
  $region26: #{_lambda_.15} parent=0
    _
  %s7 = ssub.s32 1, %s5
  %s8 = scalar_select 0, %s7, %s5
  // Predicated region
  $region2: #{_lambda_.15} parent=0 // pred_check
    _
  $region3: #{_lambda_.15} parent=0 // pred_check_branch
    %10 = sbr.rel (0) target = $region5
  $region4: #{_lambda_.15} parent=0 // pred_region
    _
  $region5: #{_lambda_.15} parent=0 // pred_fallthru
    _
  // Predicated region
  $region6: #{_lambda_.15} parent=0 // pred_check
    _
  $region7: #{_lambda_.15} parent=0 // pred_check_branch
    %12 = sbr.rel (0) target = $region9
  $region8: #{_lambda_.15} parent=0 // pred_region
    _
  $region9: #{_lambda_.15} parent=0 // pred_fallthru
    _
  // Predicated region
  $region10: #{_lambda_.15} parent=0 // pred_check
    _
  $region11: #{_lambda_.15} parent=0 // pred_check_branch
    %14 = sbr.rel (0) target = $region13
  $region12: #{_lambda_.15} parent=0 // pred_region
    _
  $region13: #{_lambda_.15} parent=0 // pred_fallthru
    _
  // Predicated region
  $region14: #{_lambda_.15} parent=0 // pred_check
    _
  $region15: #{_lambda_.15} parent=0 // pred_check_branch
    %16 = sbr.rel (0) target = $region17
  $region16: #{_lambda_.15} parent=0 // pred_region
    _
  $region17: #{_lambda_.15} parent=0 // pred_fallthru
    _
  %v18 = vld [vmem:[%s0] sm:$0xff]
  %v19 = vld [vmem:[%s0 + $0x8] sm:$0xff]
  %v20 = vld [vmem:[%s0 + $0x10] sm:$0xff]
  %v21 = vld [vmem:[%s0 + $0x18] sm:$0xff]
  %v22 = vld [vmem:[%s0 + $0x20] sm:$0xff]
  %v23 = vld [vmem:[%s0 + $0x28] sm:$0xff]
  %v24 = vld [vmem:[%s0 + $0x30] sm:$0xff]
  %v25 = vld [vmem:[%s0 + $0x38] sm:$0xff]
  %v26 = vld [vmem:[%s0 + $0x40] sm:$0xff]
  %v27 = vld [vmem:[%s0 + $0x48] sm:$0xff]
  %v28 = vld [vmem:[%s0 + $0x50] sm:$0xff]
  %v29 = vld [vmem:[%s0 + $0x58] sm:$0xff]
  %v30 = vld [vmem:[%s0 + $0x60] sm:$0xff]
  %v31 = vld [vmem:[%s0 + $0x68] sm:$0xff]
  %v32 = vld [vmem:[%s0 + $0x70] sm:$0xff]
  %v33 = vld [vmem:[%s0 + $0x78] sm:$0xff]
  %v34 = vld [vmem:[%s1] sm:$0xf]
  %v35 = vld [vmem:[%s1 + $0x4] sm:$0xf]
  %v36 = vld [vmem:[%s1 + $0x8] sm:$0xf]
  %v37 = vld [vmem:[%s1 + $0xc] sm:$0xf]
  %v38 = vld [vmem:[%s1 + $0x10] sm:$0xf]
  %v39 = vld [vmem:[%s1 + $0x14] sm:$0xf]
  %v40 = vld [vmem:[%s1 + $0x18] sm:$0xf]
  %v41 = vld [vmem:[%s1 + $0x1c] sm:$0xf]
  %v42 = vld [vmem:[%s1 + $0x20] sm:$0xf]
  %v43 = vld [vmem:[%s1 + $0x24] sm:$0xf]
  %v44 = vld [vmem:[%s1 + $0x28] sm:$0xf]
  %v45 = vld [vmem:[%s1 + $0x2c] sm:$0xf]
  %v46 = vld [vmem:[%s1 + $0x30] sm:$0xf]
  %v47 = vld [vmem:[%s1 + $0x34] sm:$0xf]
  %v48 = vld [vmem:[%s1 + $0x38] sm:$0xf]
  %v49 = vld [vmem:[%s1 + $0x3c] sm:$0xf]
  %v50 = vld [vmem:[%s1 + $0x40] sm:$0xf]
  %v51 = vld [vmem:[%s1 + $0x44] sm:$0xf]
  %v52 = vld [vmem:[%s2] sm:$0x1]
  %v54 = vlaneseq
  %v55 = vshrl.u32 %v54, 7
  %v56 = vsub.s32 0, %v55
  %v57 = vrot.slane %v52, %v56
  %v75 = vunpack.c.l.b16 %v18
  %v76 = vunpack.c.h.b16 %v18
  %v77 = vunpack.c.l.b16 %v19
  %v78 = vunpack.c.h.b16 %v19
  %v79 = vunpack.c.l.b16 %v20
  %v80 = vunpack.c.h.b16 %v20
  %v81 = vunpack.c.l.b16 %v21
  %v82 = vunpack.c.h.b16 %v21
  %v83 = vunpack.c.l.b16 %v22
  %v84 = vunpack.c.h.b16 %v22
  %v85 = vunpack.c.l.b16 %v23
  %v86 = vunpack.c.h.b16 %v23
  %v87 = vunpack.c.l.b16 %v24
  %v88 = vunpack.c.h.b16 %v24
  %v89 = vunpack.c.l.b16 %v25
  %v90 = vunpack.c.h.b16 %v25
  %v91 = vunpack.c.l.b16 %v26
  %v92 = vunpack.c.h.b16 %v26
  %v93 = vunpack.c.l.b16 %v27
  %v94 = vunpack.c.h.b16 %v27
  %v95 = vunpack.c.l.b16 %v28
  %v96 = vunpack.c.h.b16 %v28
  %v97 = vunpack.c.l.b16 %v29
  %v98 = vunpack.c.h.b16 %v29
  %v99 = vunpack.c.l.b16 %v30
  %v100 = vunpack.c.h.b16 %v30
  %v101 = vunpack.c.l.b16 %v31
  %v102 = vunpack.c.h.b16 %v31
  %v103 = vunpack.c.l.b16 %v32
  %v104 = vunpack.c.h.b16 %v32
  %v105 = vunpack.c.l.b16 %v33
  %v106 = vunpack.c.h.b16 %v33
  %v107 = vpack.c.b16 %v77, %v75
  %v108 = vpack.c.b16 %v78, %v76
  %v109 = vpack.c.b16 %v81, %v79
  %v110 = vpack.c.b16 %v82, %v80
  %v111 = vpack.c.b16 %v85, %v83
  %v112 = vpack.c.b16 %v86, %v84
  %v113 = vpack.c.b16 %v89, %v87
  %v114 = vpack.c.b16 %v90, %v88
  %v115 = vpack.c.b16 %v93, %v91
  %v116 = vpack.c.b16 %v94, %v92
  %v117 = vpack.c.b16 %v97, %v95
  %v118 = vpack.c.b16 %v98, %v96
  %v119 = vpack.c.b16 %v101, %v99
  %v120 = vpack.c.b16 %v102, %v100
  %v121 = vpack.c.b16 %v105, %v103
  %v122 = vpack.c.b16 %v106, %v104
  %v149 = vunpack.c.l.b16 %v34
  %v150 = vunpack.c.l.b16 %v35
  %v151 = vunpack.c.l.b16 %v36
  %v152 = vunpack.c.l.b16 %v37
  %v153 = vunpack.c.l.b16 %v38
  %v154 = vunpack.c.l.b16 %v39
  %v155 = vunpack.c.l.b16 %v40
  %v156 = vunpack.c.l.b16 %v41
  %v157 = vunpack.c.l.b16 %v42
  %v158 = vunpack.c.l.b16 %v43
  %v159 = vunpack.c.l.b16 %v44
  %v160 = vunpack.c.l.b16 %v45
  %v161 = vunpack.c.l.b16 %v46
  %v162 = vunpack.c.l.b16 %v47
  %v163 = vunpack.c.l.b16 %v48
  %v164 = vunpack.c.l.b16 %v49
  %v165 = vunpack.c.l.b16 %v50
  %v166 = vunpack.c.l.b16 %v51
  %v167 = vpack.c.b16 %v150, %v149
  %v168 = vpack.c.b16 %v152, %v151
  %v169 = vpack.c.b16 %v154, %v153
  %v170 = vpack.c.b16 %v156, %v155
  %v171 = vpack.c.b16 %v158, %v157
  %v172 = vpack.c.b16 %v160, %v159
  %v173 = vpack.c.b16 %v162, %v161
  %v174 = vpack.c.b16 %v164, %v163
  %v175 = vpack.c.b16 %v166, %v165
  %vm185 = vcmask 130048
  %v187 = vsel %vm185, %v108, 0
  %v190 = vsel %vm185, %v110, 0
  %v193 = vsel %vm185, %v112, 0
  %v196 = vsel %vm185, %v114, 0
  %v199 = vsel %vm185, %v116, 0
  %v202 = vsel %vm185, %v118, 0
  %v205 = vsel %vm185, %v120, 0
  %v208 = vsel %vm185, %v122, 0
  %210 = vmatprep.subr.bf16.mxu0 0
  %211 = vmatpush1.bf16.msra.mxu0 %v167
  %212 = vmatprep.subr.bf16.mxu0 0
  %213 = vmatpush1.bf16.msra.mxu0 %v168
  %214 = vmatprep.subr.bf16.mxu0 0
  %215 = vmatpush1.bf16.msra.mxu0 %v169
  %216 = vmatprep.subr.bf16.mxu0 0
  %217 = vmatpush1.bf16.msra.mxu0 %v170
  %218 = vmatprep.subr.bf16.mxu0 0
  %219 = vmatpush1.bf16.msra.mxu0 %v171
  %220 = vmatprep.subr.bf16.mxu0 0
  %221 = vmatpush1.bf16.msra.mxu0 %v172
  %222 = vmatprep.subr.bf16.mxu0 0
  %223 = vmatpush1.bf16.msra.mxu0 %v173
  %224 = vmatprep.subr.bf16.mxu0 0
  %225 = vmatpush1.bf16.msra.mxu0 %v174
  %226 = vmatprep.subr.bf16.mxu0 0
  %227 = vmatpush1.bf16.msra.mxu0 %v175
  %228 = vmatprep.subr.bf16.mxu0 0
  %229 = vmatpush1.bf16.msra.mxu0 0
  %230 = vmatprep.subr.bf16.mxu0 0
  %231 = vmatpush1.bf16.msra.mxu0 0
  %232 = vmatprep.subr.bf16.mxu0 0
  %233 = vmatpush1.bf16.msra.mxu0 0
  %234 = vmatprep.subr.bf16.mxu0 0
  %235 = vmatpush1.bf16.msra.mxu0 0
  %236 = vmatprep.subr.bf16.mxu0 0
  %237 = vmatpush1.bf16.msra.mxu0 0
  %238 = vmatprep.subr.bf16.mxu0 0
  %239 = vmatpush1.bf16.msra.mxu0 0
  %240 = vmatprep.subr.bf16.mxu0 0
  %241 = vmatpush1.bf16.msra.mxu0 0
  %242 = vmatprep.mubr.bf16.mxu0 %v187
  %243 = vmatmul.mubr.bf16.gmra.mrb[0].mxu0 %v107
  %v244 = vpop.f32.mrb[0].mxu0
  %v245 = vadd.f32 %v57, %v244
  %v246 = vpop.f32.mrb[0].mxu0
  %v247 = vpop.f32.mrb[0].mxu0
  %v248 = vadd.f32 %v57, %v247
  %v249 = vpop.f32.mrb[0].mxu0
  %250 = vmatprep.mubr.bf16.mxu0 %v190
  %251 = vmatmul.mubr.bf16.gmra.mrb[0].mxu0 %v109
  %v252 = vpop.f32.mrb[0].mxu0
  %v253 = vadd.f32 %v57, %v252
  %v254 = vpop.f32.mrb[0].mxu0
  %v255 = vpop.f32.mrb[0].mxu0
  %v256 = vadd.f32 %v57, %v255
  %v257 = vpop.f32.mrb[0].mxu0
  %258 = vmatprep.mubr.bf16.mxu0 %v193
  %259 = vmatmul.mubr.bf16.gmra.mrb[0].mxu0 %v111
  %v260 = vpop.f32.mrb[0].mxu0
  %v261 = vadd.f32 %v57, %v260
  %v262 = vpop.f32.mrb[0].mxu0
  %v263 = vpop.f32.mrb[0].mxu0
  %v264 = vadd.f32 %v57, %v263
  %v265 = vpop.f32.mrb[0].mxu0
  %266 = vmatprep.mubr.bf16.mxu0 %v196
  %267 = vmatmul.mubr.bf16.gmra.mrb[0].mxu0 %v113
  %v268 = vpop.f32.mrb[0].mxu0
  %v269 = vadd.f32 %v57, %v268
  %v270 = vpop.f32.mrb[0].mxu0
  %v271 = vpop.f32.mrb[0].mxu0
  %v272 = vadd.f32 %v57, %v271
  %v273 = vpop.f32.mrb[0].mxu0
  %274 = vmatprep.mubr.bf16.mxu0 %v199
  %275 = vmatmul.mubr.bf16.gmra.mrb[0].mxu0 %v115
  %v276 = vpop.f32.mrb[0].mxu0
  %v277 = vadd.f32 %v57, %v276
  %v278 = vpop.f32.mrb[0].mxu0
  %v279 = vpop.f32.mrb[0].mxu0
  %v280 = vadd.f32 %v57, %v279
  %v281 = vpop.f32.mrb[0].mxu0
  %282 = vmatprep.mubr.bf16.mxu0 %v202
  %283 = vmatmul.mubr.bf16.gmra.mrb[0].mxu0 %v117
  %v284 = vpop.f32.mrb[0].mxu0
  %v285 = vadd.f32 %v57, %v284
  %v286 = vpop.f32.mrb[0].mxu0
  %v287 = vpop.f32.mrb[0].mxu0
  %v288 = vadd.f32 %v57, %v287
  %v289 = vpop.f32.mrb[0].mxu0
  %290 = vmatprep.mubr.bf16.mxu0 %v205
  %291 = vmatmul.mubr.bf16.gmra.mrb[0].mxu0 %v119
  %v292 = vpop.f32.mrb[0].mxu0
  %v293 = vadd.f32 %v57, %v292
  %v294 = vpop.f32.mrb[0].mxu0
  %v295 = vpop.f32.mrb[0].mxu0
  %v296 = vadd.f32 %v57, %v295
  %v297 = vpop.f32.mrb[0].mxu0
  %298 = vmatprep.mubr.bf16.mxu0 %v208
  %299 = vmatmul.mubr.bf16.gmra.mrb[0].mxu0 %v121
  %v300 = vpop.f32.mrb[0].mxu0
  %v301 = vadd.f32 %v57, %v300
  %v302 = vpop.f32.mrb[0].mxu0
  %v303 = vpop.f32.mrb[0].mxu0
  %v304 = vadd.f32 %v57, %v303
  %v305 = vpop.f32.mrb[0].mxu0
  %306 = vdwg.mxu0
  %v307 = vld [vmem:[%s3] sm:$0xf]
  %v308 = vld [vmem:[%s3 + $0x4] sm:$0xf]
  %v309 = vld [vmem:[%s3 + $0x8] sm:$0xf]
  %v310 = vld [vmem:[%s3 + $0xc] sm:$0xf]
  %v311 = vld [vmem:[%s3 + $0x10] sm:$0xf]
  %v312 = vld [vmem:[%s3 + $0x14] sm:$0xf]
  %v313 = vld [vmem:[%s3 + $0x18] sm:$0xf]
  %v314 = vld [vmem:[%s3 + $0x1c] sm:$0xf]
  %v315 = vld [vmem:[%s3 + $0x20] sm:$0xf]
  %v316 = vld [vmem:[%s3 + $0x24] sm:$0xf]
  %v317 = vld [vmem:[%s3 + $0x28] sm:$0xf]
  %v318 = vld [vmem:[%s3 + $0x2c] sm:$0xf]
  %v319 = vld [vmem:[%s3 + $0x30] sm:$0xf]
  %v320 = vld [vmem:[%s3 + $0x34] sm:$0xf]
  %v321 = vld [vmem:[%s3 + $0x38] sm:$0xf]
  %v322 = vld [vmem:[%s3 + $0x3c] sm:$0xf]
  %v323 = vunpack.c.l.bf16 %v307
  %v324 = vunpack.c.l.bf16 %v308
  %v325 = vunpack.c.l.bf16 %v309
  %v326 = vunpack.c.l.bf16 %v310
  %v327 = vunpack.c.l.bf16 %v311
  %v328 = vunpack.c.l.bf16 %v312
  %v329 = vunpack.c.l.bf16 %v313
  %v330 = vunpack.c.l.bf16 %v314
  %v331 = vunpack.c.l.bf16 %v315
  %v332 = vunpack.c.l.bf16 %v316
  %v333 = vunpack.c.l.bf16 %v317
  %v334 = vunpack.c.l.bf16 %v318
  %v335 = vunpack.c.l.bf16 %v319
  %v336 = vunpack.c.l.bf16 %v320
  %v337 = vunpack.c.l.bf16 %v321
  %v338 = vunpack.c.l.bf16 %v322
  %v339 = vadd.f32 %v245, %v323
  %v340 = vadd.f32 %v248, %v324
  %v341 = vadd.f32 %v253, %v325
  %v342 = vadd.f32 %v256, %v326
  %v343 = vadd.f32 %v261, %v327
  %v344 = vadd.f32 %v264, %v328
  %v345 = vadd.f32 %v269, %v329
  %v346 = vadd.f32 %v272, %v330
  %v347 = vadd.f32 %v277, %v331
  %v348 = vadd.f32 %v280, %v332
  %v349 = vadd.f32 %v285, %v333
  %v350 = vadd.f32 %v288, %v334
  %v351 = vadd.f32 %v293, %v335
  %v352 = vadd.f32 %v296, %v336
  %v353 = vadd.f32 %v301, %v337
  %v354 = vadd.f32 %v304, %v338
  %v355 = vmax.f32 %v339, 0.0
  %v356 = vmax.f32 %v340, 0.0
  %v357 = vmax.f32 %v341, 0.0
  %v358 = vmax.f32 %v342, 0.0
  %v359 = vmax.f32 %v343, 0.0
  %v360 = vmax.f32 %v344, 0.0
  %v361 = vmax.f32 %v345, 0.0
  %v362 = vmax.f32 %v346, 0.0
  %v363 = vmax.f32 %v347, 0.0
  %v364 = vmax.f32 %v348, 0.0
  %v365 = vmax.f32 %v349, 0.0
  %v366 = vmax.f32 %v350, 0.0
  %v367 = vmax.f32 %v351, 0.0
  %v368 = vmax.f32 %v352, 0.0
  %v369 = vmax.f32 %v353, 0.0
  %v370 = vmax.f32 %v354, 0.0
  %v371 = vpack.c.bf16 %v356, %v355
  %v372 = vpack.c.bf16 %v358, %v357
  %v373 = vpack.c.bf16 %v360, %v359
  %v374 = vpack.c.bf16 %v362, %v361
  %v375 = vpack.c.bf16 %v364, %v363
  %v376 = vpack.c.bf16 %v366, %v365
  %v377 = vpack.c.bf16 %v368, %v367
  %v378 = vpack.c.bf16 %v370, %v369
  %v387 = vunpack.c.l.b16 %v371
  %v388 = vunpack.c.h.b16 %v371
  %v389 = vunpack.c.l.b16 %v372
  %v390 = vunpack.c.h.b16 %v372
  %v391 = vunpack.c.l.b16 %v373
  %v392 = vunpack.c.h.b16 %v373
  %v393 = vunpack.c.l.b16 %v374
  %v394 = vunpack.c.h.b16 %v374
  %v395 = vunpack.c.l.b16 %v375
  %v396 = vunpack.c.h.b16 %v375
  %v397 = vunpack.c.l.b16 %v376
  %v398 = vunpack.c.h.b16 %v376
  %v399 = vunpack.c.l.b16 %v377
  %v400 = vunpack.c.h.b16 %v377
  %v401 = vunpack.c.l.b16 %v378
  %v402 = vunpack.c.h.b16 %v378
  %v403 = vpack.c.b16 %v387, %v387
  %v404 = vpack.c.b16 %v388, %v388
  %v405 = vpack.c.b16 %v389, %v389
  %v406 = vpack.c.b16 %v390, %v390
  %v407 = vpack.c.b16 %v391, %v391
  %v408 = vpack.c.b16 %v392, %v392
  %v409 = vpack.c.b16 %v393, %v393
  %v410 = vpack.c.b16 %v394, %v394
  %v411 = vpack.c.b16 %v395, %v395
  %v412 = vpack.c.b16 %v396, %v396
  %v413 = vpack.c.b16 %v397, %v397
  %v414 = vpack.c.b16 %v398, %v398
  %v415 = vpack.c.b16 %v399, %v399
  %v416 = vpack.c.b16 %v400, %v400
  %v417 = vpack.c.b16 %v401, %v401
  %v418 = vpack.c.b16 %v402, %v402
  %vm435 = vcmask 125952
  %436 = vst.msk [vmem:[%s4] sm:$0xf] %vm435, %v403
  %437 = vst.msk [vmem:[%s4 + $0x4] sm:$0xf] %vm435, %v404
  %438 = vst.msk [vmem:[%s4 + $0x8] sm:$0xf] %vm435, %v405
  %439 = vst.msk [vmem:[%s4 + $0xc] sm:$0xf] %vm435, %v406
  %440 = vst.msk [vmem:[%s4 + $0x10] sm:$0xf] %vm435, %v407
  %441 = vst.msk [vmem:[%s4 + $0x14] sm:$0xf] %vm435, %v408
  %442 = vst.msk [vmem:[%s4 + $0x18] sm:$0xf] %vm435, %v409
  %443 = vst.msk [vmem:[%s4 + $0x1c] sm:$0xf] %vm435, %v410
  %444 = vst.msk [vmem:[%s4 + $0x20] sm:$0xf] %vm435, %v411
  %445 = vst.msk [vmem:[%s4 + $0x24] sm:$0xf] %vm435, %v412
  %446 = vst.msk [vmem:[%s4 + $0x28] sm:$0xf] %vm435, %v413
  %447 = vst.msk [vmem:[%s4 + $0x2c] sm:$0xf] %vm435, %v414
  %448 = vst.msk [vmem:[%s4 + $0x30] sm:$0xf] %vm435, %v415
  %449 = vst.msk [vmem:[%s4 + $0x34] sm:$0xf] %vm435, %v416
  %450 = vst.msk [vmem:[%s4 + $0x38] sm:$0xf] %vm435, %v417
  %451 = vst.msk [vmem:[%s4 + $0x3c] sm:$0xf] %vm435, %v418
  // Predicated region
  $region18: #{_lambda_.15} parent=0 // pred_check
    _
  $region19: #{_lambda_.15} parent=0 // pred_check_branch
    %453 = sbr.rel (0) target = $region21
  $region20: #{_lambda_.15} parent=0 // pred_region
    _
  $region21: #{_lambda_.15} parent=0 // pred_fallthru
    _
  // Predicated region
  $region22: #{_lambda_.15} parent=0 // pred_check
    _
  $region23: #{_lambda_.15} parent=0 // pred_check_branch
    %455 = sbr.rel (0) target = $region25
  $region24: #{_lambda_.15} parent=0 // pred_region
    _
  $region25: #{_lambda_.15} parent=0 // pred_fallthru
    _

// kernel: _lambda_.17
$region0: #{_lambda_.17}
  #allocation0 [shape = 'u32[]', space=smem, size = 0x4, offset = 0x4, fixed_abs, tag = 'smem constant byte address 0x4 - core index']
  #allocation1 [shape = 'u32[144,128]{1,0:T(1,128)}', space=vmem, size = 0x12000, scoped, tag = 'internal scratch']
  %s0 = inlined_call_operand.vmem [shape: bf16[32,144], index: 0, kind: input, shape index: {}]
  %s1 = inlined_call_operand.vmem [shape: bf16[144,32], index: 1, kind: input, shape index: {}]
  %s2 = inlined_call_operand.vmem [shape: f32[1,32], index: 2, kind: input, shape index: {}]
  %s3 = inlined_call_operand.vmem [shape: bf16[32,32], index: 3, kind: output, shape index: {}]
  %s4 = sld [smem:[#allocation0]]
  $region22: #{_lambda_.17} parent=0
    _
  %s6 = ssub.s32 1, %s4
  %s7 = scalar_select 0, %s6, %s4
  // Predicated region
  $region2: #{_lambda_.17} parent=0 // pred_check
    _
  $region3: #{_lambda_.17} parent=0 // pred_check_branch
    %9 = sbr.rel (0) target = $region5
  $region4: #{_lambda_.17} parent=0 // pred_region
    _
  $region5: #{_lambda_.17} parent=0 // pred_fallthru
    _
  // Predicated region
  $region6: #{_lambda_.17} parent=0 // pred_check
    _
  $region7: #{_lambda_.17} parent=0 // pred_check_branch
    %11 = sbr.rel (0) target = $region9
  $region8: #{_lambda_.17} parent=0 // pred_region
    _
  $region9: #{_lambda_.17} parent=0 // pred_fallthru
    _
  // Predicated region
  $region10: #{_lambda_.17} parent=0 // pred_check
    _
  $region11: #{_lambda_.17} parent=0 // pred_check_branch
    %13 = sbr.rel (0) target = $region13
  $region12: #{_lambda_.17} parent=0 // pred_region
    _
  $region13: #{_lambda_.17} parent=0 // pred_fallthru
    _
  %v15 = vld [vmem:[%s0] sm:$0xff]
  %v16 = vld [vmem:[%s0 + $0x8] sm:$0xff]
  %v17 = vld [vmem:[%s0 + $0x10] sm:$0xff]
  %v18 = vld [vmem:[%s0 + $0x18] sm:$0xff]
  %v19 = vld [vmem:[%s1] sm:$0xf]
  %v20 = vld [vmem:[%s1 + $0x4] sm:$0xf]
  %v21 = vld [vmem:[%s1 + $0x8] sm:$0xf]
  %v22 = vld [vmem:[%s1 + $0xc] sm:$0xf]
  %v23 = vld [vmem:[%s1 + $0x10] sm:$0xf]
  %v24 = vld [vmem:[%s1 + $0x14] sm:$0xf]
  %v25 = vld [vmem:[%s1 + $0x18] sm:$0xf]
  %v26 = vld [vmem:[%s1 + $0x1c] sm:$0xf]
  %v27 = vld [vmem:[%s1 + $0x20] sm:$0xf]
  %v28 = vld [vmem:[%s1 + $0x24] sm:$0xf]
  %v29 = vld [vmem:[%s1 + $0x28] sm:$0xf]
  %v30 = vld [vmem:[%s1 + $0x2c] sm:$0xf]
  %v31 = vld [vmem:[%s1 + $0x30] sm:$0xf]
  %v32 = vld [vmem:[%s1 + $0x34] sm:$0xf]
  %v33 = vld [vmem:[%s1 + $0x38] sm:$0xf]
  %v34 = vld [vmem:[%s1 + $0x3c] sm:$0xf]
  %v35 = vld [vmem:[%s1 + $0x40] sm:$0xf]
  %v36 = vld [vmem:[%s1 + $0x44] sm:$0xf]
  %v37 = vld [vmem:[%s2] sm:$0x1]
  %v39 = vlaneseq
  %v40 = vshrl.u32 %v39, 7
  %v41 = vsub.s32 0, %v40
  %v42 = vrot.slane %v37, %v41
  %v48 = vunpack.c.l.b16 %v15
  %v49 = vunpack.c.h.b16 %v15
  %v50 = vunpack.c.l.b16 %v16
  %v51 = vunpack.c.h.b16 %v16
  %v52 = vunpack.c.l.b16 %v17
  %v53 = vunpack.c.h.b16 %v17
  %v54 = vunpack.c.l.b16 %v18
  %v55 = vunpack.c.h.b16 %v18
  %v56 = vpack.c.b16 %v50, %v48
  %v57 = vpack.c.b16 %v51, %v49
  %v58 = vpack.c.b16 %v54, %v52
  %v59 = vpack.c.b16 %v55, %v53
  %v80 = vunpack.c.l.b16 %v19
  %v81 = vunpack.c.l.b16 %v20
  %v82 = vunpack.c.l.b16 %v21
  %v83 = vunpack.c.l.b16 %v22
  %v84 = vunpack.c.l.b16 %v23
  %v85 = vunpack.c.l.b16 %v24
  %v86 = vunpack.c.l.b16 %v25
  %v87 = vunpack.c.l.b16 %v26
  %v88 = vunpack.c.l.b16 %v27
  %v89 = vunpack.c.l.b16 %v28
  %v90 = vunpack.c.l.b16 %v29
  %v91 = vunpack.c.l.b16 %v30
  %v92 = vunpack.c.l.b16 %v31
  %v93 = vunpack.c.l.b16 %v32
  %v94 = vunpack.c.l.b16 %v33
  %v95 = vunpack.c.l.b16 %v34
  %v96 = vunpack.c.l.b16 %v35
  %v97 = vunpack.c.l.b16 %v36
  %v98 = vpack.c.b16 %v81, %v80
  %v99 = vpack.c.b16 %v83, %v82
  %v100 = vpack.c.b16 %v85, %v84
  %v101 = vpack.c.b16 %v87, %v86
  %v102 = vpack.c.b16 %v89, %v88
  %v103 = vpack.c.b16 %v91, %v90
  %v104 = vpack.c.b16 %v93, %v92
  %v105 = vpack.c.b16 %v95, %v94
  %v106 = vpack.c.b16 %v97, %v96
  %vm116 = vcmask 130048
  %v118 = vsel %vm116, %v57, 0
  %v121 = vsel %vm116, %v59, 0
  %123 = vmatprep.subr.bf16.mxu0 0
  %124 = vmatpush1.bf16.msra.mxu0 %v98
  %125 = vmatprep.subr.bf16.mxu0 0
  %126 = vmatpush1.bf16.msra.mxu0 %v99
  %127 = vmatprep.subr.bf16.mxu0 0
  %128 = vmatpush1.bf16.msra.mxu0 %v100
  %129 = vmatprep.subr.bf16.mxu0 0
  %130 = vmatpush1.bf16.msra.mxu0 %v101
  %131 = vmatprep.subr.bf16.mxu0 0
  %132 = vmatpush1.bf16.msra.mxu0 %v102
  %133 = vmatprep.subr.bf16.mxu0 0
  %134 = vmatpush1.bf16.msra.mxu0 %v103
  %135 = vmatprep.subr.bf16.mxu0 0
  %136 = vmatpush1.bf16.msra.mxu0 %v104
  %137 = vmatprep.subr.bf16.mxu0 0
  %138 = vmatpush1.bf16.msra.mxu0 %v105
  %139 = vmatprep.subr.bf16.mxu0 0
  %140 = vmatpush1.bf16.msra.mxu0 %v106
  %141 = vmatprep.subr.bf16.mxu0 0
  %142 = vmatpush1.bf16.msra.mxu0 0
  %143 = vmatprep.subr.bf16.mxu0 0
  %144 = vmatpush1.bf16.msra.mxu0 0
  %145 = vmatprep.subr.bf16.mxu0 0
  %146 = vmatpush1.bf16.msra.mxu0 0
  %147 = vmatprep.subr.bf16.mxu0 0
  %148 = vmatpush1.bf16.msra.mxu0 0
  %149 = vmatprep.subr.bf16.mxu0 0
  %150 = vmatpush1.bf16.msra.mxu0 0
  %151 = vmatprep.subr.bf16.mxu0 0
  %152 = vmatpush1.bf16.msra.mxu0 0
  %153 = vmatprep.subr.bf16.mxu0 0
  %154 = vmatpush1.bf16.msra.mxu0 0
  %155 = vmatprep.mubr.bf16.mxu0 %v118
  %156 = vmatmul.mubr.bf16.gmra.mrb[0].mxu0 %v56
  %v157 = vpop.f32.mrb[0].mxu0
  %v158 = vadd.f32 %v42, %v157
  %v159 = vpop.f32.mrb[0].mxu0
  %v160 = vpop.f32.mrb[0].mxu0
  %v161 = vadd.f32 %v42, %v160
  %v162 = vpop.f32.mrb[0].mxu0
  %163 = vmatprep.mubr.bf16.mxu0 %v121
  %164 = vmatmul.mubr.bf16.gmra.mrb[0].mxu0 %v58
  %v165 = vpop.f32.mrb[0].mxu0
  %v166 = vadd.f32 %v42, %v165
  %v167 = vpop.f32.mrb[0].mxu0
  %v168 = vpop.f32.mrb[0].mxu0
  %v169 = vadd.f32 %v42, %v168
  %v170 = vpop.f32.mrb[0].mxu0
  %171 = vdwg.mxu0
  %v172 = vmax.f32 %v158, 0.0
  %v173 = vmax.f32 %v161, 0.0
  %v174 = vmax.f32 %v166, 0.0
  %v175 = vmax.f32 %v169, 0.0
  %v176 = vpack.c.bf16 %v173, %v172
  %v177 = vpack.c.bf16 %v175, %v174
  %v180 = vunpack.c.l.b16 %v176
  %v181 = vunpack.c.h.b16 %v176
  %v182 = vunpack.c.l.b16 %v177
  %v183 = vunpack.c.h.b16 %v177
  %v184 = vpack.c.b16 %v180, %v180
  %v185 = vpack.c.b16 %v181, %v181
  %v186 = vpack.c.b16 %v182, %v182
  %v187 = vpack.c.b16 %v183, %v183
  %vm192 = vcmask 257024
  %193 = vst.msk [vmem:[%s3] sm:$0xf] %vm192, %v184
  %194 = vst.msk [vmem:[%s3 + $0x4] sm:$0xf] %vm192, %v185
  %195 = vst.msk [vmem:[%s3 + $0x8] sm:$0xf] %vm192, %v186
  %196 = vst.msk [vmem:[%s3 + $0xc] sm:$0xf] %vm192, %v187
  // Predicated region
  $region14: #{_lambda_.17} parent=0 // pred_check
    _
  $region15: #{_lambda_.17} parent=0 // pred_check_branch
    %198 = sbr.rel (0) target = $region17
  $region16: #{_lambda_.17} parent=0 // pred_region
    _
  $region17: #{_lambda_.17} parent=0 // pred_fallthru
    _
  // Predicated region
  $region18: #{_lambda_.17} parent=0 // pred_check
    _
  $region19: #{_lambda_.17} parent=0 // pred_check_branch
    %200 = sbr.rel (0) target = $region21
  $region20: #{_lambda_.17} parent=0 // pred_region
    _
  $region21: #{_lambda_.17} parent=0 // pred_fallthru
    _

// kernel: _lambda_.16
$region0: #{_lambda_.16}
  #allocation0 [shape = 'u32[]', space=smem, size = 0x4, offset = 0x4, fixed_abs, tag = 'smem constant byte address 0x4 - core index']
  #allocation1 [shape = 'u32[144,128]{1,0:T(1,128)}', space=vmem, size = 0x12000, scoped, tag = 'internal scratch']
  %s0 = inlined_call_operand.vmem [shape: bf16[32,16], index: 0, kind: input, shape index: {}]
  %s1 = inlined_call_operand.vmem [shape: bf16[16,32], index: 1, kind: input, shape index: {}]
  %s2 = inlined_call_operand.vmem [shape: f32[1,32], index: 2, kind: input, shape index: {}]
  %s3 = inlined_call_operand.vmem [shape: bf16[32,32], index: 3, kind: output, shape index: {}]
  %s4 = sld [smem:[#allocation0]]
  $region22: #{_lambda_.16} parent=0
    _
  %s6 = ssub.s32 1, %s4
  %s7 = scalar_select 0, %s6, %s4
  // Predicated region
  $region2: #{_lambda_.16} parent=0 // pred_check
    _
  $region3: #{_lambda_.16} parent=0 // pred_check_branch
    %9 = sbr.rel (0) target = $region5
  $region4: #{_lambda_.16} parent=0 // pred_region
    _
  $region5: #{_lambda_.16} parent=0 // pred_fallthru
    _
  // Predicated region
  $region6: #{_lambda_.16} parent=0 // pred_check
    _
  $region7: #{_lambda_.16} parent=0 // pred_check_branch
    %11 = sbr.rel (0) target = $region9
  $region8: #{_lambda_.16} parent=0 // pred_region
    _
  $region9: #{_lambda_.16} parent=0 // pred_fallthru
    _
  // Predicated region
  $region10: #{_lambda_.16} parent=0 // pred_check
    _
  $region11: #{_lambda_.16} parent=0 // pred_check_branch
    %13 = sbr.rel (0) target = $region13
  $region12: #{_lambda_.16} parent=0 // pred_region
    _
  $region13: #{_lambda_.16} parent=0 // pred_fallthru
    _
  %v15 = vld [vmem:[%s0] sm:$0xf]
  %v16 = vld [vmem:[%s0 + $0x4] sm:$0xf]
  %v17 = vld [vmem:[%s0 + $0x8] sm:$0xf]
  %v18 = vld [vmem:[%s0 + $0xc] sm:$0xf]
  %v19 = vld [vmem:[%s1] sm:$0xf]
  %v20 = vld [vmem:[%s1 + $0x4] sm:$0xf]
  %v21 = vld [vmem:[%s2] sm:$0x1]
  %v23 = vlaneseq
  %v24 = vshrl.u32 %v23, 7
  %v25 = vsub.s32 0, %v24
  %v26 = vrot.slane %v21, %v25
  %v32 = vunpack.c.l.b16 %v15
  %v33 = vunpack.c.l.b16 %v16
  %v34 = vunpack.c.l.b16 %v17
  %v35 = vunpack.c.l.b16 %v18
  %v36 = vpack.c.b16 %v33, %v32
  %v37 = vpack.c.b16 %v35, %v34
  %v40 = vunpack.c.l.b16 %v19
  %v41 = vunpack.c.l.b16 %v20
  %v42 = vpack.c.b16 %v41, %v40
  %vm44 = vcmask 130048
  %v46 = vsel %vm44, %v36, 0
  %v49 = vsel %vm44, %v37, 0
  %51 = vmatprep.subr.bf16.mxu0 0
  %52 = vmatpush1.bf16.msra.mxu0 %v42
  %53 = vmatprep.subr.bf16.mxu0 0
  %54 = vmatpush1.bf16.msra.mxu0 0
  %55 = vmatprep.subr.bf16.mxu0 0
  %56 = vmatpush1.bf16.msra.mxu0 0
  %57 = vmatprep.subr.bf16.mxu0 0
  %58 = vmatpush1.bf16.msra.mxu0 0
  %59 = vmatprep.subr.bf16.mxu0 0
  %60 = vmatpush1.bf16.msra.mxu0 0
  %61 = vmatprep.subr.bf16.mxu0 0
  %62 = vmatpush1.bf16.msra.mxu0 0
  %63 = vmatprep.subr.bf16.mxu0 0
  %64 = vmatpush1.bf16.msra.mxu0 0
  %65 = vmatprep.subr.bf16.mxu0 0
  %66 = vmatpush1.bf16.msra.mxu0 0
  %67 = vmatprep.subr.bf16.mxu0 0
  %68 = vmatpush1.bf16.msra.mxu0 0
  %69 = vmatprep.subr.bf16.mxu0 0
  %70 = vmatpush1.bf16.msra.mxu0 0
  %71 = vmatprep.subr.bf16.mxu0 0
  %72 = vmatpush1.bf16.msra.mxu0 0
  %73 = vmatprep.subr.bf16.mxu0 0
  %74 = vmatpush1.bf16.msra.mxu0 0
  %75 = vmatprep.subr.bf16.mxu0 0
  %76 = vmatpush1.bf16.msra.mxu0 0
  %77 = vmatprep.subr.bf16.mxu0 0
  %78 = vmatpush1.bf16.msra.mxu0 0
  %79 = vmatprep.subr.bf16.mxu0 0
  %80 = vmatpush1.bf16.msra.mxu0 0
  %81 = vmatprep.subr.bf16.mxu0 0
  %82 = vmatpush1.bf16.msra.mxu0 0
  %83 = vmatprep.mubr.bf16.mxu0 0
  %84 = vmatmul.mubr.bf16.gmra.mrb[0].mxu0 %v46
  %v85 = vpop.f32.mrb[0].mxu0
  %v86 = vadd.f32 %v26, %v85
  %v87 = vpop.f32.mrb[0].mxu0
  %v88 = vpop.f32.mrb[0].mxu0
  %v89 = vadd.f32 %v26, %v88
  %v90 = vpop.f32.mrb[0].mxu0
  %91 = vmatprep.mubr.bf16.mxu0 0
  %92 = vmatmul.mubr.bf16.gmra.mrb[0].mxu0 %v49
  %v93 = vpop.f32.mrb[0].mxu0
  %v94 = vadd.f32 %v26, %v93
  %v95 = vpop.f32.mrb[0].mxu0
  %v96 = vpop.f32.mrb[0].mxu0
  %v97 = vadd.f32 %v26, %v96
  %v98 = vpop.f32.mrb[0].mxu0
  %99 = vdwg.mxu0
  %v100 = vpack.c.bf16 %v89, %v86
  %v101 = vpack.c.bf16 %v97, %v94
  %v104 = vunpack.c.l.b16 %v100
  %v105 = vunpack.c.h.b16 %v100
  %v106 = vunpack.c.l.b16 %v101
  %v107 = vunpack.c.h.b16 %v101
  %v108 = vpack.c.b16 %v104, %v104
  %v109 = vpack.c.b16 %v105, %v105
  %v110 = vpack.c.b16 %v106, %v106
  %v111 = vpack.c.b16 %v107, %v107
  %vm116 = vcmask 257024
  %117 = vst.msk [vmem:[%s3] sm:$0xf] %vm116, %v108
  %118 = vst.msk [vmem:[%s3 + $0x4] sm:$0xf] %vm116, %v109
  %119 = vst.msk [vmem:[%s3 + $0x8] sm:$0xf] %vm116, %v110
  %120 = vst.msk [vmem:[%s3 + $0xc] sm:$0xf] %vm116, %v111
  // Predicated region
  $region14: #{_lambda_.16} parent=0 // pred_check
    _
  $region15: #{_lambda_.16} parent=0 // pred_check_branch
    %122 = sbr.rel (0) target = $region17
  $region16: #{_lambda_.16} parent=0 // pred_region
    _
  $region17: #{_lambda_.16} parent=0 // pred_fallthru
    _
  // Predicated region
  $region18: #{_lambda_.16} parent=0 // pred_check
    _
  $region19: #{_lambda_.16} parent=0 // pred_check_branch
    %124 = sbr.rel (0) target = $region21
  $region20: #{_lambda_.16} parent=0 // pred_region
    _
  $region21: #{_lambda_.16} parent=0 // pred_fallthru
    _

// kernel: _lambda_.18
$region0: #{_lambda_.18}
  #allocation0 [shape = 'u32[]', space=smem, size = 0x4, offset = 0x4, fixed_abs, tag = 'smem constant byte address 0x4 - core index']
  #allocation1 [shape = 'u32[144,128]{1,0:T(1,128)}', space=vmem, size = 0x12000, scoped, tag = 'internal scratch']
  %s0 = inlined_call_operand.vmem [shape: bf16[32,288], index: 0, kind: input, shape index: {}]
  %s1 = inlined_call_operand.vmem [shape: bf16[288,32], index: 1, kind: input, shape index: {}]
  %s2 = inlined_call_operand.vmem [shape: f32[1,32], index: 2, kind: input, shape index: {}]
  %s3 = inlined_call_operand.vmem [shape: bf16[32,32], index: 3, kind: input, shape index: {}]
  %s4 = inlined_call_operand.vmem [shape: bf16[32,32], index: 4, kind: output, shape index: {}]
  %s5 = sld [smem:[#allocation0]]
  $region26: #{_lambda_.18} parent=0
    _
  %s7 = ssub.s32 1, %s5
  %s8 = scalar_select 0, %s7, %s5
  // Predicated region
  $region2: #{_lambda_.18} parent=0 // pred_check
    _
  $region3: #{_lambda_.18} parent=0 // pred_check_branch
    %10 = sbr.rel (0) target = $region5
  $region4: #{_lambda_.18} parent=0 // pred_region
    _
  $region5: #{_lambda_.18} parent=0 // pred_fallthru
    _
  // Predicated region
  $region6: #{_lambda_.18} parent=0 // pred_check
    _
  $region7: #{_lambda_.18} parent=0 // pred_check_branch
    %12 = sbr.rel (0) target = $region9
  $region8: #{_lambda_.18} parent=0 // pred_region
    _
  $region9: #{_lambda_.18} parent=0 // pred_fallthru
    _
  // Predicated region
  $region10: #{_lambda_.18} parent=0 // pred_check
    _
  $region11: #{_lambda_.18} parent=0 // pred_check_branch
    %14 = sbr.rel (0) target = $region13
  $region12: #{_lambda_.18} parent=0 // pred_region
    _
  $region13: #{_lambda_.18} parent=0 // pred_fallthru
    _
  // Predicated region
  $region14: #{_lambda_.18} parent=0 // pred_check
    _
  $region15: #{_lambda_.18} parent=0 // pred_check_branch
    %16 = sbr.rel (0) target = $region17
  $region16: #{_lambda_.18} parent=0 // pred_region
    _
  $region17: #{_lambda_.18} parent=0 // pred_fallthru
    _
  %v18 = vld [vmem:[%s0] sm:$0xff]
  %v19 = vld [vmem:[%s0 + $0x8] sm:$0xf]
  %v20 = vld [vmem:[%s0 + $0xc] sm:$0xff]
  %v21 = vld [vmem:[%s0 + $0x14] sm:$0xf]
  %v22 = vld [vmem:[%s0 + $0x18] sm:$0xff]
  %v23 = vld [vmem:[%s0 + $0x20] sm:$0xf]
  %v24 = vld [vmem:[%s0 + $0x24] sm:$0xff]
  %v25 = vld [vmem:[%s0 + $0x2c] sm:$0xf]
  %v26 = vld [vmem:[%s1] sm:$0xf]
  %v27 = vld [vmem:[%s1 + $0x4] sm:$0xf]
  %v28 = vld [vmem:[%s1 + $0x8] sm:$0xf]
  %v29 = vld [vmem:[%s1 + $0xc] sm:$0xf]
  %v30 = vld [vmem:[%s1 + $0x10] sm:$0xf]
  %v31 = vld [vmem:[%s1 + $0x14] sm:$0xf]
  %v32 = vld [vmem:[%s1 + $0x18] sm:$0xf]
  %v33 = vld [vmem:[%s1 + $0x1c] sm:$0xf]
  %v34 = vld [vmem:[%s1 + $0x20] sm:$0xf]
  %v35 = vld [vmem:[%s1 + $0x24] sm:$0xf]
  %v36 = vld [vmem:[%s1 + $0x28] sm:$0xf]
  %v37 = vld [vmem:[%s1 + $0x2c] sm:$0xf]
  %v38 = vld [vmem:[%s1 + $0x30] sm:$0xf]
  %v39 = vld [vmem:[%s1 + $0x34] sm:$0xf]
  %v40 = vld [vmem:[%s1 + $0x38] sm:$0xf]
  %v41 = vld [vmem:[%s1 + $0x3c] sm:$0xf]
  %v42 = vld [vmem:[%s1 + $0x40] sm:$0xf]
  %v43 = vld [vmem:[%s1 + $0x44] sm:$0xf]
  %v44 = vld [vmem:[%s1 + $0x48] sm:$0xf]
  %v45 = vld [vmem:[%s1 + $0x4c] sm:$0xf]
  %v46 = vld [vmem:[%s1 + $0x50] sm:$0xf]
  %v47 = vld [vmem:[%s1 + $0x54] sm:$0xf]
  %v48 = vld [vmem:[%s1 + $0x58] sm:$0xf]
  %v49 = vld [vmem:[%s1 + $0x5c] sm:$0xf]
  %v50 = vld [vmem:[%s1 + $0x60] sm:$0xf]
  %v51 = vld [vmem:[%s1 + $0x64] sm:$0xf]
  %v52 = vld [vmem:[%s1 + $0x68] sm:$0xf]
  %v53 = vld [vmem:[%s1 + $0x6c] sm:$0xf]
  %v54 = vld [vmem:[%s1 + $0x70] sm:$0xf]
  %v55 = vld [vmem:[%s1 + $0x74] sm:$0xf]
  %v56 = vld [vmem:[%s1 + $0x78] sm:$0xf]
  %v57 = vld [vmem:[%s1 + $0x7c] sm:$0xf]
  %v58 = vld [vmem:[%s1 + $0x80] sm:$0xf]
  %v59 = vld [vmem:[%s1 + $0x84] sm:$0xf]
  %v60 = vld [vmem:[%s1 + $0x88] sm:$0xf]
  %v61 = vld [vmem:[%s1 + $0x8c] sm:$0xf]
  %v62 = vld [vmem:[%s2] sm:$0x1]
  %v64 = vlaneseq
  %v65 = vshrl.u32 %v64, 7
  %v66 = vsub.s32 0, %v65
  %v67 = vrot.slane %v62, %v66
  %v77 = vunpack.c.l.b16 %v18
  %v78 = vunpack.c.h.b16 %v18
  %v79 = vunpack.c.l.b16 %v19
  %v80 = vunpack.c.l.b16 %v20
  %v81 = vunpack.c.h.b16 %v20
  %v82 = vunpack.c.l.b16 %v21
  %v83 = vunpack.c.l.b16 %v22
  %v84 = vunpack.c.h.b16 %v22
  %v85 = vunpack.c.l.b16 %v23
  %v86 = vunpack.c.l.b16 %v24
  %v87 = vunpack.c.h.b16 %v24
  %v88 = vunpack.c.l.b16 %v25
  %v89 = vpack.c.b16 %v80, %v77
  %v90 = vpack.c.b16 %v81, %v78
  %v91 = vpack.c.b16 %v82, %v79
  %v92 = vpack.c.b16 %v86, %v83
  %v93 = vpack.c.b16 %v87, %v84
  %v94 = vpack.c.b16 %v88, %v85
  %v135 = vunpack.c.l.b16 %v26
  %v136 = vunpack.c.l.b16 %v27
  %v137 = vunpack.c.l.b16 %v28
  %v138 = vunpack.c.l.b16 %v29
  %v139 = vunpack.c.l.b16 %v30
  %v140 = vunpack.c.l.b16 %v31
  %v141 = vunpack.c.l.b16 %v32
  %v142 = vunpack.c.l.b16 %v33
  %v143 = vunpack.c.l.b16 %v34
  %v144 = vunpack.c.l.b16 %v35
  %v145 = vunpack.c.l.b16 %v36
  %v146 = vunpack.c.l.b16 %v37
  %v147 = vunpack.c.l.b16 %v38
  %v148 = vunpack.c.l.b16 %v39
  %v149 = vunpack.c.l.b16 %v40
  %v150 = vunpack.c.l.b16 %v41
  %v151 = vunpack.c.l.b16 %v42
  %v152 = vunpack.c.l.b16 %v43
  %v153 = vunpack.c.l.b16 %v44
  %v154 = vunpack.c.l.b16 %v45
  %v155 = vunpack.c.l.b16 %v46
  %v156 = vunpack.c.l.b16 %v47
  %v157 = vunpack.c.l.b16 %v48
  %v158 = vunpack.c.l.b16 %v49
  %v159 = vunpack.c.l.b16 %v50
  %v160 = vunpack.c.l.b16 %v51
  %v161 = vunpack.c.l.b16 %v52
  %v162 = vunpack.c.l.b16 %v53
  %v163 = vunpack.c.l.b16 %v54
  %v164 = vunpack.c.l.b16 %v55
  %v165 = vunpack.c.l.b16 %v56
  %v166 = vunpack.c.l.b16 %v57
  %v167 = vunpack.c.l.b16 %v58
  %v168 = vunpack.c.l.b16 %v59
  %v169 = vunpack.c.l.b16 %v60
  %v170 = vunpack.c.l.b16 %v61
  %v171 = vpack.c.b16 %v136, %v135
  %v172 = vpack.c.b16 %v138, %v137
  %v173 = vpack.c.b16 %v140, %v139
  %v174 = vpack.c.b16 %v142, %v141
  %v175 = vpack.c.b16 %v144, %v143
  %v176 = vpack.c.b16 %v146, %v145
  %v177 = vpack.c.b16 %v148, %v147
  %v178 = vpack.c.b16 %v150, %v149
  %v179 = vpack.c.b16 %v152, %v151
  %v180 = vpack.c.b16 %v154, %v153
  %v181 = vpack.c.b16 %v156, %v155
  %v182 = vpack.c.b16 %v158, %v157
  %v183 = vpack.c.b16 %v160, %v159
  %v184 = vpack.c.b16 %v162, %v161
  %v185 = vpack.c.b16 %v164, %v163
  %v186 = vpack.c.b16 %v166, %v165
  %v187 = vpack.c.b16 %v168, %v167
  %v188 = vpack.c.b16 %v170, %v169
  %vm207 = vcmask 261120
  %v209 = vsel %vm207, %v91, 0
  %v212 = vsel %vm207, %v94, 0
  %214 = vmatprep.subr.bf16.mxu0 0
  %215 = vmatpush1.bf16.msra.mxu0 %v171
  %216 = vmatprep.subr.bf16.mxu0 0
  %217 = vmatpush1.bf16.msra.mxu0 %v172
  %218 = vmatprep.subr.bf16.mxu0 0
  %219 = vmatpush1.bf16.msra.mxu0 %v173
  %220 = vmatprep.subr.bf16.mxu0 0
  %221 = vmatpush1.bf16.msra.mxu0 %v174
  %222 = vmatprep.subr.bf16.mxu0 0
  %223 = vmatpush1.bf16.msra.mxu0 %v175
  %224 = vmatprep.subr.bf16.mxu0 0
  %225 = vmatpush1.bf16.msra.mxu0 %v176
  %226 = vmatprep.subr.bf16.mxu0 0
  %227 = vmatpush1.bf16.msra.mxu0 %v177
  %228 = vmatprep.subr.bf16.mxu0 0
  %229 = vmatpush1.bf16.msra.mxu0 %v178
  %230 = vmatprep.subr.bf16.mxu0 0
  %231 = vmatpush1.bf16.msra.mxu0 %v179
  %232 = vmatprep.subr.bf16.mxu0 0
  %233 = vmatpush1.bf16.msra.mxu0 %v180
  %234 = vmatprep.subr.bf16.mxu0 0
  %235 = vmatpush1.bf16.msra.mxu0 %v181
  %236 = vmatprep.subr.bf16.mxu0 0
  %237 = vmatpush1.bf16.msra.mxu0 %v182
  %238 = vmatprep.subr.bf16.mxu0 0
  %239 = vmatpush1.bf16.msra.mxu0 %v183
  %240 = vmatprep.subr.bf16.mxu0 0
  %241 = vmatpush1.bf16.msra.mxu0 %v184
  %242 = vmatprep.subr.bf16.mxu0 0
  %243 = vmatpush1.bf16.msra.mxu0 %v185
  %244 = vmatprep.subr.bf16.mxu0 0
  %245 = vmatpush1.bf16.msra.mxu0 %v186
  %246 = vmatprep.mubr.bf16.mxu0 %v90
  %247 = vmatmul.mubr.bf16.gmra.mrb[0].mxu0 %v89
  %v248 = vpop.f32.mrb[0].mxu0
  %v249 = vadd.f32 %v67, %v248
  %v250 = vpop.f32.mrb[0].mxu0
  %v251 = vpop.f32.mrb[0].mxu0
  %v252 = vadd.f32 %v67, %v251
  %v253 = vpop.f32.mrb[0].mxu0
  %254 = vmatprep.mubr.bf16.mxu0 %v93
  %255 = vmatmul.mubr.bf16.gmra.mrb[0].mxu0 %v92
  %v256 = vpop.f32.mrb[0].mxu0
  %v257 = vadd.f32 %v67, %v256
  %v258 = vpop.f32.mrb[0].mxu0
  %v259 = vpop.f32.mrb[0].mxu0
  %v260 = vadd.f32 %v67, %v259
  %v261 = vpop.f32.mrb[0].mxu0
  %262 = vdwg.mxu0
  %263 = vmatprep.subr.bf16.mxu0 0
  %264 = vmatpush1.bf16.msra.mxu0 %v187
  %265 = vmatprep.subr.bf16.mxu0 0
  %266 = vmatpush1.bf16.msra.mxu0 %v188
  %267 = vmatprep.subr.bf16.mxu0 0
  %268 = vmatpush1.bf16.msra.mxu0 0
  %269 = vmatprep.subr.bf16.mxu0 0
  %270 = vmatpush1.bf16.msra.mxu0 0
  %271 = vmatprep.subr.bf16.mxu0 0
  %272 = vmatpush1.bf16.msra.mxu0 0
  %273 = vmatprep.subr.bf16.mxu0 0
  %274 = vmatpush1.bf16.msra.mxu0 0
  %275 = vmatprep.subr.bf16.mxu0 0
  %276 = vmatpush1.bf16.msra.mxu0 0
  %277 = vmatprep.subr.bf16.mxu0 0
  %278 = vmatpush1.bf16.msra.mxu0 0
  %279 = vmatprep.subr.bf16.mxu0 0
  %280 = vmatpush1.bf16.msra.mxu0 0
  %281 = vmatprep.subr.bf16.mxu0 0
  %282 = vmatpush1.bf16.msra.mxu0 0
  %283 = vmatprep.subr.bf16.mxu0 0
  %284 = vmatpush1.bf16.msra.mxu0 0
  %285 = vmatprep.subr.bf16.mxu0 0
  %286 = vmatpush1.bf16.msra.mxu0 0
  %287 = vmatprep.subr.bf16.mxu0 0
  %288 = vmatpush1.bf16.msra.mxu0 0
  %289 = vmatprep.subr.bf16.mxu0 0
  %290 = vmatpush1.bf16.msra.mxu0 0
  %291 = vmatprep.subr.bf16.mxu0 0
  %292 = vmatpush1.bf16.msra.mxu0 0
  %293 = vmatprep.subr.bf16.mxu0 0
  %294 = vmatpush1.bf16.msra.mxu0 0
  %295 = vmatprep.mubr.bf16.mxu0 0
  %296 = vmatmul.mubr.bf16.gmra.mrb[0].mxu0 %v209
  %v297 = vpop.f32.mrb[0].mxu0
  %v298 = vadd.f32 %v249, %v297
  %v299 = vpop.f32.mrb[0].mxu0
  %v300 = vpop.f32.mrb[0].mxu0
  %v301 = vadd.f32 %v252, %v300
  %v302 = vpop.f32.mrb[0].mxu0
  %303 = vmatprep.mubr.bf16.mxu0 0
  %304 = vmatmul.mubr.bf16.gmra.mrb[0].mxu0 %v212
  %v305 = vpop.f32.mrb[0].mxu0
  %v306 = vadd.f32 %v257, %v305
  %v307 = vpop.f32.mrb[0].mxu0
  %v308 = vpop.f32.mrb[0].mxu0
  %v309 = vadd.f32 %v260, %v308
  %v310 = vpop.f32.mrb[0].mxu0
  %311 = vdwg.mxu0
  %v312 = vld [vmem:[%s3] sm:$0xf]
  %v313 = vld [vmem:[%s3 + $0x4] sm:$0xf]
  %v314 = vld [vmem:[%s3 + $0x8] sm:$0xf]
  %v315 = vld [vmem:[%s3 + $0xc] sm:$0xf]
  %v316 = vunpack.c.l.bf16 %v312
  %v317 = vunpack.c.l.bf16 %v313
  %v318 = vunpack.c.l.bf16 %v314
  %v319 = vunpack.c.l.bf16 %v315
  %v320 = vadd.f32 %v298, %v316
  %v321 = vadd.f32 %v301, %v317
  %v322 = vadd.f32 %v306, %v318
  %v323 = vadd.f32 %v309, %v319
  %v324 = vmax.f32 %v320, 0.0
  %v325 = vmax.f32 %v321, 0.0
  %v326 = vmax.f32 %v322, 0.0
  %v327 = vmax.f32 %v323, 0.0
  %v328 = vpack.c.bf16 %v325, %v324
  %v329 = vpack.c.bf16 %v327, %v326
  %v332 = vunpack.c.l.b16 %v328
  %v333 = vunpack.c.h.b16 %v328
  %v334 = vunpack.c.l.b16 %v329
  %v335 = vunpack.c.h.b16 %v329
  %v336 = vpack.c.b16 %v332, %v332
  %v337 = vpack.c.b16 %v333, %v333
  %v338 = vpack.c.b16 %v334, %v334
  %v339 = vpack.c.b16 %v335, %v335
  %vm344 = vcmask 257024
  %345 = vst.msk [vmem:[%s4] sm:$0xf] %vm344, %v336
  %346 = vst.msk [vmem:[%s4 + $0x4] sm:$0xf] %vm344, %v337
  %347 = vst.msk [vmem:[%s4 + $0x8] sm:$0xf] %vm344, %v338
  %348 = vst.msk [vmem:[%s4 + $0xc] sm:$0xf] %vm344, %v339
  // Predicated region
  $region18: #{_lambda_.18} parent=0 // pred_check
    _
  $region19: #{_lambda_.18} parent=0 // pred_check_branch
    %350 = sbr.rel (0) target = $region21
  $region20: #{_lambda_.18} parent=0 // pred_region
    _
  $region21: #{_lambda_.18} parent=0 // pred_fallthru
    _
  // Predicated region
  $region22: #{_lambda_.18} parent=0 // pred_check
    _
  $region23: #{_lambda_.18} parent=0 // pred_check_branch
    %352 = sbr.rel (0) target = $region25
  $region24: #{_lambda_.18} parent=0 // pred_region
    _
  $region25: #{_lambda_.18} parent=0 // pred_fallthru
    _

// kernel: _lambda_.20
$region0: #{_lambda_.20}
  #allocation0 [shape = 'u32[]', space=smem, size = 0x4, offset = 0x4, fixed_abs, tag = 'smem constant byte address 0x4 - core index']
  #allocation1 [shape = 'u32[144,128]{1,0:T(1,128)}', space=vmem, size = 0x12000, scoped, tag = 'internal scratch']
  %s0 = inlined_call_operand.vmem [shape: bf16[16,288], index: 0, kind: input, shape index: {}]
  %s1 = inlined_call_operand.vmem [shape: bf16[288,64], index: 1, kind: input, shape index: {}]
  %s2 = inlined_call_operand.vmem [shape: f32[1,64], index: 2, kind: input, shape index: {}]
  %s3 = inlined_call_operand.vmem [shape: bf16[16,64], index: 3, kind: output, shape index: {}]
  %s4 = sld [smem:[#allocation0]]
  $region22: #{_lambda_.20} parent=0
    _
  %s6 = ssub.s32 1, %s4
  %s7 = scalar_select 0, %s6, %s4
  // Predicated region
  $region2: #{_lambda_.20} parent=0 // pred_check
    _
  $region3: #{_lambda_.20} parent=0 // pred_check_branch
    %9 = sbr.rel (0) target = $region5
  $region4: #{_lambda_.20} parent=0 // pred_region
    _
  $region5: #{_lambda_.20} parent=0 // pred_fallthru
    _
  // Predicated region
  $region6: #{_lambda_.20} parent=0 // pred_check
    _
  $region7: #{_lambda_.20} parent=0 // pred_check_branch
    %11 = sbr.rel (0) target = $region9
  $region8: #{_lambda_.20} parent=0 // pred_region
    _
  $region9: #{_lambda_.20} parent=0 // pred_fallthru
    _
  // Predicated region
  $region10: #{_lambda_.20} parent=0 // pred_check
    _
  $region11: #{_lambda_.20} parent=0 // pred_check_branch
    %13 = sbr.rel (0) target = $region13
  $region12: #{_lambda_.20} parent=0 // pred_region
    _
  $region13: #{_lambda_.20} parent=0 // pred_fallthru
    _
  %v15 = vld [vmem:[%s0] sm:$0xff]
  %v16 = vld [vmem:[%s0 + $0x8] sm:$0xf]
  %v17 = vld [vmem:[%s0 + $0xc] sm:$0xff]
  %v18 = vld [vmem:[%s0 + $0x14] sm:$0xf]
  %v19 = vld [vmem:[%s1] sm:$0xf]
  %v20 = vld [vmem:[%s1 + $0x4] sm:$0xf]
  %v21 = vld [vmem:[%s1 + $0x8] sm:$0xf]
  %v22 = vld [vmem:[%s1 + $0xc] sm:$0xf]
  %v23 = vld [vmem:[%s1 + $0x10] sm:$0xf]
  %v24 = vld [vmem:[%s1 + $0x14] sm:$0xf]
  %v25 = vld [vmem:[%s1 + $0x18] sm:$0xf]
  %v26 = vld [vmem:[%s1 + $0x1c] sm:$0xf]
  %v27 = vld [vmem:[%s1 + $0x20] sm:$0xf]
  %v28 = vld [vmem:[%s1 + $0x24] sm:$0xf]
  %v29 = vld [vmem:[%s1 + $0x28] sm:$0xf]
  %v30 = vld [vmem:[%s1 + $0x2c] sm:$0xf]
  %v31 = vld [vmem:[%s1 + $0x30] sm:$0xf]
  %v32 = vld [vmem:[%s1 + $0x34] sm:$0xf]
  %v33 = vld [vmem:[%s1 + $0x38] sm:$0xf]
  %v34 = vld [vmem:[%s1 + $0x3c] sm:$0xf]
  %v35 = vld [vmem:[%s1 + $0x40] sm:$0xf]
  %v36 = vld [vmem:[%s1 + $0x44] sm:$0xf]
  %v37 = vld [vmem:[%s1 + $0x48] sm:$0xf]
  %v38 = vld [vmem:[%s1 + $0x4c] sm:$0xf]
  %v39 = vld [vmem:[%s1 + $0x50] sm:$0xf]
  %v40 = vld [vmem:[%s1 + $0x54] sm:$0xf]
  %v41 = vld [vmem:[%s1 + $0x58] sm:$0xf]
  %v42 = vld [vmem:[%s1 + $0x5c] sm:$0xf]
  %v43 = vld [vmem:[%s1 + $0x60] sm:$0xf]
  %v44 = vld [vmem:[%s1 + $0x64] sm:$0xf]
  %v45 = vld [vmem:[%s1 + $0x68] sm:$0xf]
  %v46 = vld [vmem:[%s1 + $0x6c] sm:$0xf]
  %v47 = vld [vmem:[%s1 + $0x70] sm:$0xf]
  %v48 = vld [vmem:[%s1 + $0x74] sm:$0xf]
  %v49 = vld [vmem:[%s1 + $0x78] sm:$0xf]
  %v50 = vld [vmem:[%s1 + $0x7c] sm:$0xf]
  %v51 = vld [vmem:[%s1 + $0x80] sm:$0xf]
  %v52 = vld [vmem:[%s1 + $0x84] sm:$0xf]
  %v53 = vld [vmem:[%s1 + $0x88] sm:$0xf]
  %v54 = vld [vmem:[%s1 + $0x8c] sm:$0xf]
  %v55 = vld [vmem:[%s2] sm:$0x1]
  %v57 = vlaneseq
  %v58 = vshrl.u32 %v57, 7
  %v59 = vsub.s32 0, %v58
  %v60 = vrot.slane %v55, %v59
  %v66 = vunpack.c.l.b16 %v15
  %v67 = vunpack.c.h.b16 %v15
  %v68 = vunpack.c.l.b16 %v16
  %v69 = vunpack.c.l.b16 %v17
  %v70 = vunpack.c.h.b16 %v17
  %v71 = vunpack.c.l.b16 %v18
  %v72 = vpack.c.b16 %v69, %v66
  %v73 = vpack.c.b16 %v70, %v67
  %v74 = vpack.c.b16 %v71, %v68
  %v113 = vunpack.c.l.b16 %v19
  %v114 = vunpack.c.l.b16 %v20
  %v115 = vunpack.c.l.b16 %v21
  %v116 = vunpack.c.l.b16 %v22
  %v117 = vunpack.c.l.b16 %v23
  %v118 = vunpack.c.l.b16 %v24
  %v119 = vunpack.c.l.b16 %v25
  %v120 = vunpack.c.l.b16 %v26
  %v121 = vunpack.c.l.b16 %v27
  %v122 = vunpack.c.l.b16 %v28
  %v123 = vunpack.c.l.b16 %v29
  %v124 = vunpack.c.l.b16 %v30
  %v125 = vunpack.c.l.b16 %v31
  %v126 = vunpack.c.l.b16 %v32
  %v127 = vunpack.c.l.b16 %v33
  %v128 = vunpack.c.l.b16 %v34
  %v129 = vunpack.c.l.b16 %v35
  %v130 = vunpack.c.l.b16 %v36
  %v131 = vunpack.c.l.b16 %v37
  %v132 = vunpack.c.l.b16 %v38
  %v133 = vunpack.c.l.b16 %v39
  %v134 = vunpack.c.l.b16 %v40
  %v135 = vunpack.c.l.b16 %v41
  %v136 = vunpack.c.l.b16 %v42
  %v137 = vunpack.c.l.b16 %v43
  %v138 = vunpack.c.l.b16 %v44
  %v139 = vunpack.c.l.b16 %v45
  %v140 = vunpack.c.l.b16 %v46
  %v141 = vunpack.c.l.b16 %v47
  %v142 = vunpack.c.l.b16 %v48
  %v143 = vunpack.c.l.b16 %v49
  %v144 = vunpack.c.l.b16 %v50
  %v145 = vunpack.c.l.b16 %v51
  %v146 = vunpack.c.l.b16 %v52
  %v147 = vunpack.c.l.b16 %v53
  %v148 = vunpack.c.l.b16 %v54
  %v149 = vpack.c.b16 %v114, %v113
  %v150 = vpack.c.b16 %v116, %v115
  %v151 = vpack.c.b16 %v118, %v117
  %v152 = vpack.c.b16 %v120, %v119
  %v153 = vpack.c.b16 %v122, %v121
  %v154 = vpack.c.b16 %v124, %v123
  %v155 = vpack.c.b16 %v126, %v125
  %v156 = vpack.c.b16 %v128, %v127
  %v157 = vpack.c.b16 %v130, %v129
  %v158 = vpack.c.b16 %v132, %v131
  %v159 = vpack.c.b16 %v134, %v133
  %v160 = vpack.c.b16 %v136, %v135
  %v161 = vpack.c.b16 %v138, %v137
  %v162 = vpack.c.b16 %v140, %v139
  %v163 = vpack.c.b16 %v142, %v141
  %v164 = vpack.c.b16 %v144, %v143
  %v165 = vpack.c.b16 %v146, %v145
  %v166 = vpack.c.b16 %v148, %v147
  %vm185 = vcmask 261120
  %v187 = vsel %vm185, %v74, 0
  %189 = vmatprep.subr.bf16.mxu0 0
  %190 = vmatpush1.bf16.msra.mxu0 %v149
  %191 = vmatprep.subr.bf16.mxu0 0
  %192 = vmatpush1.bf16.msra.mxu0 %v150
  %193 = vmatprep.subr.bf16.mxu0 0
  %194 = vmatpush1.bf16.msra.mxu0 %v151
  %195 = vmatprep.subr.bf16.mxu0 0
  %196 = vmatpush1.bf16.msra.mxu0 %v152
  %197 = vmatprep.subr.bf16.mxu0 0
  %198 = vmatpush1.bf16.msra.mxu0 %v153
  %199 = vmatprep.subr.bf16.mxu0 0
  %200 = vmatpush1.bf16.msra.mxu0 %v154
  %201 = vmatprep.subr.bf16.mxu0 0
  %202 = vmatpush1.bf16.msra.mxu0 %v155
  %203 = vmatprep.subr.bf16.mxu0 0
  %204 = vmatpush1.bf16.msra.mxu0 %v156
  %205 = vmatprep.subr.bf16.mxu0 0
  %206 = vmatpush1.bf16.msra.mxu0 %v157
  %207 = vmatprep.subr.bf16.mxu0 0
  %208 = vmatpush1.bf16.msra.mxu0 %v158
  %209 = vmatprep.subr.bf16.mxu0 0
  %210 = vmatpush1.bf16.msra.mxu0 %v159
  %211 = vmatprep.subr.bf16.mxu0 0
  %212 = vmatpush1.bf16.msra.mxu0 %v160
  %213 = vmatprep.subr.bf16.mxu0 0
  %214 = vmatpush1.bf16.msra.mxu0 %v161
  %215 = vmatprep.subr.bf16.mxu0 0
  %216 = vmatpush1.bf16.msra.mxu0 %v162
  %217 = vmatprep.subr.bf16.mxu0 0
  %218 = vmatpush1.bf16.msra.mxu0 %v163
  %219 = vmatprep.subr.bf16.mxu0 0
  %220 = vmatpush1.bf16.msra.mxu0 %v164
  %221 = vmatprep.mubr.bf16.mxu0 %v73
  %222 = vmatmul.mubr.bf16.gmra.mrb[0].mxu0 %v72
  %v223 = vpop.f32.mrb[0].mxu0
  %v224 = vadd.f32 %v60, %v223
  %v225 = vpop.f32.mrb[0].mxu0
  %v226 = vpop.f32.mrb[0].mxu0
  %v227 = vadd.f32 %v60, %v226
  %v228 = vpop.f32.mrb[0].mxu0
  %229 = vdwg.mxu0
  %230 = vmatprep.subr.bf16.mxu0 0
  %231 = vmatpush1.bf16.msra.mxu0 %v165
  %232 = vmatprep.subr.bf16.mxu0 0
  %233 = vmatpush1.bf16.msra.mxu0 %v166
  %234 = vmatprep.subr.bf16.mxu0 0
  %235 = vmatpush1.bf16.msra.mxu0 0
  %236 = vmatprep.subr.bf16.mxu0 0
  %237 = vmatpush1.bf16.msra.mxu0 0
  %238 = vmatprep.subr.bf16.mxu0 0
  %239 = vmatpush1.bf16.msra.mxu0 0
  %240 = vmatprep.subr.bf16.mxu0 0
  %241 = vmatpush1.bf16.msra.mxu0 0
  %242 = vmatprep.subr.bf16.mxu0 0
  %243 = vmatpush1.bf16.msra.mxu0 0
  %244 = vmatprep.subr.bf16.mxu0 0
  %245 = vmatpush1.bf16.msra.mxu0 0
  %246 = vmatprep.subr.bf16.mxu0 0
  %247 = vmatpush1.bf16.msra.mxu0 0
  %248 = vmatprep.subr.bf16.mxu0 0
  %249 = vmatpush1.bf16.msra.mxu0 0
  %250 = vmatprep.subr.bf16.mxu0 0
  %251 = vmatpush1.bf16.msra.mxu0 0
  %252 = vmatprep.subr.bf16.mxu0 0
  %253 = vmatpush1.bf16.msra.mxu0 0
  %254 = vmatprep.subr.bf16.mxu0 0
  %255 = vmatpush1.bf16.msra.mxu0 0
  %256 = vmatprep.subr.bf16.mxu0 0
  %257 = vmatpush1.bf16.msra.mxu0 0
  %258 = vmatprep.subr.bf16.mxu0 0
  %259 = vmatpush1.bf16.msra.mxu0 0
  %260 = vmatprep.subr.bf16.mxu0 0
  %261 = vmatpush1.bf16.msra.mxu0 0
  %262 = vmatprep.mubr.bf16.mxu0 0
  %263 = vmatmul.mubr.bf16.gmra.mrb[0].mxu0 %v187
  %v264 = vpop.f32.mrb[0].mxu0
  %v265 = vadd.f32 %v224, %v264
  %v266 = vpop.f32.mrb[0].mxu0
  %v267 = vpop.f32.mrb[0].mxu0
  %v268 = vadd.f32 %v227, %v267
  %v269 = vpop.f32.mrb[0].mxu0
  %270 = vdwg.mxu0
  %v271 = vmax.f32 %v265, 0.0
  %v272 = vmax.f32 %v268, 0.0
  %v273 = vpack.c.bf16 %v272, %v271
  %v275 = vunpack.c.l.b16 %v273
  %v276 = vunpack.c.h.b16 %v273
  %v277 = vpack.c.b16 %v275, %v275
  %v278 = vpack.c.b16 %v276, %v276
  %vm281 = vcmask 519168
  %282 = vst.msk [vmem:[%s3] sm:$0xf] %vm281, %v277
  %283 = vst.msk [vmem:[%s3 + $0x4] sm:$0xf] %vm281, %v278
  // Predicated region
  $region14: #{_lambda_.20} parent=0 // pred_check
    _
  $region15: #{_lambda_.20} parent=0 // pred_check_branch
    %285 = sbr.rel (0) target = $region17
  $region16: #{_lambda_.20} parent=0 // pred_region
    _
  $region17: #{_lambda_.20} parent=0 // pred_fallthru
    _
  // Predicated region
  $region18: #{_lambda_.20} parent=0 // pred_check
    _
  $region19: #{_lambda_.20} parent=0 // pred_check_branch
    %287 = sbr.rel (0) target = $region21
  $region20: #{_lambda_.20} parent=0 // pred_region
    _
  $region21: #{_lambda_.20} parent=0 // pred_fallthru
    _

// kernel: _lambda_.19
$region0: #{_lambda_.19}
  #allocation0 [shape = 'u32[]', space=smem, size = 0x4, offset = 0x4, fixed_abs, tag = 'smem constant byte address 0x4 - core index']
  #allocation1 [shape = 'u32[144,128]{1,0:T(1,128)}', space=vmem, size = 0x12000, scoped, tag = 'internal scratch']
  %s0 = inlined_call_operand.vmem [shape: bf16[16,32], index: 0, kind: input, shape index: {}]
  %s1 = inlined_call_operand.vmem [shape: bf16[32,64], index: 1, kind: input, shape index: {}]
  %s2 = inlined_call_operand.vmem [shape: f32[1,64], index: 2, kind: input, shape index: {}]
  %s3 = inlined_call_operand.vmem [shape: bf16[16,64], index: 3, kind: output, shape index: {}]
  %s4 = sld [smem:[#allocation0]]
  $region22: #{_lambda_.19} parent=0
    _
  %s6 = ssub.s32 1, %s4
  %s7 = scalar_select 0, %s6, %s4
  // Predicated region
  $region2: #{_lambda_.19} parent=0 // pred_check
    _
  $region3: #{_lambda_.19} parent=0 // pred_check_branch
    %9 = sbr.rel (0) target = $region5
  $region4: #{_lambda_.19} parent=0 // pred_region
    _
  $region5: #{_lambda_.19} parent=0 // pred_fallthru
    _
  // Predicated region
  $region6: #{_lambda_.19} parent=0 // pred_check
    _
  $region7: #{_lambda_.19} parent=0 // pred_check_branch
    %11 = sbr.rel (0) target = $region9
  $region8: #{_lambda_.19} parent=0 // pred_region
    _
  $region9: #{_lambda_.19} parent=0 // pred_fallthru
    _
  // Predicated region
  $region10: #{_lambda_.19} parent=0 // pred_check
    _
  $region11: #{_lambda_.19} parent=0 // pred_check_branch
    %13 = sbr.rel (0) target = $region13
  $region12: #{_lambda_.19} parent=0 // pred_region
    _
  $region13: #{_lambda_.19} parent=0 // pred_fallthru
    _
  %v15 = vld [vmem:[%s0] sm:$0xf]
  %v16 = vld [vmem:[%s0 + $0x4] sm:$0xf]
  %v17 = vld [vmem:[%s1] sm:$0xf]
  %v18 = vld [vmem:[%s1 + $0x4] sm:$0xf]
  %v19 = vld [vmem:[%s1 + $0x8] sm:$0xf]
  %v20 = vld [vmem:[%s1 + $0xc] sm:$0xf]
  %v21 = vld [vmem:[%s2] sm:$0x1]
  %v23 = vlaneseq
  %v24 = vshrl.u32 %v23, 7
  %v25 = vsub.s32 0, %v24
  %v26 = vrot.slane %v21, %v25
  %v30 = vunpack.c.l.b16 %v15
  %v31 = vunpack.c.l.b16 %v16
  %v32 = vpack.c.b16 %v31, %v30
  %v37 = vunpack.c.l.b16 %v17
  %v38 = vunpack.c.l.b16 %v18
  %v39 = vunpack.c.l.b16 %v19
  %v40 = vunpack.c.l.b16 %v20
  %v41 = vpack.c.b16 %v38, %v37
  %v42 = vpack.c.b16 %v40, %v39
  %vm45 = vcmask 261120
  %v47 = vsel %vm45, %v32, 0
  %49 = vmatprep.subr.bf16.mxu0 0
  %50 = vmatpush1.bf16.msra.mxu0 %v41
  %51 = vmatprep.subr.bf16.mxu0 0
  %52 = vmatpush1.bf16.msra.mxu0 %v42
  %53 = vmatprep.subr.bf16.mxu0 0
  %54 = vmatpush1.bf16.msra.mxu0 0
  %55 = vmatprep.subr.bf16.mxu0 0
  %56 = vmatpush1.bf16.msra.mxu0 0
  %57 = vmatprep.subr.bf16.mxu0 0
  %58 = vmatpush1.bf16.msra.mxu0 0
  %59 = vmatprep.subr.bf16.mxu0 0
  %60 = vmatpush1.bf16.msra.mxu0 0
  %61 = vmatprep.subr.bf16.mxu0 0
  %62 = vmatpush1.bf16.msra.mxu0 0
  %63 = vmatprep.subr.bf16.mxu0 0
  %64 = vmatpush1.bf16.msra.mxu0 0
  %65 = vmatprep.subr.bf16.mxu0 0
  %66 = vmatpush1.bf16.msra.mxu0 0
  %67 = vmatprep.subr.bf16.mxu0 0
  %68 = vmatpush1.bf16.msra.mxu0 0
  %69 = vmatprep.subr.bf16.mxu0 0
  %70 = vmatpush1.bf16.msra.mxu0 0
  %71 = vmatprep.subr.bf16.mxu0 0
  %72 = vmatpush1.bf16.msra.mxu0 0
  %73 = vmatprep.subr.bf16.mxu0 0
  %74 = vmatpush1.bf16.msra.mxu0 0
  %75 = vmatprep.subr.bf16.mxu0 0
  %76 = vmatpush1.bf16.msra.mxu0 0
  %77 = vmatprep.subr.bf16.mxu0 0
  %78 = vmatpush1.bf16.msra.mxu0 0
  %79 = vmatprep.subr.bf16.mxu0 0
  %80 = vmatpush1.bf16.msra.mxu0 0
  %81 = vmatprep.mubr.bf16.mxu0 0
  %82 = vmatmul.mubr.bf16.gmra.mrb[0].mxu0 %v47
  %v83 = vpop.f32.mrb[0].mxu0
  %v84 = vadd.f32 %v26, %v83
  %v85 = vpop.f32.mrb[0].mxu0
  %v86 = vpop.f32.mrb[0].mxu0
  %v87 = vadd.f32 %v26, %v86
  %v88 = vpop.f32.mrb[0].mxu0
  %89 = vdwg.mxu0
  %v90 = vpack.c.bf16 %v87, %v84
  %v92 = vunpack.c.l.b16 %v90
  %v93 = vunpack.c.h.b16 %v90
  %v94 = vpack.c.b16 %v92, %v92
  %v95 = vpack.c.b16 %v93, %v93
  %vm98 = vcmask 519168
  %99 = vst.msk [vmem:[%s3] sm:$0xf] %vm98, %v94
  %100 = vst.msk [vmem:[%s3 + $0x4] sm:$0xf] %vm98, %v95
  // Predicated region
  $region14: #{_lambda_.19} parent=0 // pred_check
    _
  $region15: #{_lambda_.19} parent=0 // pred_check_branch
    %102 = sbr.rel (0) target = $region17
  $region16: #{_lambda_.19} parent=0 // pred_region
    _
  $region17: #{_lambda_.19} parent=0 // pred_fallthru
    _
  // Predicated region
  $region18: #{_lambda_.19} parent=0 // pred_check
    _
  $region19: #{_lambda_.19} parent=0 // pred_check_branch
    %104 = sbr.rel (0) target = $region21
  $region20: #{_lambda_.19} parent=0 // pred_region
    _
  $region21: #{_lambda_.19} parent=0 // pred_fallthru
    _

// kernel: _lambda_.21
$region0: #{_lambda_.21}
  #allocation0 [shape = 'u32[]', space=smem, size = 0x4, offset = 0x4, fixed_abs, tag = 'smem constant byte address 0x4 - core index']
  #allocation1 [shape = 'u32[144,128]{1,0:T(1,128)}', space=vmem, size = 0x12000, scoped, tag = 'internal scratch']
  %s0 = inlined_call_operand.vmem [shape: bf16[16,576], index: 0, kind: input, shape index: {}]
  %s1 = inlined_call_operand.vmem [shape: bf16[576,64], index: 1, kind: input, shape index: {}]
  %s2 = inlined_call_operand.vmem [shape: f32[1,64], index: 2, kind: input, shape index: {}]
  %s3 = inlined_call_operand.vmem [shape: bf16[16,64], index: 3, kind: input, shape index: {}]
  %s4 = inlined_call_operand.vmem [shape: bf16[16,64], index: 4, kind: output, shape index: {}]
  %s5 = sld [smem:[#allocation0]]
  $region26: #{_lambda_.21} parent=0
    _
  %s7 = ssub.s32 1, %s5
  %s8 = scalar_select 0, %s7, %s5
  // Predicated region
  $region2: #{_lambda_.21} parent=0 // pred_check
    _
  $region3: #{_lambda_.21} parent=0 // pred_check_branch
    %10 = sbr.rel (0) target = $region5
  $region4: #{_lambda_.21} parent=0 // pred_region
    _
  $region5: #{_lambda_.21} parent=0 // pred_fallthru
    _
  // Predicated region
  $region6: #{_lambda_.21} parent=0 // pred_check
    _
  $region7: #{_lambda_.21} parent=0 // pred_check_branch
    %12 = sbr.rel (0) target = $region9
  $region8: #{_lambda_.21} parent=0 // pred_region
    _
  $region9: #{_lambda_.21} parent=0 // pred_fallthru
    _
  // Predicated region
  $region10: #{_lambda_.21} parent=0 // pred_check
    _
  $region11: #{_lambda_.21} parent=0 // pred_check_branch
    %14 = sbr.rel (0) target = $region13
  $region12: #{_lambda_.21} parent=0 // pred_region
    _
  $region13: #{_lambda_.21} parent=0 // pred_fallthru
    _
  // Predicated region
  $region14: #{_lambda_.21} parent=0 // pred_check
    _
  $region15: #{_lambda_.21} parent=0 // pred_check_branch
    %16 = sbr.rel (0) target = $region17
  $region16: #{_lambda_.21} parent=0 // pred_region
    _
  $region17: #{_lambda_.21} parent=0 // pred_fallthru
    _
  %v18 = vld [vmem:[%s0] sm:$0xff]
  %v19 = vld [vmem:[%s0 + $0x8] sm:$0xff]
  %v20 = vld [vmem:[%s0 + $0x10] sm:$0xf]
  %v21 = vld [vmem:[%s0 + $0x14] sm:$0xff]
  %v22 = vld [vmem:[%s0 + $0x1c] sm:$0xff]
  %v23 = vld [vmem:[%s0 + $0x24] sm:$0xf]
  %v24 = vld [vmem:[%s1] sm:$0xf]
  %v25 = vld [vmem:[%s1 + $0x4] sm:$0xf]
  %v26 = vld [vmem:[%s1 + $0x8] sm:$0xf]
  %v27 = vld [vmem:[%s1 + $0xc] sm:$0xf]
  %v28 = vld [vmem:[%s1 + $0x10] sm:$0xf]
  %v29 = vld [vmem:[%s1 + $0x14] sm:$0xf]
  %v30 = vld [vmem:[%s1 + $0x18] sm:$0xf]
  %v31 = vld [vmem:[%s1 + $0x1c] sm:$0xf]
  %v32 = vld [vmem:[%s1 + $0x20] sm:$0xf]
  %v33 = vld [vmem:[%s1 + $0x24] sm:$0xf]
  %v34 = vld [vmem:[%s1 + $0x28] sm:$0xf]
  %v35 = vld [vmem:[%s1 + $0x2c] sm:$0xf]
  %v36 = vld [vmem:[%s1 + $0x30] sm:$0xf]
  %v37 = vld [vmem:[%s1 + $0x34] sm:$0xf]
  %v38 = vld [vmem:[%s1 + $0x38] sm:$0xf]
  %v39 = vld [vmem:[%s1 + $0x3c] sm:$0xf]
  %v40 = vld [vmem:[%s1 + $0x40] sm:$0xf]
  %v41 = vld [vmem:[%s1 + $0x44] sm:$0xf]
  %v42 = vld [vmem:[%s1 + $0x48] sm:$0xf]
  %v43 = vld [vmem:[%s1 + $0x4c] sm:$0xf]
  %v44 = vld [vmem:[%s1 + $0x50] sm:$0xf]
  %v45 = vld [vmem:[%s1 + $0x54] sm:$0xf]
  %v46 = vld [vmem:[%s1 + $0x58] sm:$0xf]
  %v47 = vld [vmem:[%s1 + $0x5c] sm:$0xf]
  %v48 = vld [vmem:[%s1 + $0x60] sm:$0xf]
  %v49 = vld [vmem:[%s1 + $0x64] sm:$0xf]
  %v50 = vld [vmem:[%s1 + $0x68] sm:$0xf]
  %v51 = vld [vmem:[%s1 + $0x6c] sm:$0xf]
  %v52 = vld [vmem:[%s1 + $0x70] sm:$0xf]
  %v53 = vld [vmem:[%s1 + $0x74] sm:$0xf]
  %v54 = vld [vmem:[%s1 + $0x78] sm:$0xf]
  %v55 = vld [vmem:[%s1 + $0x7c] sm:$0xf]
  %v56 = vld [vmem:[%s1 + $0x80] sm:$0xf]
  %v57 = vld [vmem:[%s1 + $0x84] sm:$0xf]
  %v58 = vld [vmem:[%s1 + $0x88] sm:$0xf]
  %v59 = vld [vmem:[%s1 + $0x8c] sm:$0xf]
  %v60 = vld [vmem:[%s1 + $0x90] sm:$0xf]
  %v61 = vld [vmem:[%s1 + $0x94] sm:$0xf]
  %v62 = vld [vmem:[%s1 + $0x98] sm:$0xf]
  %v63 = vld [vmem:[%s1 + $0x9c] sm:$0xf]
  %v64 = vld [vmem:[%s1 + $0xa0] sm:$0xf]
  %v65 = vld [vmem:[%s1 + $0xa4] sm:$0xf]
  %v66 = vld [vmem:[%s1 + $0xa8] sm:$0xf]
  %v67 = vld [vmem:[%s1 + $0xac] sm:$0xf]
  %v68 = vld [vmem:[%s1 + $0xb0] sm:$0xf]
  %v69 = vld [vmem:[%s1 + $0xb4] sm:$0xf]
  %v70 = vld [vmem:[%s1 + $0xb8] sm:$0xf]
  %v71 = vld [vmem:[%s1 + $0xbc] sm:$0xf]
  %v72 = vld [vmem:[%s1 + $0xc0] sm:$0xf]
  %v73 = vld [vmem:[%s1 + $0xc4] sm:$0xf]
  %v74 = vld [vmem:[%s1 + $0xc8] sm:$0xf]
  %v75 = vld [vmem:[%s1 + $0xcc] sm:$0xf]
  %v76 = vld [vmem:[%s1 + $0xd0] sm:$0xf]
  %v77 = vld [vmem:[%s1 + $0xd4] sm:$0xf]
  %v78 = vld [vmem:[%s1 + $0xd8] sm:$0xf]
  %v79 = vld [vmem:[%s1 + $0xdc] sm:$0xf]
  %v80 = vld [vmem:[%s1 + $0xe0] sm:$0xf]
  %v81 = vld [vmem:[%s1 + $0xe4] sm:$0xf]
  %v82 = vld [vmem:[%s1 + $0xe8] sm:$0xf]
  %v83 = vld [vmem:[%s1 + $0xec] sm:$0xf]
  %v84 = vld [vmem:[%s1 + $0xf0] sm:$0xf]
  %v85 = vld [vmem:[%s1 + $0xf4] sm:$0xf]
  %v86 = vld [vmem:[%s1 + $0xf8] sm:$0xf]
  %v87 = vld [vmem:[%s1 + $0xfc] sm:$0xf]
  %v88 = vld [vmem:[%s1 + $0x100] sm:$0xf]
  %v89 = vld [vmem:[%s1 + $0x104] sm:$0xf]
  %v90 = vld [vmem:[%s1 + $0x108] sm:$0xf]
  %v91 = vld [vmem:[%s1 + $0x10c] sm:$0xf]
  %v92 = vld [vmem:[%s1 + $0x110] sm:$0xf]
  %v93 = vld [vmem:[%s1 + $0x114] sm:$0xf]
  %v94 = vld [vmem:[%s1 + $0x118] sm:$0xf]
  %v95 = vld [vmem:[%s1 + $0x11c] sm:$0xf]
  %v96 = vld [vmem:[%s2] sm:$0x1]
  %v98 = vlaneseq
  %v99 = vshrl.u32 %v98, 7
  %v100 = vsub.s32 0, %v99
  %v101 = vrot.slane %v96, %v100
  %v109 = vunpack.c.l.b16 %v18
  %v110 = vunpack.c.h.b16 %v18
  %v111 = vunpack.c.l.b16 %v19
  %v112 = vunpack.c.h.b16 %v19
  %v113 = vunpack.c.l.b16 %v20
  %v114 = vunpack.c.l.b16 %v21
  %v115 = vunpack.c.h.b16 %v21
  %v116 = vunpack.c.l.b16 %v22
  %v117 = vunpack.c.h.b16 %v22
  %v118 = vunpack.c.l.b16 %v23
  %v119 = vpack.c.b16 %v114, %v109
  %v120 = vpack.c.b16 %v115, %v110
  %v121 = vpack.c.b16 %v116, %v111
  %v122 = vpack.c.b16 %v117, %v112
  %v123 = vpack.c.b16 %v118, %v113
  %v200 = vunpack.c.l.b16 %v24
  %v201 = vunpack.c.l.b16 %v25
  %v202 = vunpack.c.l.b16 %v26
  %v203 = vunpack.c.l.b16 %v27
  %v204 = vunpack.c.l.b16 %v28
  %v205 = vunpack.c.l.b16 %v29
  %v206 = vunpack.c.l.b16 %v30
  %v207 = vunpack.c.l.b16 %v31
  %v208 = vunpack.c.l.b16 %v32
  %v209 = vunpack.c.l.b16 %v33
  %v210 = vunpack.c.l.b16 %v34
  %v211 = vunpack.c.l.b16 %v35
  %v212 = vunpack.c.l.b16 %v36
  %v213 = vunpack.c.l.b16 %v37
  %v214 = vunpack.c.l.b16 %v38
  %v215 = vunpack.c.l.b16 %v39
  %v216 = vunpack.c.l.b16 %v40
  %v217 = vunpack.c.l.b16 %v41
  %v218 = vunpack.c.l.b16 %v42
  %v219 = vunpack.c.l.b16 %v43
  %v220 = vunpack.c.l.b16 %v44
  %v221 = vunpack.c.l.b16 %v45
  %v222 = vunpack.c.l.b16 %v46
  %v223 = vunpack.c.l.b16 %v47
  %v224 = vunpack.c.l.b16 %v48
  %v225 = vunpack.c.l.b16 %v49
  %v226 = vunpack.c.l.b16 %v50
  %v227 = vunpack.c.l.b16 %v51
  %v228 = vunpack.c.l.b16 %v52
  %v229 = vunpack.c.l.b16 %v53
  %v230 = vunpack.c.l.b16 %v54
  %v231 = vunpack.c.l.b16 %v55
  %v232 = vunpack.c.l.b16 %v56
  %v233 = vunpack.c.l.b16 %v57
  %v234 = vunpack.c.l.b16 %v58
  %v235 = vunpack.c.l.b16 %v59
  %v236 = vunpack.c.l.b16 %v60
  %v237 = vunpack.c.l.b16 %v61
  %v238 = vunpack.c.l.b16 %v62
  %v239 = vunpack.c.l.b16 %v63
  %v240 = vunpack.c.l.b16 %v64
  %v241 = vunpack.c.l.b16 %v65
  %v242 = vunpack.c.l.b16 %v66
  %v243 = vunpack.c.l.b16 %v67
  %v244 = vunpack.c.l.b16 %v68
  %v245 = vunpack.c.l.b16 %v69
  %v246 = vunpack.c.l.b16 %v70
  %v247 = vunpack.c.l.b16 %v71
  %v248 = vunpack.c.l.b16 %v72
  %v249 = vunpack.c.l.b16 %v73
  %v250 = vunpack.c.l.b16 %v74
  %v251 = vunpack.c.l.b16 %v75
  %v252 = vunpack.c.l.b16 %v76
  %v253 = vunpack.c.l.b16 %v77
  %v254 = vunpack.c.l.b16 %v78
  %v255 = vunpack.c.l.b16 %v79
  %v256 = vunpack.c.l.b16 %v80
  %v257 = vunpack.c.l.b16 %v81
  %v258 = vunpack.c.l.b16 %v82
  %v259 = vunpack.c.l.b16 %v83
  %v260 = vunpack.c.l.b16 %v84
  %v261 = vunpack.c.l.b16 %v85
  %v262 = vunpack.c.l.b16 %v86
  %v263 = vunpack.c.l.b16 %v87
  %v264 = vunpack.c.l.b16 %v88
  %v265 = vunpack.c.l.b16 %v89
  %v266 = vunpack.c.l.b16 %v90
  %v267 = vunpack.c.l.b16 %v91
  %v268 = vunpack.c.l.b16 %v92
  %v269 = vunpack.c.l.b16 %v93
  %v270 = vunpack.c.l.b16 %v94
  %v271 = vunpack.c.l.b16 %v95
  %v272 = vpack.c.b16 %v201, %v200
  %v273 = vpack.c.b16 %v203, %v202
  %v274 = vpack.c.b16 %v205, %v204
  %v275 = vpack.c.b16 %v207, %v206
  %v276 = vpack.c.b16 %v209, %v208
  %v277 = vpack.c.b16 %v211, %v210
  %v278 = vpack.c.b16 %v213, %v212
  %v279 = vpack.c.b16 %v215, %v214
  %v280 = vpack.c.b16 %v217, %v216
  %v281 = vpack.c.b16 %v219, %v218
  %v282 = vpack.c.b16 %v221, %v220
  %v283 = vpack.c.b16 %v223, %v222
  %v284 = vpack.c.b16 %v225, %v224
  %v285 = vpack.c.b16 %v227, %v226
  %v286 = vpack.c.b16 %v229, %v228
  %v287 = vpack.c.b16 %v231, %v230
  %v288 = vpack.c.b16 %v233, %v232
  %v289 = vpack.c.b16 %v235, %v234
  %v290 = vpack.c.b16 %v237, %v236
  %v291 = vpack.c.b16 %v239, %v238
  %v292 = vpack.c.b16 %v241, %v240
  %v293 = vpack.c.b16 %v243, %v242
  %v294 = vpack.c.b16 %v245, %v244
  %v295 = vpack.c.b16 %v247, %v246
  %v296 = vpack.c.b16 %v249, %v248
  %v297 = vpack.c.b16 %v251, %v250
  %v298 = vpack.c.b16 %v253, %v252
  %v299 = vpack.c.b16 %v255, %v254
  %v300 = vpack.c.b16 %v257, %v256
  %v301 = vpack.c.b16 %v259, %v258
  %v302 = vpack.c.b16 %v261, %v260
  %v303 = vpack.c.b16 %v263, %v262
  %v304 = vpack.c.b16 %v265, %v264
  %v305 = vpack.c.b16 %v267, %v266
  %v306 = vpack.c.b16 %v269, %v268
  %v307 = vpack.c.b16 %v271, %v270
  %vm344 = vcmask 523264
  %v346 = vsel %vm344, %v123, 0
  %348 = vmatprep.subr.bf16.mxu0 0
  %349 = vmatpush1.bf16.msra.mxu0 %v272
  %350 = vmatprep.subr.bf16.mxu0 0
  %351 = vmatpush1.bf16.msra.mxu0 %v273
  %352 = vmatprep.subr.bf16.mxu0 0
  %353 = vmatpush1.bf16.msra.mxu0 %v274
  %354 = vmatprep.subr.bf16.mxu0 0
  %355 = vmatpush1.bf16.msra.mxu0 %v275
  %356 = vmatprep.subr.bf16.mxu0 0
  %357 = vmatpush1.bf16.msra.mxu0 %v276
  %358 = vmatprep.subr.bf16.mxu0 0
  %359 = vmatpush1.bf16.msra.mxu0 %v277
  %360 = vmatprep.subr.bf16.mxu0 0
  %361 = vmatpush1.bf16.msra.mxu0 %v278
  %362 = vmatprep.subr.bf16.mxu0 0
  %363 = vmatpush1.bf16.msra.mxu0 %v279
  %364 = vmatprep.subr.bf16.mxu0 0
  %365 = vmatpush1.bf16.msra.mxu0 %v280
  %366 = vmatprep.subr.bf16.mxu0 0
  %367 = vmatpush1.bf16.msra.mxu0 %v281
  %368 = vmatprep.subr.bf16.mxu0 0
  %369 = vmatpush1.bf16.msra.mxu0 %v282
  %370 = vmatprep.subr.bf16.mxu0 0
  %371 = vmatpush1.bf16.msra.mxu0 %v283
  %372 = vmatprep.subr.bf16.mxu0 0
  %373 = vmatpush1.bf16.msra.mxu0 %v284
  %374 = vmatprep.subr.bf16.mxu0 0
  %375 = vmatpush1.bf16.msra.mxu0 %v285
  %376 = vmatprep.subr.bf16.mxu0 0
  %377 = vmatpush1.bf16.msra.mxu0 %v286
  %378 = vmatprep.subr.bf16.mxu0 0
  %379 = vmatpush1.bf16.msra.mxu0 %v287
  %380 = vmatprep.mubr.bf16.mxu0 %v120
  %381 = vmatmul.mubr.bf16.gmra.mrb[0].mxu0 %v119
  %v382 = vpop.f32.mrb[0].mxu0
  %v383 = vadd.f32 %v101, %v382
  %v384 = vpop.f32.mrb[0].mxu0
  %v385 = vpop.f32.mrb[0].mxu0
  %v386 = vadd.f32 %v101, %v385
  %v387 = vpop.f32.mrb[0].mxu0
  %388 = vdwg.mxu0
  %389 = vmatprep.subr.bf16.mxu0 0
  %390 = vmatpush1.bf16.msra.mxu0 %v288
  %391 = vmatprep.subr.bf16.mxu0 0
  %392 = vmatpush1.bf16.msra.mxu0 %v289
  %393 = vmatprep.subr.bf16.mxu0 0
  %394 = vmatpush1.bf16.msra.mxu0 %v290
  %395 = vmatprep.subr.bf16.mxu0 0
  %396 = vmatpush1.bf16.msra.mxu0 %v291
  %397 = vmatprep.subr.bf16.mxu0 0
  %398 = vmatpush1.bf16.msra.mxu0 %v292
  %399 = vmatprep.subr.bf16.mxu0 0
  %400 = vmatpush1.bf16.msra.mxu0 %v293
  %401 = vmatprep.subr.bf16.mxu0 0
  %402 = vmatpush1.bf16.msra.mxu0 %v294
  %403 = vmatprep.subr.bf16.mxu0 0
  %404 = vmatpush1.bf16.msra.mxu0 %v295
  %405 = vmatprep.subr.bf16.mxu0 0
  %406 = vmatpush1.bf16.msra.mxu0 %v296
  %407 = vmatprep.subr.bf16.mxu0 0
  %408 = vmatpush1.bf16.msra.mxu0 %v297
  %409 = vmatprep.subr.bf16.mxu0 0
  %410 = vmatpush1.bf16.msra.mxu0 %v298
  %411 = vmatprep.subr.bf16.mxu0 0
  %412 = vmatpush1.bf16.msra.mxu0 %v299
  %413 = vmatprep.subr.bf16.mxu0 0
  %414 = vmatpush1.bf16.msra.mxu0 %v300
  %415 = vmatprep.subr.bf16.mxu0 0
  %416 = vmatpush1.bf16.msra.mxu0 %v301
  %417 = vmatprep.subr.bf16.mxu0 0
  %418 = vmatpush1.bf16.msra.mxu0 %v302
  %419 = vmatprep.subr.bf16.mxu0 0
  %420 = vmatpush1.bf16.msra.mxu0 %v303
  %421 = vmatprep.mubr.bf16.mxu0 %v122
  %422 = vmatmul.mubr.bf16.gmra.mrb[0].mxu0 %v121
  %v423 = vpop.f32.mrb[0].mxu0
  %v424 = vadd.f32 %v383, %v423
  %v425 = vpop.f32.mrb[0].mxu0
  %v426 = vpop.f32.mrb[0].mxu0
  %v427 = vadd.f32 %v386, %v426
  %v428 = vpop.f32.mrb[0].mxu0
  %429 = vdwg.mxu0
  %430 = vmatprep.subr.bf16.mxu0 0
  %431 = vmatpush1.bf16.msra.mxu0 %v304
  %432 = vmatprep.subr.bf16.mxu0 0
  %433 = vmatpush1.bf16.msra.mxu0 %v305
  %434 = vmatprep.subr.bf16.mxu0 0
  %435 = vmatpush1.bf16.msra.mxu0 %v306
  %436 = vmatprep.subr.bf16.mxu0 0
  %437 = vmatpush1.bf16.msra.mxu0 %v307
  %438 = vmatprep.subr.bf16.mxu0 0
  %439 = vmatpush1.bf16.msra.mxu0 0
  %440 = vmatprep.subr.bf16.mxu0 0
  %441 = vmatpush1.bf16.msra.mxu0 0
  %442 = vmatprep.subr.bf16.mxu0 0
  %443 = vmatpush1.bf16.msra.mxu0 0
  %444 = vmatprep.subr.bf16.mxu0 0
  %445 = vmatpush1.bf16.msra.mxu0 0
  %446 = vmatprep.subr.bf16.mxu0 0
  %447 = vmatpush1.bf16.msra.mxu0 0
  %448 = vmatprep.subr.bf16.mxu0 0
  %449 = vmatpush1.bf16.msra.mxu0 0
  %450 = vmatprep.subr.bf16.mxu0 0
  %451 = vmatpush1.bf16.msra.mxu0 0
  %452 = vmatprep.subr.bf16.mxu0 0
  %453 = vmatpush1.bf16.msra.mxu0 0
  %454 = vmatprep.subr.bf16.mxu0 0
  %455 = vmatpush1.bf16.msra.mxu0 0
  %456 = vmatprep.subr.bf16.mxu0 0
  %457 = vmatpush1.bf16.msra.mxu0 0
  %458 = vmatprep.subr.bf16.mxu0 0
  %459 = vmatpush1.bf16.msra.mxu0 0
  %460 = vmatprep.subr.bf16.mxu0 0
  %461 = vmatpush1.bf16.msra.mxu0 0
  %462 = vmatprep.mubr.bf16.mxu0 0
  %463 = vmatmul.mubr.bf16.gmra.mrb[0].mxu0 %v346
  %v464 = vpop.f32.mrb[0].mxu0
  %v465 = vadd.f32 %v424, %v464
  %v466 = vpop.f32.mrb[0].mxu0
  %v467 = vpop.f32.mrb[0].mxu0
  %v468 = vadd.f32 %v427, %v467
  %v469 = vpop.f32.mrb[0].mxu0
  %470 = vdwg.mxu0
  %v471 = vld [vmem:[%s3] sm:$0xf]
  %v472 = vld [vmem:[%s3 + $0x4] sm:$0xf]
  %v473 = vunpack.c.l.bf16 %v471
  %v474 = vunpack.c.l.bf16 %v472
  %v475 = vadd.f32 %v465, %v473
  %v476 = vadd.f32 %v468, %v474
  %v477 = vmax.f32 %v475, 0.0
  %v478 = vmax.f32 %v476, 0.0
  %v479 = vpack.c.bf16 %v478, %v477
  %v481 = vunpack.c.l.b16 %v479
  %v482 = vunpack.c.h.b16 %v479
  %v483 = vpack.c.b16 %v481, %v481
  %v484 = vpack.c.b16 %v482, %v482
  %vm487 = vcmask 519168
  %488 = vst.msk [vmem:[%s4] sm:$0xf] %vm487, %v483
  %489 = vst.msk [vmem:[%s4 + $0x4] sm:$0xf] %vm487, %v484
  // Predicated region
  $region18: #{_lambda_.21} parent=0 // pred_check
    _
  $region19: #{_lambda_.21} parent=0 // pred_check_branch
    %491 = sbr.rel (0) target = $region21
  $region20: #{_lambda_.21} parent=0 // pred_region
    _
  $region21: #{_lambda_.21} parent=0 // pred_fallthru
    _
  // Predicated region
  $region22: #{_lambda_.21} parent=0 // pred_check
    _
  $region23: #{_lambda_.21} parent=0 // pred_check_branch
    %493 = sbr.rel (0) target = $region25
  $region24: #{_lambda_.21} parent=0 // pred_region
    _
  $region25: #{_lambda_.21} parent=0 // pred_fallthru
    _

// kernel: _lambda_.23
$region0: #{_lambda_.23}
  #allocation0 [shape = 'u32[]', space=smem, size = 0x4, offset = 0x4, fixed_abs, tag = 'smem constant byte address 0x4 - core index']
  #allocation1 [shape = 'u32[144,128]{1,0:T(1,128)}', space=vmem, size = 0x12000, scoped, tag = 'internal scratch']
  %s0 = inlined_call_operand.vmem [shape: bf16[16,576], index: 0, kind: input, shape index: {}]
  %s1 = inlined_call_operand.vmem [shape: bf16[576,128], index: 1, kind: input, shape index: {}]
  %s2 = inlined_call_operand.vmem [shape: f32[1,128], index: 2, kind: input, shape index: {}]
  %s3 = inlined_call_operand.vmem [shape: bf16[16,128], index: 3, kind: output, shape index: {}]
  %s4 = sld [smem:[#allocation0]]
  $region22: #{_lambda_.23} parent=0
    _
  %s6 = ssub.s32 1, %s4
  %s7 = scalar_select 0, %s6, %s4
  // Predicated region
  $region2: #{_lambda_.23} parent=0 // pred_check
    _
  $region3: #{_lambda_.23} parent=0 // pred_check_branch
    %9 = sbr.rel (0) target = $region5
  $region4: #{_lambda_.23} parent=0 // pred_region
    _
  $region5: #{_lambda_.23} parent=0 // pred_fallthru
    _
  // Predicated region
  $region6: #{_lambda_.23} parent=0 // pred_check
    _
  $region7: #{_lambda_.23} parent=0 // pred_check_branch
    %11 = sbr.rel (0) target = $region9
  $region8: #{_lambda_.23} parent=0 // pred_region
    _
  $region9: #{_lambda_.23} parent=0 // pred_fallthru
    _
  // Predicated region
  $region10: #{_lambda_.23} parent=0 // pred_check
    _
  $region11: #{_lambda_.23} parent=0 // pred_check_branch
    %13 = sbr.rel (0) target = $region13
  $region12: #{_lambda_.23} parent=0 // pred_region
    _
  $region13: #{_lambda_.23} parent=0 // pred_fallthru
    _
  %v15 = vld [vmem:[%s0] sm:$0xff]
  %v16 = vld [vmem:[%s0 + $0x8] sm:$0xff]
  %v17 = vld [vmem:[%s0 + $0x10] sm:$0xf]
  %v18 = vld [vmem:[%s0 + $0x14] sm:$0xff]
  %v19 = vld [vmem:[%s0 + $0x1c] sm:$0xff]
  %v20 = vld [vmem:[%s0 + $0x24] sm:$0xf]
  %v21 = vld [vmem:[%s1] sm:$0xf]
  %v22 = vld [vmem:[%s1 + $0x4] sm:$0xf]
  %v23 = vld [vmem:[%s1 + $0x8] sm:$0xf]
  %v24 = vld [vmem:[%s1 + $0xc] sm:$0xf]
  %v25 = vld [vmem:[%s1 + $0x10] sm:$0xf]
  %v26 = vld [vmem:[%s1 + $0x14] sm:$0xf]
  %v27 = vld [vmem:[%s1 + $0x18] sm:$0xf]
  %v28 = vld [vmem:[%s1 + $0x1c] sm:$0xf]
  %v29 = vld [vmem:[%s1 + $0x20] sm:$0xf]
  %v30 = vld [vmem:[%s1 + $0x24] sm:$0xf]
  %v31 = vld [vmem:[%s1 + $0x28] sm:$0xf]
  %v32 = vld [vmem:[%s1 + $0x2c] sm:$0xf]
  %v33 = vld [vmem:[%s1 + $0x30] sm:$0xf]
  %v34 = vld [vmem:[%s1 + $0x34] sm:$0xf]
  %v35 = vld [vmem:[%s1 + $0x38] sm:$0xf]
  %v36 = vld [vmem:[%s1 + $0x3c] sm:$0xf]
  %v37 = vld [vmem:[%s1 + $0x40] sm:$0xf]
  %v38 = vld [vmem:[%s1 + $0x44] sm:$0xf]
  %v39 = vld [vmem:[%s1 + $0x48] sm:$0xf]
  %v40 = vld [vmem:[%s1 + $0x4c] sm:$0xf]
  %v41 = vld [vmem:[%s1 + $0x50] sm:$0xf]
  %v42 = vld [vmem:[%s1 + $0x54] sm:$0xf]
  %v43 = vld [vmem:[%s1 + $0x58] sm:$0xf]
  %v44 = vld [vmem:[%s1 + $0x5c] sm:$0xf]
  %v45 = vld [vmem:[%s1 + $0x60] sm:$0xf]
  %v46 = vld [vmem:[%s1 + $0x64] sm:$0xf]
  %v47 = vld [vmem:[%s1 + $0x68] sm:$0xf]
  %v48 = vld [vmem:[%s1 + $0x6c] sm:$0xf]
  %v49 = vld [vmem:[%s1 + $0x70] sm:$0xf]
  %v50 = vld [vmem:[%s1 + $0x74] sm:$0xf]
  %v51 = vld [vmem:[%s1 + $0x78] sm:$0xf]
  %v52 = vld [vmem:[%s1 + $0x7c] sm:$0xf]
  %v53 = vld [vmem:[%s1 + $0x80] sm:$0xf]
  %v54 = vld [vmem:[%s1 + $0x84] sm:$0xf]
  %v55 = vld [vmem:[%s1 + $0x88] sm:$0xf]
  %v56 = vld [vmem:[%s1 + $0x8c] sm:$0xf]
  %v57 = vld [vmem:[%s1 + $0x90] sm:$0xf]
  %v58 = vld [vmem:[%s1 + $0x94] sm:$0xf]
  %v59 = vld [vmem:[%s1 + $0x98] sm:$0xf]
  %v60 = vld [vmem:[%s1 + $0x9c] sm:$0xf]
  %v61 = vld [vmem:[%s1 + $0xa0] sm:$0xf]
  %v62 = vld [vmem:[%s1 + $0xa4] sm:$0xf]
  %v63 = vld [vmem:[%s1 + $0xa8] sm:$0xf]
  %v64 = vld [vmem:[%s1 + $0xac] sm:$0xf]
  %v65 = vld [vmem:[%s1 + $0xb0] sm:$0xf]
  %v66 = vld [vmem:[%s1 + $0xb4] sm:$0xf]
  %v67 = vld [vmem:[%s1 + $0xb8] sm:$0xf]
  %v68 = vld [vmem:[%s1 + $0xbc] sm:$0xf]
  %v69 = vld [vmem:[%s1 + $0xc0] sm:$0xf]
  %v70 = vld [vmem:[%s1 + $0xc4] sm:$0xf]
  %v71 = vld [vmem:[%s1 + $0xc8] sm:$0xf]
  %v72 = vld [vmem:[%s1 + $0xcc] sm:$0xf]
  %v73 = vld [vmem:[%s1 + $0xd0] sm:$0xf]
  %v74 = vld [vmem:[%s1 + $0xd4] sm:$0xf]
  %v75 = vld [vmem:[%s1 + $0xd8] sm:$0xf]
  %v76 = vld [vmem:[%s1 + $0xdc] sm:$0xf]
  %v77 = vld [vmem:[%s1 + $0xe0] sm:$0xf]
  %v78 = vld [vmem:[%s1 + $0xe4] sm:$0xf]
  %v79 = vld [vmem:[%s1 + $0xe8] sm:$0xf]
  %v80 = vld [vmem:[%s1 + $0xec] sm:$0xf]
  %v81 = vld [vmem:[%s1 + $0xf0] sm:$0xf]
  %v82 = vld [vmem:[%s1 + $0xf4] sm:$0xf]
  %v83 = vld [vmem:[%s1 + $0xf8] sm:$0xf]
  %v84 = vld [vmem:[%s1 + $0xfc] sm:$0xf]
  %v85 = vld [vmem:[%s1 + $0x100] sm:$0xf]
  %v86 = vld [vmem:[%s1 + $0x104] sm:$0xf]
  %v87 = vld [vmem:[%s1 + $0x108] sm:$0xf]
  %v88 = vld [vmem:[%s1 + $0x10c] sm:$0xf]
  %v89 = vld [vmem:[%s1 + $0x110] sm:$0xf]
  %v90 = vld [vmem:[%s1 + $0x114] sm:$0xf]
  %v91 = vld [vmem:[%s1 + $0x118] sm:$0xf]
  %v92 = vld [vmem:[%s1 + $0x11c] sm:$0xf]
  %v93 = vld [vmem:[%s2] sm:$0x1]
  %v95 = vlaneseq
  %v96 = vshrl.u32 %v95, 7
  %v97 = vsub.s32 0, %v96
  %v98 = vrot.slane %v93, %v97
  %v106 = vunpack.c.l.b16 %v15
  %v107 = vunpack.c.h.b16 %v15
  %v108 = vunpack.c.l.b16 %v16
  %v109 = vunpack.c.h.b16 %v16
  %v110 = vunpack.c.l.b16 %v17
  %v111 = vunpack.c.l.b16 %v18
  %v112 = vunpack.c.h.b16 %v18
  %v113 = vunpack.c.l.b16 %v19
  %v114 = vunpack.c.h.b16 %v19
  %v115 = vunpack.c.l.b16 %v20
  %v116 = vpack.c.b16 %v111, %v106
  %v117 = vpack.c.b16 %v112, %v107
  %v118 = vpack.c.b16 %v113, %v108
  %v119 = vpack.c.b16 %v114, %v109
  %v120 = vpack.c.b16 %v115, %v110
  %v197 = vunpack.c.l.b16 %v21
  %v198 = vunpack.c.l.b16 %v22
  %v199 = vunpack.c.l.b16 %v23
  %v200 = vunpack.c.l.b16 %v24
  %v201 = vunpack.c.l.b16 %v25
  %v202 = vunpack.c.l.b16 %v26
  %v203 = vunpack.c.l.b16 %v27
  %v204 = vunpack.c.l.b16 %v28
  %v205 = vunpack.c.l.b16 %v29
  %v206 = vunpack.c.l.b16 %v30
  %v207 = vunpack.c.l.b16 %v31
  %v208 = vunpack.c.l.b16 %v32
  %v209 = vunpack.c.l.b16 %v33
  %v210 = vunpack.c.l.b16 %v34
  %v211 = vunpack.c.l.b16 %v35
  %v212 = vunpack.c.l.b16 %v36
  %v213 = vunpack.c.l.b16 %v37
  %v214 = vunpack.c.l.b16 %v38
  %v215 = vunpack.c.l.b16 %v39
  %v216 = vunpack.c.l.b16 %v40
  %v217 = vunpack.c.l.b16 %v41
  %v218 = vunpack.c.l.b16 %v42
  %v219 = vunpack.c.l.b16 %v43
  %v220 = vunpack.c.l.b16 %v44
  %v221 = vunpack.c.l.b16 %v45
  %v222 = vunpack.c.l.b16 %v46
  %v223 = vunpack.c.l.b16 %v47
  %v224 = vunpack.c.l.b16 %v48
  %v225 = vunpack.c.l.b16 %v49
  %v226 = vunpack.c.l.b16 %v50
  %v227 = vunpack.c.l.b16 %v51
  %v228 = vunpack.c.l.b16 %v52
  %v229 = vunpack.c.l.b16 %v53
  %v230 = vunpack.c.l.b16 %v54
  %v231 = vunpack.c.l.b16 %v55
  %v232 = vunpack.c.l.b16 %v56
  %v233 = vunpack.c.l.b16 %v57
  %v234 = vunpack.c.l.b16 %v58
  %v235 = vunpack.c.l.b16 %v59
  %v236 = vunpack.c.l.b16 %v60
  %v237 = vunpack.c.l.b16 %v61
  %v238 = vunpack.c.l.b16 %v62
  %v239 = vunpack.c.l.b16 %v63
  %v240 = vunpack.c.l.b16 %v64
  %v241 = vunpack.c.l.b16 %v65
  %v242 = vunpack.c.l.b16 %v66
  %v243 = vunpack.c.l.b16 %v67
  %v244 = vunpack.c.l.b16 %v68
  %v245 = vunpack.c.l.b16 %v69
  %v246 = vunpack.c.l.b16 %v70
  %v247 = vunpack.c.l.b16 %v71
  %v248 = vunpack.c.l.b16 %v72
  %v249 = vunpack.c.l.b16 %v73
  %v250 = vunpack.c.l.b16 %v74
  %v251 = vunpack.c.l.b16 %v75
  %v252 = vunpack.c.l.b16 %v76
  %v253 = vunpack.c.l.b16 %v77
  %v254 = vunpack.c.l.b16 %v78
  %v255 = vunpack.c.l.b16 %v79
  %v256 = vunpack.c.l.b16 %v80
  %v257 = vunpack.c.l.b16 %v81
  %v258 = vunpack.c.l.b16 %v82
  %v259 = vunpack.c.l.b16 %v83
  %v260 = vunpack.c.l.b16 %v84
  %v261 = vunpack.c.l.b16 %v85
  %v262 = vunpack.c.l.b16 %v86
  %v263 = vunpack.c.l.b16 %v87
  %v264 = vunpack.c.l.b16 %v88
  %v265 = vunpack.c.l.b16 %v89
  %v266 = vunpack.c.l.b16 %v90
  %v267 = vunpack.c.l.b16 %v91
  %v268 = vunpack.c.l.b16 %v92
  %v269 = vpack.c.b16 %v198, %v197
  %v270 = vpack.c.b16 %v200, %v199
  %v271 = vpack.c.b16 %v202, %v201
  %v272 = vpack.c.b16 %v204, %v203
  %v273 = vpack.c.b16 %v206, %v205
  %v274 = vpack.c.b16 %v208, %v207
  %v275 = vpack.c.b16 %v210, %v209
  %v276 = vpack.c.b16 %v212, %v211
  %v277 = vpack.c.b16 %v214, %v213
  %v278 = vpack.c.b16 %v216, %v215
  %v279 = vpack.c.b16 %v218, %v217
  %v280 = vpack.c.b16 %v220, %v219
  %v281 = vpack.c.b16 %v222, %v221
  %v282 = vpack.c.b16 %v224, %v223
  %v283 = vpack.c.b16 %v226, %v225
  %v284 = vpack.c.b16 %v228, %v227
  %v285 = vpack.c.b16 %v230, %v229
  %v286 = vpack.c.b16 %v232, %v231
  %v287 = vpack.c.b16 %v234, %v233
  %v288 = vpack.c.b16 %v236, %v235
  %v289 = vpack.c.b16 %v238, %v237
  %v290 = vpack.c.b16 %v240, %v239
  %v291 = vpack.c.b16 %v242, %v241
  %v292 = vpack.c.b16 %v244, %v243
  %v293 = vpack.c.b16 %v246, %v245
  %v294 = vpack.c.b16 %v248, %v247
  %v295 = vpack.c.b16 %v250, %v249
  %v296 = vpack.c.b16 %v252, %v251
  %v297 = vpack.c.b16 %v254, %v253
  %v298 = vpack.c.b16 %v256, %v255
  %v299 = vpack.c.b16 %v258, %v257
  %v300 = vpack.c.b16 %v260, %v259
  %v301 = vpack.c.b16 %v262, %v261
  %v302 = vpack.c.b16 %v264, %v263
  %v303 = vpack.c.b16 %v266, %v265
  %v304 = vpack.c.b16 %v268, %v267
  %vm341 = vcmask 523264
  %v343 = vsel %vm341, %v120, 0
  %345 = vmatprep.subr.bf16.mxu0 0
  %346 = vmatpush1.bf16.msra.mxu0 %v269
  %347 = vmatprep.subr.bf16.mxu0 0
  %348 = vmatpush1.bf16.msra.mxu0 %v270
  %349 = vmatprep.subr.bf16.mxu0 0
  %350 = vmatpush1.bf16.msra.mxu0 %v271
  %351 = vmatprep.subr.bf16.mxu0 0
  %352 = vmatpush1.bf16.msra.mxu0 %v272
  %353 = vmatprep.subr.bf16.mxu0 0
  %354 = vmatpush1.bf16.msra.mxu0 %v273
  %355 = vmatprep.subr.bf16.mxu0 0
  %356 = vmatpush1.bf16.msra.mxu0 %v274
  %357 = vmatprep.subr.bf16.mxu0 0
  %358 = vmatpush1.bf16.msra.mxu0 %v275
  %359 = vmatprep.subr.bf16.mxu0 0
  %360 = vmatpush1.bf16.msra.mxu0 %v276
  %361 = vmatprep.subr.bf16.mxu0 0
  %362 = vmatpush1.bf16.msra.mxu0 %v277
  %363 = vmatprep.subr.bf16.mxu0 0
  %364 = vmatpush1.bf16.msra.mxu0 %v278
  %365 = vmatprep.subr.bf16.mxu0 0
  %366 = vmatpush1.bf16.msra.mxu0 %v279
  %367 = vmatprep.subr.bf16.mxu0 0
  %368 = vmatpush1.bf16.msra.mxu0 %v280
  %369 = vmatprep.subr.bf16.mxu0 0
  %370 = vmatpush1.bf16.msra.mxu0 %v281
  %371 = vmatprep.subr.bf16.mxu0 0
  %372 = vmatpush1.bf16.msra.mxu0 %v282
  %373 = vmatprep.subr.bf16.mxu0 0
  %374 = vmatpush1.bf16.msra.mxu0 %v283
  %375 = vmatprep.subr.bf16.mxu0 0
  %376 = vmatpush1.bf16.msra.mxu0 %v284
  %377 = vmatprep.mubr.bf16.mxu0 %v117
  %378 = vmatmul.mubr.bf16.gmra.mrb[0].mxu0 %v116
  %v379 = vpop.f32.mrb[0].mxu0
  %v380 = vadd.f32 %v98, %v379
  %v381 = vpop.f32.mrb[0].mxu0
  %v382 = vpop.f32.mrb[0].mxu0
  %v383 = vadd.f32 %v98, %v382
  %v384 = vpop.f32.mrb[0].mxu0
  %385 = vdwg.mxu0
  %386 = vmatprep.subr.bf16.mxu0 0
  %387 = vmatpush1.bf16.msra.mxu0 %v285
  %388 = vmatprep.subr.bf16.mxu0 0
  %389 = vmatpush1.bf16.msra.mxu0 %v286
  %390 = vmatprep.subr.bf16.mxu0 0
  %391 = vmatpush1.bf16.msra.mxu0 %v287
  %392 = vmatprep.subr.bf16.mxu0 0
  %393 = vmatpush1.bf16.msra.mxu0 %v288
  %394 = vmatprep.subr.bf16.mxu0 0
  %395 = vmatpush1.bf16.msra.mxu0 %v289
  %396 = vmatprep.subr.bf16.mxu0 0
  %397 = vmatpush1.bf16.msra.mxu0 %v290
  %398 = vmatprep.subr.bf16.mxu0 0
  %399 = vmatpush1.bf16.msra.mxu0 %v291
  %400 = vmatprep.subr.bf16.mxu0 0
  %401 = vmatpush1.bf16.msra.mxu0 %v292
  %402 = vmatprep.subr.bf16.mxu0 0
  %403 = vmatpush1.bf16.msra.mxu0 %v293
  %404 = vmatprep.subr.bf16.mxu0 0
  %405 = vmatpush1.bf16.msra.mxu0 %v294
  %406 = vmatprep.subr.bf16.mxu0 0
  %407 = vmatpush1.bf16.msra.mxu0 %v295
  %408 = vmatprep.subr.bf16.mxu0 0
  %409 = vmatpush1.bf16.msra.mxu0 %v296
  %410 = vmatprep.subr.bf16.mxu0 0
  %411 = vmatpush1.bf16.msra.mxu0 %v297
  %412 = vmatprep.subr.bf16.mxu0 0
  %413 = vmatpush1.bf16.msra.mxu0 %v298
  %414 = vmatprep.subr.bf16.mxu0 0
  %415 = vmatpush1.bf16.msra.mxu0 %v299
  %416 = vmatprep.subr.bf16.mxu0 0
  %417 = vmatpush1.bf16.msra.mxu0 %v300
  %418 = vmatprep.mubr.bf16.mxu0 %v119
  %419 = vmatmul.mubr.bf16.gmra.mrb[0].mxu0 %v118
  %v420 = vpop.f32.mrb[0].mxu0
  %v421 = vadd.f32 %v380, %v420
  %v422 = vpop.f32.mrb[0].mxu0
  %v423 = vpop.f32.mrb[0].mxu0
  %v424 = vadd.f32 %v383, %v423
  %v425 = vpop.f32.mrb[0].mxu0
  %426 = vdwg.mxu0
  %427 = vmatprep.subr.bf16.mxu0 0
  %428 = vmatpush1.bf16.msra.mxu0 %v301
  %429 = vmatprep.subr.bf16.mxu0 0
  %430 = vmatpush1.bf16.msra.mxu0 %v302
  %431 = vmatprep.subr.bf16.mxu0 0
  %432 = vmatpush1.bf16.msra.mxu0 %v303
  %433 = vmatprep.subr.bf16.mxu0 0
  %434 = vmatpush1.bf16.msra.mxu0 %v304
  %435 = vmatprep.subr.bf16.mxu0 0
  %436 = vmatpush1.bf16.msra.mxu0 0
  %437 = vmatprep.subr.bf16.mxu0 0
  %438 = vmatpush1.bf16.msra.mxu0 0
  %439 = vmatprep.subr.bf16.mxu0 0
  %440 = vmatpush1.bf16.msra.mxu0 0
  %441 = vmatprep.subr.bf16.mxu0 0
  %442 = vmatpush1.bf16.msra.mxu0 0
  %443 = vmatprep.subr.bf16.mxu0 0
  %444 = vmatpush1.bf16.msra.mxu0 0
  %445 = vmatprep.subr.bf16.mxu0 0
  %446 = vmatpush1.bf16.msra.mxu0 0
  %447 = vmatprep.subr.bf16.mxu0 0
  %448 = vmatpush1.bf16.msra.mxu0 0
  %449 = vmatprep.subr.bf16.mxu0 0
  %450 = vmatpush1.bf16.msra.mxu0 0
  %451 = vmatprep.subr.bf16.mxu0 0
  %452 = vmatpush1.bf16.msra.mxu0 0
  %453 = vmatprep.subr.bf16.mxu0 0
  %454 = vmatpush1.bf16.msra.mxu0 0
  %455 = vmatprep.subr.bf16.mxu0 0
  %456 = vmatpush1.bf16.msra.mxu0 0
  %457 = vmatprep.subr.bf16.mxu0 0
  %458 = vmatpush1.bf16.msra.mxu0 0
  %459 = vmatprep.mubr.bf16.mxu0 0
  %460 = vmatmul.mubr.bf16.gmra.mrb[0].mxu0 %v343
  %v461 = vpop.f32.mrb[0].mxu0
  %v462 = vadd.f32 %v421, %v461
  %v463 = vpop.f32.mrb[0].mxu0
  %v464 = vpop.f32.mrb[0].mxu0
  %v465 = vadd.f32 %v424, %v464
  %v466 = vpop.f32.mrb[0].mxu0
  %467 = vdwg.mxu0
  %v468 = vmax.f32 %v462, 0.0
  %v469 = vmax.f32 %v465, 0.0
  %v470 = vpack.c.bf16 %v469, %v468
  %v472 = vunpack.c.l.b16 %v470
  %v473 = vunpack.c.h.b16 %v470
  %v474 = vpack.c.b16 %v472, %v472
  %v475 = vpack.c.b16 %v473, %v473
  %478 = vst [vmem:[%s3] sm:$0xf] %v474
  %479 = vst [vmem:[%s3 + $0x4] sm:$0xf] %v475
  // Predicated region
  $region14: #{_lambda_.23} parent=0 // pred_check
    _
  $region15: #{_lambda_.23} parent=0 // pred_check_branch
    %481 = sbr.rel (0) target = $region17
  $region16: #{_lambda_.23} parent=0 // pred_region
    _
  $region17: #{_lambda_.23} parent=0 // pred_fallthru
    _
  // Predicated region
  $region18: #{_lambda_.23} parent=0 // pred_check
    _
  $region19: #{_lambda_.23} parent=0 // pred_check_branch
    %483 = sbr.rel (0) target = $region21
  $region20: #{_lambda_.23} parent=0 // pred_region
    _
  $region21: #{_lambda_.23} parent=0 // pred_fallthru
    _

// kernel: _lambda_.25
$region0: #{_lambda_.25}
  #allocation0 [shape = 'u32[]', space=smem, size = 0x4, offset = 0x4, fixed_abs, tag = 'smem constant byte address 0x4 - core index']
  #allocation1 [shape = 'u32[144,128]{1,0:T(1,128)}', space=vmem, size = 0x12000, scoped, tag = 'internal scratch']
  %s0 = inlined_call_operand.vmem [shape: bf16[16,128], index: 0, kind: input, shape index: {}]
  %s1 = inlined_call_operand.vmem [shape: bf16[128,128], index: 1, kind: input, shape index: {}]
  %s2 = inlined_call_operand.vmem [shape: f32[1,128], index: 2, kind: input, shape index: {}]
  %s3 = inlined_call_operand.vmem [shape: f32[16,128], index: 3, kind: output, shape index: {}]
  %s4 = sld [smem:[#allocation0]]
  $region22: #{_lambda_.25} parent=0
    _
  %s6 = ssub.s32 1, %s4
  %s7 = scalar_select 0, %s6, %s4
  // Predicated region
  $region2: #{_lambda_.25} parent=0 // pred_check
    _
  $region3: #{_lambda_.25} parent=0 // pred_check_branch
    %9 = sbr.rel (0) target = $region5
  $region4: #{_lambda_.25} parent=0 // pred_region
    _
  $region5: #{_lambda_.25} parent=0 // pred_fallthru
    _
  // Predicated region
  $region6: #{_lambda_.25} parent=0 // pred_check
    _
  $region7: #{_lambda_.25} parent=0 // pred_check_branch
    %11 = sbr.rel (0) target = $region9
  $region8: #{_lambda_.25} parent=0 // pred_region
    _
  $region9: #{_lambda_.25} parent=0 // pred_fallthru
    _
  // Predicated region
  $region10: #{_lambda_.25} parent=0 // pred_check
    _
  $region11: #{_lambda_.25} parent=0 // pred_check_branch
    %13 = sbr.rel (0) target = $region13
  $region12: #{_lambda_.25} parent=0 // pred_region
    _
  $region13: #{_lambda_.25} parent=0 // pred_fallthru
    _
  %v15 = vld [vmem:[%s0] sm:$0xf]
  %v16 = vld [vmem:[%s0 + $0x4] sm:$0xf]
  %v17 = vld [vmem:[%s1] sm:$0xf]
  %v18 = vld [vmem:[%s1 + $0x4] sm:$0xf]
  %v19 = vld [vmem:[%s1 + $0x8] sm:$0xf]
  %v20 = vld [vmem:[%s1 + $0xc] sm:$0xf]
  %v21 = vld [vmem:[%s1 + $0x10] sm:$0xf]
  %v22 = vld [vmem:[%s1 + $0x14] sm:$0xf]
  %v23 = vld [vmem:[%s1 + $0x18] sm:$0xf]
  %v24 = vld [vmem:[%s1 + $0x1c] sm:$0xf]
  %v25 = vld [vmem:[%s1 + $0x20] sm:$0xf]
  %v26 = vld [vmem:[%s1 + $0x24] sm:$0xf]
  %v27 = vld [vmem:[%s1 + $0x28] sm:$0xf]
  %v28 = vld [vmem:[%s1 + $0x2c] sm:$0xf]
  %v29 = vld [vmem:[%s1 + $0x30] sm:$0xf]
  %v30 = vld [vmem:[%s1 + $0x34] sm:$0xf]
  %v31 = vld [vmem:[%s1 + $0x38] sm:$0xf]
  %v32 = vld [vmem:[%s1 + $0x3c] sm:$0xf]
  %v33 = vld [vmem:[%s2] sm:$0x1]
  %v35 = vlaneseq
  %v36 = vshrl.u32 %v35, 7
  %v37 = vsub.s32 0, %v36
  %v38 = vrot.slane %v33, %v37
  %v42 = vunpack.c.l.b16 %v15
  %v43 = vunpack.c.l.b16 %v16
  %v44 = vpack.c.b16 %v43, %v42
  %v62 = vunpack.c.l.b16 %v17
  %v63 = vunpack.c.l.b16 %v18
  %v64 = vunpack.c.l.b16 %v19
  %v65 = vunpack.c.l.b16 %v20
  %v66 = vunpack.c.l.b16 %v21
  %v67 = vunpack.c.l.b16 %v22
  %v68 = vunpack.c.l.b16 %v23
  %v69 = vunpack.c.l.b16 %v24
  %v70 = vunpack.c.l.b16 %v25
  %v71 = vunpack.c.l.b16 %v26
  %v72 = vunpack.c.l.b16 %v27
  %v73 = vunpack.c.l.b16 %v28
  %v74 = vunpack.c.l.b16 %v29
  %v75 = vunpack.c.l.b16 %v30
  %v76 = vunpack.c.l.b16 %v31
  %v77 = vunpack.c.l.b16 %v32
  %v78 = vpack.c.b16 %v63, %v62
  %v79 = vpack.c.b16 %v65, %v64
  %v80 = vpack.c.b16 %v67, %v66
  %v81 = vpack.c.b16 %v69, %v68
  %v82 = vpack.c.b16 %v71, %v70
  %v83 = vpack.c.b16 %v73, %v72
  %v84 = vpack.c.b16 %v75, %v74
  %v85 = vpack.c.b16 %v77, %v76
  %94 = vmatprep.subr.bf16.mxu0 0
  %95 = vmatpush1.bf16.msra.mxu0 %v78
  %96 = vmatprep.subr.bf16.mxu0 0
  %97 = vmatpush1.bf16.msra.mxu0 %v79
  %98 = vmatprep.subr.bf16.mxu0 0
  %99 = vmatpush1.bf16.msra.mxu0 %v80
  %100 = vmatprep.subr.bf16.mxu0 0
  %101 = vmatpush1.bf16.msra.mxu0 %v81
  %102 = vmatprep.subr.bf16.mxu0 0
  %103 = vmatpush1.bf16.msra.mxu0 %v82
  %104 = vmatprep.subr.bf16.mxu0 0
  %105 = vmatpush1.bf16.msra.mxu0 %v83
  %106 = vmatprep.subr.bf16.mxu0 0
  %107 = vmatpush1.bf16.msra.mxu0 %v84
  %108 = vmatprep.subr.bf16.mxu0 0
  %109 = vmatpush1.bf16.msra.mxu0 %v85
  %110 = vmatprep.subr.bf16.mxu0 0
  %111 = vmatpush1.bf16.msra.mxu0 0
  %112 = vmatprep.subr.bf16.mxu0 0
  %113 = vmatpush1.bf16.msra.mxu0 0
  %114 = vmatprep.subr.bf16.mxu0 0
  %115 = vmatpush1.bf16.msra.mxu0 0
  %116 = vmatprep.subr.bf16.mxu0 0
  %117 = vmatpush1.bf16.msra.mxu0 0
  %118 = vmatprep.subr.bf16.mxu0 0
  %119 = vmatpush1.bf16.msra.mxu0 0
  %120 = vmatprep.subr.bf16.mxu0 0
  %121 = vmatpush1.bf16.msra.mxu0 0
  %122 = vmatprep.subr.bf16.mxu0 0
  %123 = vmatpush1.bf16.msra.mxu0 0
  %124 = vmatprep.subr.bf16.mxu0 0
  %125 = vmatpush1.bf16.msra.mxu0 0
  %126 = vmatprep.mubr.bf16.mxu0 0
  %127 = vmatmul.mubr.bf16.gmra.mrb[0].mxu0 %v44
  %v128 = vpop.f32.mrb[0].mxu0
  %v129 = vadd.f32 %v38, %v128
  %v130 = vpop.f32.mrb[0].mxu0
  %v131 = vpop.f32.mrb[0].mxu0
  %v132 = vadd.f32 %v38, %v131
  %v133 = vpop.f32.mrb[0].mxu0
  %134 = vdwg.mxu0
  %135 = vst [vmem:[%s3] sm:$0xff] %v129
  %136 = vst [vmem:[%s3 + $0x8] sm:$0xff] %v132
  // Predicated region
  $region14: #{_lambda_.25} parent=0 // pred_check
    _
  $region15: #{_lambda_.25} parent=0 // pred_check_branch
    %138 = sbr.rel (0) target = $region17
  $region16: #{_lambda_.25} parent=0 // pred_region
    _
  $region17: #{_lambda_.25} parent=0 // pred_fallthru
    _
  // Predicated region
  $region18: #{_lambda_.25} parent=0 // pred_check
    _
  $region19: #{_lambda_.25} parent=0 // pred_check_branch
    %140 = sbr.rel (0) target = $region21
  $region20: #{_lambda_.25} parent=0 // pred_region
    _
  $region21: #{_lambda_.25} parent=0 // pred_fallthru
    _

// kernel: _lambda_.22
$region0: #{_lambda_.22}
  #allocation0 [shape = 'u32[]', space=smem, size = 0x4, offset = 0x4, fixed_abs, tag = 'smem constant byte address 0x4 - core index']
  #allocation1 [shape = 'u32[144,128]{1,0:T(1,128)}', space=vmem, size = 0x12000, scoped, tag = 'internal scratch']
  %s0 = inlined_call_operand.vmem [shape: bf16[16,64], index: 0, kind: input, shape index: {}]
  %s1 = inlined_call_operand.vmem [shape: bf16[64,128], index: 1, kind: input, shape index: {}]
  %s2 = inlined_call_operand.vmem [shape: f32[1,128], index: 2, kind: input, shape index: {}]
  %s3 = inlined_call_operand.vmem [shape: bf16[16,128], index: 3, kind: output, shape index: {}]
  %s4 = sld [smem:[#allocation0]]
  $region22: #{_lambda_.22} parent=0
    _
  %s6 = ssub.s32 1, %s4
  %s7 = scalar_select 0, %s6, %s4
  // Predicated region
  $region2: #{_lambda_.22} parent=0 // pred_check
    _
  $region3: #{_lambda_.22} parent=0 // pred_check_branch
    %9 = sbr.rel (0) target = $region5
  $region4: #{_lambda_.22} parent=0 // pred_region
    _
  $region5: #{_lambda_.22} parent=0 // pred_fallthru
    _
  // Predicated region
  $region6: #{_lambda_.22} parent=0 // pred_check
    _
  $region7: #{_lambda_.22} parent=0 // pred_check_branch
    %11 = sbr.rel (0) target = $region9
  $region8: #{_lambda_.22} parent=0 // pred_region
    _
  $region9: #{_lambda_.22} parent=0 // pred_fallthru
    _
  // Predicated region
  $region10: #{_lambda_.22} parent=0 // pred_check
    _
  $region11: #{_lambda_.22} parent=0 // pred_check_branch
    %13 = sbr.rel (0) target = $region13
  $region12: #{_lambda_.22} parent=0 // pred_region
    _
  $region13: #{_lambda_.22} parent=0 // pred_fallthru
    _
  %v15 = vld [vmem:[%s0] sm:$0xf]
  %v16 = vld [vmem:[%s0 + $0x4] sm:$0xf]
  %v17 = vld [vmem:[%s1] sm:$0xf]
  %v18 = vld [vmem:[%s1 + $0x4] sm:$0xf]
  %v19 = vld [vmem:[%s1 + $0x8] sm:$0xf]
  %v20 = vld [vmem:[%s1 + $0xc] sm:$0xf]
  %v21 = vld [vmem:[%s1 + $0x10] sm:$0xf]
  %v22 = vld [vmem:[%s1 + $0x14] sm:$0xf]
  %v23 = vld [vmem:[%s1 + $0x18] sm:$0xf]
  %v24 = vld [vmem:[%s1 + $0x1c] sm:$0xf]
  %v25 = vld [vmem:[%s2] sm:$0x1]
  %v27 = vlaneseq
  %v28 = vshrl.u32 %v27, 7
  %v29 = vsub.s32 0, %v28
  %v30 = vrot.slane %v25, %v29
  %v34 = vunpack.c.l.b16 %v15
  %v35 = vunpack.c.l.b16 %v16
  %v36 = vpack.c.b16 %v35, %v34
  %v45 = vunpack.c.l.b16 %v17
  %v46 = vunpack.c.l.b16 %v18
  %v47 = vunpack.c.l.b16 %v19
  %v48 = vunpack.c.l.b16 %v20
  %v49 = vunpack.c.l.b16 %v21
  %v50 = vunpack.c.l.b16 %v22
  %v51 = vunpack.c.l.b16 %v23
  %v52 = vunpack.c.l.b16 %v24
  %v53 = vpack.c.b16 %v46, %v45
  %v54 = vpack.c.b16 %v48, %v47
  %v55 = vpack.c.b16 %v50, %v49
  %v56 = vpack.c.b16 %v52, %v51
  %vm61 = vcmask 523264
  %v63 = vsel %vm61, %v36, 0
  %65 = vmatprep.subr.bf16.mxu0 0
  %66 = vmatpush1.bf16.msra.mxu0 %v53
  %67 = vmatprep.subr.bf16.mxu0 0
  %68 = vmatpush1.bf16.msra.mxu0 %v54
  %69 = vmatprep.subr.bf16.mxu0 0
  %70 = vmatpush1.bf16.msra.mxu0 %v55
  %71 = vmatprep.subr.bf16.mxu0 0
  %72 = vmatpush1.bf16.msra.mxu0 %v56
  %73 = vmatprep.subr.bf16.mxu0 0
  %74 = vmatpush1.bf16.msra.mxu0 0
  %75 = vmatprep.subr.bf16.mxu0 0
  %76 = vmatpush1.bf16.msra.mxu0 0
  %77 = vmatprep.subr.bf16.mxu0 0
  %78 = vmatpush1.bf16.msra.mxu0 0
  %79 = vmatprep.subr.bf16.mxu0 0
  %80 = vmatpush1.bf16.msra.mxu0 0
  %81 = vmatprep.subr.bf16.mxu0 0
  %82 = vmatpush1.bf16.msra.mxu0 0
  %83 = vmatprep.subr.bf16.mxu0 0
  %84 = vmatpush1.bf16.msra.mxu0 0
  %85 = vmatprep.subr.bf16.mxu0 0
  %86 = vmatpush1.bf16.msra.mxu0 0
  %87 = vmatprep.subr.bf16.mxu0 0
  %88 = vmatpush1.bf16.msra.mxu0 0
  %89 = vmatprep.subr.bf16.mxu0 0
  %90 = vmatpush1.bf16.msra.mxu0 0
  %91 = vmatprep.subr.bf16.mxu0 0
  %92 = vmatpush1.bf16.msra.mxu0 0
  %93 = vmatprep.subr.bf16.mxu0 0
  %94 = vmatpush1.bf16.msra.mxu0 0
  %95 = vmatprep.subr.bf16.mxu0 0
  %96 = vmatpush1.bf16.msra.mxu0 0
  %97 = vmatprep.mubr.bf16.mxu0 0
  %98 = vmatmul.mubr.bf16.gmra.mrb[0].mxu0 %v63
  %v99 = vpop.f32.mrb[0].mxu0
  %v100 = vadd.f32 %v30, %v99
  %v101 = vpop.f32.mrb[0].mxu0
  %v102 = vpop.f32.mrb[0].mxu0
  %v103 = vadd.f32 %v30, %v102
  %v104 = vpop.f32.mrb[0].mxu0
  %105 = vdwg.mxu0
  %v106 = vpack.c.bf16 %v103, %v100
  %v108 = vunpack.c.l.b16 %v106
  %v109 = vunpack.c.h.b16 %v106
  %v110 = vpack.c.b16 %v108, %v108
  %v111 = vpack.c.b16 %v109, %v109
  %114 = vst [vmem:[%s3] sm:$0xf] %v110
  %115 = vst [vmem:[%s3 + $0x4] sm:$0xf] %v111
  // Predicated region
  $region14: #{_lambda_.22} parent=0 // pred_check
    _
  $region15: #{_lambda_.22} parent=0 // pred_check_branch
    %117 = sbr.rel (0) target = $region17
  $region16: #{_lambda_.22} parent=0 // pred_region
    _
  $region17: #{_lambda_.22} parent=0 // pred_fallthru
    _
  // Predicated region
  $region18: #{_lambda_.22} parent=0 // pred_check
    _
  $region19: #{_lambda_.22} parent=0 // pred_check_branch
    %119 = sbr.rel (0) target = $region21
  $region20: #{_lambda_.22} parent=0 // pred_region
    _
  $region21: #{_lambda_.22} parent=0 // pred_fallthru
    _

// kernel: _lambda_.24
$region0: #{_lambda_.24}
  #allocation0 [shape = 'u32[]', space=smem, size = 0x4, offset = 0x4, fixed_abs, tag = 'smem constant byte address 0x4 - core index']
  #allocation1 [shape = 'u32[144,128]{1,0:T(1,128)}', space=vmem, size = 0x12000, scoped, tag = 'internal scratch']
  %s0 = inlined_call_operand.vmem [shape: bf16[16,1152], index: 0, kind: input, shape index: {}]
  %s1 = inlined_call_operand.vmem [shape: bf16[1152,128], index: 1, kind: input, shape index: {}]
  %s2 = inlined_call_operand.vmem [shape: f32[1,128], index: 2, kind: input, shape index: {}]
  %s3 = inlined_call_operand.vmem [shape: bf16[16,128], index: 3, kind: input, shape index: {}]
  %s4 = inlined_call_operand.vmem [shape: bf16[16,128], index: 4, kind: output, shape index: {}]
  %s5 = sld [smem:[#allocation0]]
  $region26: #{_lambda_.24} parent=0
    _
  %s7 = ssub.s32 1, %s5
  %s8 = scalar_select 0, %s7, %s5
  // Predicated region
  $region2: #{_lambda_.24} parent=0 // pred_check
    _
  $region3: #{_lambda_.24} parent=0 // pred_check_branch
    %10 = sbr.rel (0) target = $region5
  $region4: #{_lambda_.24} parent=0 // pred_region
    _
  $region5: #{_lambda_.24} parent=0 // pred_fallthru
    _
  // Predicated region
  $region6: #{_lambda_.24} parent=0 // pred_check
    _
  $region7: #{_lambda_.24} parent=0 // pred_check_branch
    %12 = sbr.rel (0) target = $region9
  $region8: #{_lambda_.24} parent=0 // pred_region
    _
  $region9: #{_lambda_.24} parent=0 // pred_fallthru
    _
  // Predicated region
  $region10: #{_lambda_.24} parent=0 // pred_check
    _
  $region11: #{_lambda_.24} parent=0 // pred_check_branch
    %14 = sbr.rel (0) target = $region13
  $region12: #{_lambda_.24} parent=0 // pred_region
    _
  $region13: #{_lambda_.24} parent=0 // pred_fallthru
    _
  // Predicated region
  $region14: #{_lambda_.24} parent=0 // pred_check
    _
  $region15: #{_lambda_.24} parent=0 // pred_check_branch
    %16 = sbr.rel (0) target = $region17
  $region16: #{_lambda_.24} parent=0 // pred_region
    _
  $region17: #{_lambda_.24} parent=0 // pred_fallthru
    _
  %v18 = vld [vmem:[%s0] sm:$0xff]
  %v19 = vld [vmem:[%s0 + $0x8] sm:$0xff]
  %v20 = vld [vmem:[%s0 + $0x10] sm:$0xff]
  %v21 = vld [vmem:[%s0 + $0x18] sm:$0xff]
  %v22 = vld [vmem:[%s0 + $0x20] sm:$0xf]
  %v23 = vld [vmem:[%s0 + $0x24] sm:$0xff]
  %v24 = vld [vmem:[%s0 + $0x2c] sm:$0xff]
  %v25 = vld [vmem:[%s0 + $0x34] sm:$0xff]
  %v26 = vld [vmem:[%s0 + $0x3c] sm:$0xff]
  %v27 = vld [vmem:[%s0 + $0x44] sm:$0xf]
  %v28 = vld [vmem:[%s1] sm:$0xf]
  %v29 = vld [vmem:[%s1 + $0x4] sm:$0xf]
  %v30 = vld [vmem:[%s1 + $0x8] sm:$0xf]
  %v31 = vld [vmem:[%s1 + $0xc] sm:$0xf]
  %v32 = vld [vmem:[%s1 + $0x10] sm:$0xf]
  %v33 = vld [vmem:[%s1 + $0x14] sm:$0xf]
  %v34 = vld [vmem:[%s1 + $0x18] sm:$0xf]
  %v35 = vld [vmem:[%s1 + $0x1c] sm:$0xf]
  %v36 = vld [vmem:[%s1 + $0x20] sm:$0xf]
  %v37 = vld [vmem:[%s1 + $0x24] sm:$0xf]
  %v38 = vld [vmem:[%s1 + $0x28] sm:$0xf]
  %v39 = vld [vmem:[%s1 + $0x2c] sm:$0xf]
  %v40 = vld [vmem:[%s1 + $0x30] sm:$0xf]
  %v41 = vld [vmem:[%s1 + $0x34] sm:$0xf]
  %v42 = vld [vmem:[%s1 + $0x38] sm:$0xf]
  %v43 = vld [vmem:[%s1 + $0x3c] sm:$0xf]
  %v44 = vld [vmem:[%s1 + $0x40] sm:$0xf]
  %v45 = vld [vmem:[%s1 + $0x44] sm:$0xf]
  %v46 = vld [vmem:[%s1 + $0x48] sm:$0xf]
  %v47 = vld [vmem:[%s1 + $0x4c] sm:$0xf]
  %v48 = vld [vmem:[%s1 + $0x50] sm:$0xf]
  %v49 = vld [vmem:[%s1 + $0x54] sm:$0xf]
  %v50 = vld [vmem:[%s1 + $0x58] sm:$0xf]
  %v51 = vld [vmem:[%s1 + $0x5c] sm:$0xf]
  %v52 = vld [vmem:[%s1 + $0x60] sm:$0xf]
  %v53 = vld [vmem:[%s1 + $0x64] sm:$0xf]
  %v54 = vld [vmem:[%s1 + $0x68] sm:$0xf]
  %v55 = vld [vmem:[%s1 + $0x6c] sm:$0xf]
  %v56 = vld [vmem:[%s1 + $0x70] sm:$0xf]
  %v57 = vld [vmem:[%s1 + $0x74] sm:$0xf]
  %v58 = vld [vmem:[%s1 + $0x78] sm:$0xf]
  %v59 = vld [vmem:[%s1 + $0x7c] sm:$0xf]
  %v60 = vld [vmem:[%s1 + $0x80] sm:$0xf]
  %v61 = vld [vmem:[%s1 + $0x84] sm:$0xf]
  %v62 = vld [vmem:[%s1 + $0x88] sm:$0xf]
  %v63 = vld [vmem:[%s1 + $0x8c] sm:$0xf]
  %v64 = vld [vmem:[%s1 + $0x90] sm:$0xf]
  %v65 = vld [vmem:[%s1 + $0x94] sm:$0xf]
  %v66 = vld [vmem:[%s1 + $0x98] sm:$0xf]
  %v67 = vld [vmem:[%s1 + $0x9c] sm:$0xf]
  %v68 = vld [vmem:[%s1 + $0xa0] sm:$0xf]
  %v69 = vld [vmem:[%s1 + $0xa4] sm:$0xf]
  %v70 = vld [vmem:[%s1 + $0xa8] sm:$0xf]
  %v71 = vld [vmem:[%s1 + $0xac] sm:$0xf]
  %v72 = vld [vmem:[%s1 + $0xb0] sm:$0xf]
  %v73 = vld [vmem:[%s1 + $0xb4] sm:$0xf]
  %v74 = vld [vmem:[%s1 + $0xb8] sm:$0xf]
  %v75 = vld [vmem:[%s1 + $0xbc] sm:$0xf]
  %v76 = vld [vmem:[%s1 + $0xc0] sm:$0xf]
  %v77 = vld [vmem:[%s1 + $0xc4] sm:$0xf]
  %v78 = vld [vmem:[%s1 + $0xc8] sm:$0xf]
  %v79 = vld [vmem:[%s1 + $0xcc] sm:$0xf]
  %v80 = vld [vmem:[%s1 + $0xd0] sm:$0xf]
  %v81 = vld [vmem:[%s1 + $0xd4] sm:$0xf]
  %v82 = vld [vmem:[%s1 + $0xd8] sm:$0xf]
  %v83 = vld [vmem:[%s1 + $0xdc] sm:$0xf]
  %v84 = vld [vmem:[%s1 + $0xe0] sm:$0xf]
  %v85 = vld [vmem:[%s1 + $0xe4] sm:$0xf]
  %v86 = vld [vmem:[%s1 + $0xe8] sm:$0xf]
  %v87 = vld [vmem:[%s1 + $0xec] sm:$0xf]
  %v88 = vld [vmem:[%s1 + $0xf0] sm:$0xf]
  %v89 = vld [vmem:[%s1 + $0xf4] sm:$0xf]
  %v90 = vld [vmem:[%s1 + $0xf8] sm:$0xf]
  %v91 = vld [vmem:[%s1 + $0xfc] sm:$0xf]
  %v92 = vld [vmem:[%s1 + $0x100] sm:$0xf]
  %v93 = vld [vmem:[%s1 + $0x104] sm:$0xf]
  %v94 = vld [vmem:[%s1 + $0x108] sm:$0xf]
  %v95 = vld [vmem:[%s1 + $0x10c] sm:$0xf]
  %v96 = vld [vmem:[%s1 + $0x110] sm:$0xf]
  %v97 = vld [vmem:[%s1 + $0x114] sm:$0xf]
  %v98 = vld [vmem:[%s1 + $0x118] sm:$0xf]
  %v99 = vld [vmem:[%s1 + $0x11c] sm:$0xf]
  %v100 = vld [vmem:[%s1 + $0x120] sm:$0xf]
  %v101 = vld [vmem:[%s1 + $0x124] sm:$0xf]
  %v102 = vld [vmem:[%s1 + $0x128] sm:$0xf]
  %v103 = vld [vmem:[%s1 + $0x12c] sm:$0xf]
  %v104 = vld [vmem:[%s1 + $0x130] sm:$0xf]
  %v105 = vld [vmem:[%s1 + $0x134] sm:$0xf]
  %v106 = vld [vmem:[%s1 + $0x138] sm:$0xf]
  %v107 = vld [vmem:[%s1 + $0x13c] sm:$0xf]
  %v108 = vld [vmem:[%s1 + $0x140] sm:$0xf]
  %v109 = vld [vmem:[%s1 + $0x144] sm:$0xf]
  %v110 = vld [vmem:[%s1 + $0x148] sm:$0xf]
  %v111 = vld [vmem:[%s1 + $0x14c] sm:$0xf]
  %v112 = vld [vmem:[%s1 + $0x150] sm:$0xf]
  %v113 = vld [vmem:[%s1 + $0x154] sm:$0xf]
  %v114 = vld [vmem:[%s1 + $0x158] sm:$0xf]
  %v115 = vld [vmem:[%s1 + $0x15c] sm:$0xf]
  %v116 = vld [vmem:[%s1 + $0x160] sm:$0xf]
  %v117 = vld [vmem:[%s1 + $0x164] sm:$0xf]
  %v118 = vld [vmem:[%s1 + $0x168] sm:$0xf]
  %v119 = vld [vmem:[%s1 + $0x16c] sm:$0xf]
  %v120 = vld [vmem:[%s1 + $0x170] sm:$0xf]
  %v121 = vld [vmem:[%s1 + $0x174] sm:$0xf]
  %v122 = vld [vmem:[%s1 + $0x178] sm:$0xf]
  %v123 = vld [vmem:[%s1 + $0x17c] sm:$0xf]
  %v124 = vld [vmem:[%s1 + $0x180] sm:$0xf]
  %v125 = vld [vmem:[%s1 + $0x184] sm:$0xf]
  %v126 = vld [vmem:[%s1 + $0x188] sm:$0xf]
  %v127 = vld [vmem:[%s1 + $0x18c] sm:$0xf]
  %v128 = vld [vmem:[%s1 + $0x190] sm:$0xf]
  %v129 = vld [vmem:[%s1 + $0x194] sm:$0xf]
  %v130 = vld [vmem:[%s1 + $0x198] sm:$0xf]
  %v131 = vld [vmem:[%s1 + $0x19c] sm:$0xf]
  %v132 = vld [vmem:[%s1 + $0x1a0] sm:$0xf]
  %v133 = vld [vmem:[%s1 + $0x1a4] sm:$0xf]
  %v134 = vld [vmem:[%s1 + $0x1a8] sm:$0xf]
  %v135 = vld [vmem:[%s1 + $0x1ac] sm:$0xf]
  %v136 = vld [vmem:[%s1 + $0x1b0] sm:$0xf]
  %v137 = vld [vmem:[%s1 + $0x1b4] sm:$0xf]
  %v138 = vld [vmem:[%s1 + $0x1b8] sm:$0xf]
  %v139 = vld [vmem:[%s1 + $0x1bc] sm:$0xf]
  %v140 = vld [vmem:[%s1 + $0x1c0] sm:$0xf]
  %v141 = vld [vmem:[%s1 + $0x1c4] sm:$0xf]
  %v142 = vld [vmem:[%s1 + $0x1c8] sm:$0xf]
  %v143 = vld [vmem:[%s1 + $0x1cc] sm:$0xf]
  %v144 = vld [vmem:[%s1 + $0x1d0] sm:$0xf]
  %v145 = vld [vmem:[%s1 + $0x1d4] sm:$0xf]
  %v146 = vld [vmem:[%s1 + $0x1d8] sm:$0xf]
  %v147 = vld [vmem:[%s1 + $0x1dc] sm:$0xf]
  %v148 = vld [vmem:[%s1 + $0x1e0] sm:$0xf]
  %v149 = vld [vmem:[%s1 + $0x1e4] sm:$0xf]
  %v150 = vld [vmem:[%s1 + $0x1e8] sm:$0xf]
  %v151 = vld [vmem:[%s1 + $0x1ec] sm:$0xf]
  %v152 = vld [vmem:[%s1 + $0x1f0] sm:$0xf]
  %v153 = vld [vmem:[%s1 + $0x1f4] sm:$0xf]
  %v154 = vld [vmem:[%s1 + $0x1f8] sm:$0xf]
  %v155 = vld [vmem:[%s1 + $0x1fc] sm:$0xf]
  %v156 = vld [vmem:[%s1 + $0x200] sm:$0xf]
  %v157 = vld [vmem:[%s1 + $0x204] sm:$0xf]
  %v158 = vld [vmem:[%s1 + $0x208] sm:$0xf]
  %v159 = vld [vmem:[%s1 + $0x20c] sm:$0xf]
  %v160 = vld [vmem:[%s1 + $0x210] sm:$0xf]
  %v161 = vld [vmem:[%s1 + $0x214] sm:$0xf]
  %v162 = vld [vmem:[%s1 + $0x218] sm:$0xf]
  %v163 = vld [vmem:[%s1 + $0x21c] sm:$0xf]
  %v164 = vld [vmem:[%s1 + $0x220] sm:$0xf]
  %v165 = vld [vmem:[%s1 + $0x224] sm:$0xf]
  %v166 = vld [vmem:[%s1 + $0x228] sm:$0xf]
  %v167 = vld [vmem:[%s1 + $0x22c] sm:$0xf]
  %v168 = vld [vmem:[%s1 + $0x230] sm:$0xf]
  %v169 = vld [vmem:[%s1 + $0x234] sm:$0xf]
  %v170 = vld [vmem:[%s1 + $0x238] sm:$0xf]
  %v171 = vld [vmem:[%s1 + $0x23c] sm:$0xf]
  %v172 = vld [vmem:[%s2] sm:$0x1]
  %v174 = vlaneseq
  %v175 = vshrl.u32 %v174, 7
  %v176 = vsub.s32 0, %v175
  %v177 = vrot.slane %v172, %v176
  %v189 = vunpack.c.l.b16 %v18
  %v190 = vunpack.c.h.b16 %v18
  %v191 = vunpack.c.l.b16 %v19
  %v192 = vunpack.c.h.b16 %v19
  %v193 = vunpack.c.l.b16 %v20
  %v194 = vunpack.c.h.b16 %v20
  %v195 = vunpack.c.l.b16 %v21
  %v196 = vunpack.c.h.b16 %v21
  %v197 = vunpack.c.l.b16 %v22
  %v198 = vunpack.c.l.b16 %v23
  %v199 = vunpack.c.h.b16 %v23
  %v200 = vunpack.c.l.b16 %v24
  %v201 = vunpack.c.h.b16 %v24
  %v202 = vunpack.c.l.b16 %v25
  %v203 = vunpack.c.h.b16 %v25
  %v204 = vunpack.c.l.b16 %v26
  %v205 = vunpack.c.h.b16 %v26
  %v206 = vunpack.c.l.b16 %v27
  %v207 = vpack.c.b16 %v198, %v189
  %v208 = vpack.c.b16 %v199, %v190
  %v209 = vpack.c.b16 %v200, %v191
  %v210 = vpack.c.b16 %v201, %v192
  %v211 = vpack.c.b16 %v202, %v193
  %v212 = vpack.c.b16 %v203, %v194
  %v213 = vpack.c.b16 %v204, %v195
  %v214 = vpack.c.b16 %v205, %v196
  %v215 = vpack.c.b16 %v206, %v197
  %v369 = vunpack.c.l.b16 %v28
  %v370 = vunpack.c.l.b16 %v29
  %v371 = vunpack.c.l.b16 %v30
  %v372 = vunpack.c.l.b16 %v31
  %v373 = vunpack.c.l.b16 %v32
  %v374 = vunpack.c.l.b16 %v33
  %v375 = vunpack.c.l.b16 %v34
  %v376 = vunpack.c.l.b16 %v35
  %v377 = vunpack.c.l.b16 %v36
  %v378 = vunpack.c.l.b16 %v37
  %v379 = vunpack.c.l.b16 %v38
  %v380 = vunpack.c.l.b16 %v39
  %v381 = vunpack.c.l.b16 %v40
  %v382 = vunpack.c.l.b16 %v41
  %v383 = vunpack.c.l.b16 %v42
  %v384 = vunpack.c.l.b16 %v43
  %v385 = vunpack.c.l.b16 %v44
  %v386 = vunpack.c.l.b16 %v45
  %v387 = vunpack.c.l.b16 %v46
  %v388 = vunpack.c.l.b16 %v47
  %v389 = vunpack.c.l.b16 %v48
  %v390 = vunpack.c.l.b16 %v49
  %v391 = vunpack.c.l.b16 %v50
  %v392 = vunpack.c.l.b16 %v51
  %v393 = vunpack.c.l.b16 %v52
  %v394 = vunpack.c.l.b16 %v53
  %v395 = vunpack.c.l.b16 %v54
  %v396 = vunpack.c.l.b16 %v55
  %v397 = vunpack.c.l.b16 %v56
  %v398 = vunpack.c.l.b16 %v57
  %v399 = vunpack.c.l.b16 %v58
  %v400 = vunpack.c.l.b16 %v59
  %v401 = vunpack.c.l.b16 %v60
  %v402 = vunpack.c.l.b16 %v61
  %v403 = vunpack.c.l.b16 %v62
  %v404 = vunpack.c.l.b16 %v63
  %v405 = vunpack.c.l.b16 %v64
  %v406 = vunpack.c.l.b16 %v65
  %v407 = vunpack.c.l.b16 %v66
  %v408 = vunpack.c.l.b16 %v67
  %v409 = vunpack.c.l.b16 %v68
  %v410 = vunpack.c.l.b16 %v69
  %v411 = vunpack.c.l.b16 %v70
  %v412 = vunpack.c.l.b16 %v71
  %v413 = vunpack.c.l.b16 %v72
  %v414 = vunpack.c.l.b16 %v73
  %v415 = vunpack.c.l.b16 %v74
  %v416 = vunpack.c.l.b16 %v75
  %v417 = vunpack.c.l.b16 %v76
  %v418 = vunpack.c.l.b16 %v77
  %v419 = vunpack.c.l.b16 %v78
  %v420 = vunpack.c.l.b16 %v79
  %v421 = vunpack.c.l.b16 %v80
  %v422 = vunpack.c.l.b16 %v81
  %v423 = vunpack.c.l.b16 %v82
  %v424 = vunpack.c.l.b16 %v83
  %v425 = vunpack.c.l.b16 %v84
  %v426 = vunpack.c.l.b16 %v85
  %v427 = vunpack.c.l.b16 %v86
  %v428 = vunpack.c.l.b16 %v87
  %v429 = vunpack.c.l.b16 %v88
  %v430 = vunpack.c.l.b16 %v89
  %v431 = vunpack.c.l.b16 %v90
  %v432 = vunpack.c.l.b16 %v91
  %v433 = vunpack.c.l.b16 %v92
  %v434 = vunpack.c.l.b16 %v93
  %v435 = vunpack.c.l.b16 %v94
  %v436 = vunpack.c.l.b16 %v95
  %v437 = vunpack.c.l.b16 %v96
  %v438 = vunpack.c.l.b16 %v97
  %v439 = vunpack.c.l.b16 %v98
  %v440 = vunpack.c.l.b16 %v99
  %v441 = vunpack.c.l.b16 %v100
  %v442 = vunpack.c.l.b16 %v101
  %v443 = vunpack.c.l.b16 %v102
  %v444 = vunpack.c.l.b16 %v103
  %v445 = vunpack.c.l.b16 %v104
  %v446 = vunpack.c.l.b16 %v105
  %v447 = vunpack.c.l.b16 %v106
  %v448 = vunpack.c.l.b16 %v107
  %v449 = vunpack.c.l.b16 %v108
  %v450 = vunpack.c.l.b16 %v109
  %v451 = vunpack.c.l.b16 %v110
  %v452 = vunpack.c.l.b16 %v111
  %v453 = vunpack.c.l.b16 %v112
  %v454 = vunpack.c.l.b16 %v113
  %v455 = vunpack.c.l.b16 %v114
  %v456 = vunpack.c.l.b16 %v115
  %v457 = vunpack.c.l.b16 %v116
  %v458 = vunpack.c.l.b16 %v117
  %v459 = vunpack.c.l.b16 %v118
  %v460 = vunpack.c.l.b16 %v119
  %v461 = vunpack.c.l.b16 %v120
  %v462 = vunpack.c.l.b16 %v121
  %v463 = vunpack.c.l.b16 %v122
  %v464 = vunpack.c.l.b16 %v123
  %v465 = vunpack.c.l.b16 %v124
  %v466 = vunpack.c.l.b16 %v125
  %v467 = vunpack.c.l.b16 %v126
  %v468 = vunpack.c.l.b16 %v127
  %v469 = vunpack.c.l.b16 %v128
  %v470 = vunpack.c.l.b16 %v129
  %v471 = vunpack.c.l.b16 %v130
  %v472 = vunpack.c.l.b16 %v131
  %v473 = vunpack.c.l.b16 %v132
  %v474 = vunpack.c.l.b16 %v133
  %v475 = vunpack.c.l.b16 %v134
  %v476 = vunpack.c.l.b16 %v135
  %v477 = vunpack.c.l.b16 %v136
  %v478 = vunpack.c.l.b16 %v137
  %v479 = vunpack.c.l.b16 %v138
  %v480 = vunpack.c.l.b16 %v139
  %v481 = vunpack.c.l.b16 %v140
  %v482 = vunpack.c.l.b16 %v141
  %v483 = vunpack.c.l.b16 %v142
  %v484 = vunpack.c.l.b16 %v143
  %v485 = vunpack.c.l.b16 %v144
  %v486 = vunpack.c.l.b16 %v145
  %v487 = vunpack.c.l.b16 %v146
  %v488 = vunpack.c.l.b16 %v147
  %v489 = vunpack.c.l.b16 %v148
  %v490 = vunpack.c.l.b16 %v149
  %v491 = vunpack.c.l.b16 %v150
  %v492 = vunpack.c.l.b16 %v151
  %v493 = vunpack.c.l.b16 %v152
  %v494 = vunpack.c.l.b16 %v153
  %v495 = vunpack.c.l.b16 %v154
  %v496 = vunpack.c.l.b16 %v155
  %v497 = vunpack.c.l.b16 %v156
  %v498 = vunpack.c.l.b16 %v157
  %v499 = vunpack.c.l.b16 %v158
  %v500 = vunpack.c.l.b16 %v159
  %v501 = vunpack.c.l.b16 %v160
  %v502 = vunpack.c.l.b16 %v161
  %v503 = vunpack.c.l.b16 %v162
  %v504 = vunpack.c.l.b16 %v163
  %v505 = vunpack.c.l.b16 %v164
  %v506 = vunpack.c.l.b16 %v165
  %v507 = vunpack.c.l.b16 %v166
  %v508 = vunpack.c.l.b16 %v167
  %v509 = vunpack.c.l.b16 %v168
  %v510 = vunpack.c.l.b16 %v169
  %v511 = vunpack.c.l.b16 %v170
  %v512 = vunpack.c.l.b16 %v171
  %v513 = vpack.c.b16 %v370, %v369
  %v514 = vpack.c.b16 %v372, %v371
  %v515 = vpack.c.b16 %v374, %v373
  %v516 = vpack.c.b16 %v376, %v375
  %v517 = vpack.c.b16 %v378, %v377
  %v518 = vpack.c.b16 %v380, %v379
  %v519 = vpack.c.b16 %v382, %v381
  %v520 = vpack.c.b16 %v384, %v383
  %v521 = vpack.c.b16 %v386, %v385
  %v522 = vpack.c.b16 %v388, %v387
  %v523 = vpack.c.b16 %v390, %v389
  %v524 = vpack.c.b16 %v392, %v391
  %v525 = vpack.c.b16 %v394, %v393
  %v526 = vpack.c.b16 %v396, %v395
  %v527 = vpack.c.b16 %v398, %v397
  %v528 = vpack.c.b16 %v400, %v399
  %v529 = vpack.c.b16 %v402, %v401
  %v530 = vpack.c.b16 %v404, %v403
  %v531 = vpack.c.b16 %v406, %v405
  %v532 = vpack.c.b16 %v408, %v407
  %v533 = vpack.c.b16 %v410, %v409
  %v534 = vpack.c.b16 %v412, %v411
  %v535 = vpack.c.b16 %v414, %v413
  %v536 = vpack.c.b16 %v416, %v415
  %v537 = vpack.c.b16 %v418, %v417
  %v538 = vpack.c.b16 %v420, %v419
  %v539 = vpack.c.b16 %v422, %v421
  %v540 = vpack.c.b16 %v424, %v423
  %v541 = vpack.c.b16 %v426, %v425
  %v542 = vpack.c.b16 %v428, %v427
  %v543 = vpack.c.b16 %v430, %v429
  %v544 = vpack.c.b16 %v432, %v431
  %v545 = vpack.c.b16 %v434, %v433
  %v546 = vpack.c.b16 %v436, %v435
  %v547 = vpack.c.b16 %v438, %v437
  %v548 = vpack.c.b16 %v440, %v439
  %v549 = vpack.c.b16 %v442, %v441
  %v550 = vpack.c.b16 %v444, %v443
  %v551 = vpack.c.b16 %v446, %v445
  %v552 = vpack.c.b16 %v448, %v447
  %v553 = vpack.c.b16 %v450, %v449
  %v554 = vpack.c.b16 %v452, %v451
  %v555 = vpack.c.b16 %v454, %v453
  %v556 = vpack.c.b16 %v456, %v455
  %v557 = vpack.c.b16 %v458, %v457
  %v558 = vpack.c.b16 %v460, %v459
  %v559 = vpack.c.b16 %v462, %v461
  %v560 = vpack.c.b16 %v464, %v463
  %v561 = vpack.c.b16 %v466, %v465
  %v562 = vpack.c.b16 %v468, %v467
  %v563 = vpack.c.b16 %v470, %v469
  %v564 = vpack.c.b16 %v472, %v471
  %v565 = vpack.c.b16 %v474, %v473
  %v566 = vpack.c.b16 %v476, %v475
  %v567 = vpack.c.b16 %v478, %v477
  %v568 = vpack.c.b16 %v480, %v479
  %v569 = vpack.c.b16 %v482, %v481
  %v570 = vpack.c.b16 %v484, %v483
  %v571 = vpack.c.b16 %v486, %v485
  %v572 = vpack.c.b16 %v488, %v487
  %v573 = vpack.c.b16 %v490, %v489
  %v574 = vpack.c.b16 %v492, %v491
  %v575 = vpack.c.b16 %v494, %v493
  %v576 = vpack.c.b16 %v496, %v495
  %v577 = vpack.c.b16 %v498, %v497
  %v578 = vpack.c.b16 %v500, %v499
  %v579 = vpack.c.b16 %v502, %v501
  %v580 = vpack.c.b16 %v504, %v503
  %v581 = vpack.c.b16 %v506, %v505
  %v582 = vpack.c.b16 %v508, %v507
  %v583 = vpack.c.b16 %v510, %v509
  %v584 = vpack.c.b16 %v512, %v511
  %657 = vmatprep.subr.bf16.mxu0 0
  %658 = vmatpush1.bf16.msra.mxu0 %v513
  %659 = vmatprep.subr.bf16.mxu0 0
  %660 = vmatpush1.bf16.msra.mxu0 %v514
  %661 = vmatprep.subr.bf16.mxu0 0
  %662 = vmatpush1.bf16.msra.mxu0 %v515
  %663 = vmatprep.subr.bf16.mxu0 0
  %664 = vmatpush1.bf16.msra.mxu0 %v516
  %665 = vmatprep.subr.bf16.mxu0 0
  %666 = vmatpush1.bf16.msra.mxu0 %v517
  %667 = vmatprep.subr.bf16.mxu0 0
  %668 = vmatpush1.bf16.msra.mxu0 %v518
  %669 = vmatprep.subr.bf16.mxu0 0
  %670 = vmatpush1.bf16.msra.mxu0 %v519
  %671 = vmatprep.subr.bf16.mxu0 0
  %672 = vmatpush1.bf16.msra.mxu0 %v520
  %673 = vmatprep.subr.bf16.mxu0 0
  %674 = vmatpush1.bf16.msra.mxu0 %v521
  %675 = vmatprep.subr.bf16.mxu0 0
  %676 = vmatpush1.bf16.msra.mxu0 %v522
  %677 = vmatprep.subr.bf16.mxu0 0
  %678 = vmatpush1.bf16.msra.mxu0 %v523
  %679 = vmatprep.subr.bf16.mxu0 0
  %680 = vmatpush1.bf16.msra.mxu0 %v524
  %681 = vmatprep.subr.bf16.mxu0 0
  %682 = vmatpush1.bf16.msra.mxu0 %v525
  %683 = vmatprep.subr.bf16.mxu0 0
  %684 = vmatpush1.bf16.msra.mxu0 %v526
  %685 = vmatprep.subr.bf16.mxu0 0
  %686 = vmatpush1.bf16.msra.mxu0 %v527
  %687 = vmatprep.subr.bf16.mxu0 0
  %688 = vmatpush1.bf16.msra.mxu0 %v528
  %689 = vmatprep.mubr.bf16.mxu0 %v208
  %690 = vmatmul.mubr.bf16.gmra.mrb[0].mxu0 %v207
  %v691 = vpop.f32.mrb[0].mxu0
  %v692 = vadd.f32 %v177, %v691
  %v693 = vpop.f32.mrb[0].mxu0
  %v694 = vpop.f32.mrb[0].mxu0
  %v695 = vadd.f32 %v177, %v694
  %v696 = vpop.f32.mrb[0].mxu0
  %697 = vdwg.mxu0
  %698 = vmatprep.subr.bf16.mxu0 0
  %699 = vmatpush1.bf16.msra.mxu0 %v529
  %700 = vmatprep.subr.bf16.mxu0 0
  %701 = vmatpush1.bf16.msra.mxu0 %v530
  %702 = vmatprep.subr.bf16.mxu0 0
  %703 = vmatpush1.bf16.msra.mxu0 %v531
  %704 = vmatprep.subr.bf16.mxu0 0
  %705 = vmatpush1.bf16.msra.mxu0 %v532
  %706 = vmatprep.subr.bf16.mxu0 0
  %707 = vmatpush1.bf16.msra.mxu0 %v533
  %708 = vmatprep.subr.bf16.mxu0 0
  %709 = vmatpush1.bf16.msra.mxu0 %v534
  %710 = vmatprep.subr.bf16.mxu0 0
  %711 = vmatpush1.bf16.msra.mxu0 %v535
  %712 = vmatprep.subr.bf16.mxu0 0
  %713 = vmatpush1.bf16.msra.mxu0 %v536
  %714 = vmatprep.subr.bf16.mxu0 0
  %715 = vmatpush1.bf16.msra.mxu0 %v537
  %716 = vmatprep.subr.bf16.mxu0 0
  %717 = vmatpush1.bf16.msra.mxu0 %v538
  %718 = vmatprep.subr.bf16.mxu0 0
  %719 = vmatpush1.bf16.msra.mxu0 %v539
  %720 = vmatprep.subr.bf16.mxu0 0
  %721 = vmatpush1.bf16.msra.mxu0 %v540
  %722 = vmatprep.subr.bf16.mxu0 0
  %723 = vmatpush1.bf16.msra.mxu0 %v541
  %724 = vmatprep.subr.bf16.mxu0 0
  %725 = vmatpush1.bf16.msra.mxu0 %v542
  %726 = vmatprep.subr.bf16.mxu0 0
  %727 = vmatpush1.bf16.msra.mxu0 %v543
  %728 = vmatprep.subr.bf16.mxu0 0
  %729 = vmatpush1.bf16.msra.mxu0 %v544
  %730 = vmatprep.mubr.bf16.mxu0 %v210
  %731 = vmatmul.mubr.bf16.gmra.mrb[0].mxu0 %v209
  %v732 = vpop.f32.mrb[0].mxu0
  %v733 = vadd.f32 %v692, %v732
  %v734 = vpop.f32.mrb[0].mxu0
  %v735 = vpop.f32.mrb[0].mxu0
  %v736 = vadd.f32 %v695, %v735
  %v737 = vpop.f32.mrb[0].mxu0
  %738 = vdwg.mxu0
  %739 = vmatprep.subr.bf16.mxu0 0
  %740 = vmatpush1.bf16.msra.mxu0 %v545
  %741 = vmatprep.subr.bf16.mxu0 0
  %742 = vmatpush1.bf16.msra.mxu0 %v546
  %743 = vmatprep.subr.bf16.mxu0 0
  %744 = vmatpush1.bf16.msra.mxu0 %v547
  %745 = vmatprep.subr.bf16.mxu0 0
  %746 = vmatpush1.bf16.msra.mxu0 %v548
  %747 = vmatprep.subr.bf16.mxu0 0
  %748 = vmatpush1.bf16.msra.mxu0 %v549
  %749 = vmatprep.subr.bf16.mxu0 0
  %750 = vmatpush1.bf16.msra.mxu0 %v550
  %751 = vmatprep.subr.bf16.mxu0 0
  %752 = vmatpush1.bf16.msra.mxu0 %v551
  %753 = vmatprep.subr.bf16.mxu0 0
  %754 = vmatpush1.bf16.msra.mxu0 %v552
  %755 = vmatprep.subr.bf16.mxu0 0
  %756 = vmatpush1.bf16.msra.mxu0 %v553
  %757 = vmatprep.subr.bf16.mxu0 0
  %758 = vmatpush1.bf16.msra.mxu0 %v554
  %759 = vmatprep.subr.bf16.mxu0 0
  %760 = vmatpush1.bf16.msra.mxu0 %v555
  %761 = vmatprep.subr.bf16.mxu0 0
  %762 = vmatpush1.bf16.msra.mxu0 %v556
  %763 = vmatprep.subr.bf16.mxu0 0
  %764 = vmatpush1.bf16.msra.mxu0 %v557
  %765 = vmatprep.subr.bf16.mxu0 0
  %766 = vmatpush1.bf16.msra.mxu0 %v558
  %767 = vmatprep.subr.bf16.mxu0 0
  %768 = vmatpush1.bf16.msra.mxu0 %v559
  %769 = vmatprep.subr.bf16.mxu0 0
  %770 = vmatpush1.bf16.msra.mxu0 %v560
  %771 = vmatprep.mubr.bf16.mxu0 %v212
  %772 = vmatmul.mubr.bf16.gmra.mrb[0].mxu0 %v211
  %v773 = vpop.f32.mrb[0].mxu0
  %v774 = vadd.f32 %v733, %v773
  %v775 = vpop.f32.mrb[0].mxu0
  %v776 = vpop.f32.mrb[0].mxu0
  %v777 = vadd.f32 %v736, %v776
  %v778 = vpop.f32.mrb[0].mxu0
  %779 = vdwg.mxu0
  %780 = vmatprep.subr.bf16.mxu0 0
  %781 = vmatpush1.bf16.msra.mxu0 %v561
  %782 = vmatprep.subr.bf16.mxu0 0
  %783 = vmatpush1.bf16.msra.mxu0 %v562
  %784 = vmatprep.subr.bf16.mxu0 0
  %785 = vmatpush1.bf16.msra.mxu0 %v563
  %786 = vmatprep.subr.bf16.mxu0 0
  %787 = vmatpush1.bf16.msra.mxu0 %v564
  %788 = vmatprep.subr.bf16.mxu0 0
  %789 = vmatpush1.bf16.msra.mxu0 %v565
  %790 = vmatprep.subr.bf16.mxu0 0
  %791 = vmatpush1.bf16.msra.mxu0 %v566
  %792 = vmatprep.subr.bf16.mxu0 0
  %793 = vmatpush1.bf16.msra.mxu0 %v567
  %794 = vmatprep.subr.bf16.mxu0 0
  %795 = vmatpush1.bf16.msra.mxu0 %v568
  %796 = vmatprep.subr.bf16.mxu0 0
  %797 = vmatpush1.bf16.msra.mxu0 %v569
  %798 = vmatprep.subr.bf16.mxu0 0
  %799 = vmatpush1.bf16.msra.mxu0 %v570
  %800 = vmatprep.subr.bf16.mxu0 0
  %801 = vmatpush1.bf16.msra.mxu0 %v571
  %802 = vmatprep.subr.bf16.mxu0 0
  %803 = vmatpush1.bf16.msra.mxu0 %v572
  %804 = vmatprep.subr.bf16.mxu0 0
  %805 = vmatpush1.bf16.msra.mxu0 %v573
  %806 = vmatprep.subr.bf16.mxu0 0
  %807 = vmatpush1.bf16.msra.mxu0 %v574
  %808 = vmatprep.subr.bf16.mxu0 0
  %809 = vmatpush1.bf16.msra.mxu0 %v575
  %810 = vmatprep.subr.bf16.mxu0 0
  %811 = vmatpush1.bf16.msra.mxu0 %v576
  %812 = vmatprep.mubr.bf16.mxu0 %v214
  %813 = vmatmul.mubr.bf16.gmra.mrb[0].mxu0 %v213
  %v814 = vpop.f32.mrb[0].mxu0
  %v815 = vadd.f32 %v774, %v814
  %v816 = vpop.f32.mrb[0].mxu0
  %v817 = vpop.f32.mrb[0].mxu0
  %v818 = vadd.f32 %v777, %v817
  %v819 = vpop.f32.mrb[0].mxu0
  %820 = vdwg.mxu0
  %821 = vmatprep.subr.bf16.mxu0 0
  %822 = vmatpush1.bf16.msra.mxu0 %v577
  %823 = vmatprep.subr.bf16.mxu0 0
  %824 = vmatpush1.bf16.msra.mxu0 %v578
  %825 = vmatprep.subr.bf16.mxu0 0
  %826 = vmatpush1.bf16.msra.mxu0 %v579
  %827 = vmatprep.subr.bf16.mxu0 0
  %828 = vmatpush1.bf16.msra.mxu0 %v580
  %829 = vmatprep.subr.bf16.mxu0 0
  %830 = vmatpush1.bf16.msra.mxu0 %v581
  %831 = vmatprep.subr.bf16.mxu0 0
  %832 = vmatpush1.bf16.msra.mxu0 %v582
  %833 = vmatprep.subr.bf16.mxu0 0
  %834 = vmatpush1.bf16.msra.mxu0 %v583
  %835 = vmatprep.subr.bf16.mxu0 0
  %836 = vmatpush1.bf16.msra.mxu0 %v584
  %837 = vmatprep.subr.bf16.mxu0 0
  %838 = vmatpush1.bf16.msra.mxu0 0
  %839 = vmatprep.subr.bf16.mxu0 0
  %840 = vmatpush1.bf16.msra.mxu0 0
  %841 = vmatprep.subr.bf16.mxu0 0
  %842 = vmatpush1.bf16.msra.mxu0 0
  %843 = vmatprep.subr.bf16.mxu0 0
  %844 = vmatpush1.bf16.msra.mxu0 0
  %845 = vmatprep.subr.bf16.mxu0 0
  %846 = vmatpush1.bf16.msra.mxu0 0
  %847 = vmatprep.subr.bf16.mxu0 0
  %848 = vmatpush1.bf16.msra.mxu0 0
  %849 = vmatprep.subr.bf16.mxu0 0
  %850 = vmatpush1.bf16.msra.mxu0 0
  %851 = vmatprep.subr.bf16.mxu0 0
  %852 = vmatpush1.bf16.msra.mxu0 0
  %853 = vmatprep.mubr.bf16.mxu0 0
  %854 = vmatmul.mubr.bf16.gmra.mrb[0].mxu0 %v215
  %v855 = vpop.f32.mrb[0].mxu0
  %v856 = vadd.f32 %v815, %v855
  %v857 = vpop.f32.mrb[0].mxu0
  %v858 = vpop.f32.mrb[0].mxu0
  %v859 = vadd.f32 %v818, %v858
  %v860 = vpop.f32.mrb[0].mxu0
  %861 = vdwg.mxu0
  %v862 = vld [vmem:[%s3] sm:$0xf]
  %v863 = vld [vmem:[%s3 + $0x4] sm:$0xf]
  %v864 = vunpack.c.l.bf16 %v862
  %v865 = vunpack.c.l.bf16 %v863
  %v866 = vadd.f32 %v856, %v864
  %v867 = vadd.f32 %v859, %v865
  %v868 = vmax.f32 %v866, 0.0
  %v869 = vmax.f32 %v867, 0.0
  %v870 = vpack.c.bf16 %v869, %v868
  %v872 = vunpack.c.l.b16 %v870
  %v873 = vunpack.c.h.b16 %v870
  %v874 = vpack.c.b16 %v872, %v872
  %v875 = vpack.c.b16 %v873, %v873
  %878 = vst [vmem:[%s4] sm:$0xf] %v874
  %879 = vst [vmem:[%s4 + $0x4] sm:$0xf] %v875
  // Predicated region
  $region18: #{_lambda_.24} parent=0 // pred_check
    _
  $region19: #{_lambda_.24} parent=0 // pred_check_branch
    %881 = sbr.rel (0) target = $region21
  $region20: #{_lambda_.24} parent=0 // pred_region
    _
  $region21: #{_lambda_.24} parent=0 // pred_fallthru
    _
  // Predicated region
  $region22: #{_lambda_.24} parent=0 // pred_check
    _
  $region23: #{_lambda_.24} parent=0 // pred_check_branch
    %883 = sbr.rel (0) target = $region25
  $region24: #{_lambda_.24} parent=0 // pred_region
    _
  $region25: #{_lambda_.24} parent=0 // pred_fallthru
    _

</llo_original>
